<compile_context>
chip_gen: v6e
topology: v6e:2x2x1
jax: 0.10.0
libtpu: 0.0.40
codegen_flags: <defaults>
</compile_context>

<pallas_src>
import functools
import math

import jax
import jax.numpy as jnp
from jax.experimental import pallas as pl
from jax.experimental.pallas import tpu as pltpu


# ----------------------------------------------------------------------------
# Fused kernel: MHA block0 -> MHA block1 -> BN(eval) -> LeakyReLU -> +x
# All tensors inside the kernel use the transposed (C, N) lane-dense layout.
# ----------------------------------------------------------------------------
def att_op_kernel(xt_ref,
                  wqkv0_ref, bqkv0_ref, wf0_ref, bf0_ref,
                  wqkv1_ref, bqkv1_ref, wf1_ref, bf1_ref,
                  bn_scale_ref, bn_shift_ref,
                  o_ref,
                  qkv_scr, oc_scr,
                  *, heads, d_k, qc, slope):
    C = heads * d_k
    N = o_ref.shape[-1]
    n_qc = N // qc

    def mha_block(x_bf16, wqkv_ref, bqkv_ref, wf_ref, bf_ref):
        # (1) Fused Q/K/V projection: one (3C,C)@(C,N) bf16 MXU matmul, f32 acc,
        #     staged in VMEM so the head loop only touches tiny per-head slices.
        qkv_scr[...] = (jnp.dot(wqkv_ref[...], x_bf16,
                                preferred_element_type=jnp.float32)
                        + bqkv_ref[...])

        # (2) Attention: fori_loop over heads (bounds live ranges) x static loop
        #     over 128-query lane-aligned chunks (score tile = (N, qc) f32).
        for c in range(n_qc):
            col = c * qc                                   # static lane offset

            def head_body(h, carry, col=col):
                row = h * d_k
                q0 = pl.multiple_of(row, d_k)
                k0 = pl.multiple_of(C + row, d_k)
                v0 = pl.multiple_of(2 * C + row, d_k)
                qh = qkv_scr[pl.ds(q0, d_k), pl.ds(col, qc)].astype(jnp.bfloat16)
                kh = qkv_scr[pl.ds(k0, d_k), :].astype(jnp.bfloat16)
                vh = qkv_scr[pl.ds(v0, d_k), :].astype(jnp.bfloat16)
                # scores^T: keys on sublanes, queries on lanes.  Softmax scale
                # is already folded into Wq/bq.
                s_t = jax.lax.dot_general(kh, qh, (((0,), (0,)), ((), ())),
                                          preferred_element_type=jnp.float32)
                s_t = s_t - jnp.max(s_t, axis=0, keepdims=True)
                e = jnp.exp(s_t)                                    # f32 (N, qc)
                inv = pl.reciprocal(jnp.sum(e, axis=0, keepdims=True),
                                    approx=True)                    # (1, qc)
                # Unnormalized AV (plain bf16 matmul), then normalize the tiny
                # (d_k, qc) result instead of the (N, qc) attention matrix.
                ot = jnp.dot(vh, e.astype(jnp.bfloat16),
                             preferred_element_type=jnp.float32)    # (d_k, qc)
                oc_scr[pl.ds(q0, d_k), pl.ds(col, qc)] = ot * inv
                return carry

            jax.lax.fori_loop(0, heads, head_body, 0)

        # (3) Output projection over the concatenated heads: one K=C bf16 matmul.
        return (jnp.dot(wf_ref[...], oc_scr[...].astype(jnp.bfloat16),
                        preferred_element_type=jnp.float32) + bf_ref[...])

    x0 = mha_block(xt_ref[...].astype(jnp.bfloat16),
                   wqkv0_ref, bqkv0_ref, wf0_ref, bf0_ref)
    x1 = mha_block(x0.astype(jnp.bfloat16),
                   wqkv1_ref, bqkv1_ref, wf1_ref, bf1_ref)

    # (4) Residual + BatchNorm (eval, folded per-token scale/shift) + LeakyReLU.
    xt = xt_ref[...]                                       # (C, N) f32
    y = (xt - x1) * bn_scale_ref[...] + bn_shift_ref[...]
    y = jnp.where(y >= 0, y, slope * y)
    o_ref[...] = (xt + y).astype(o_ref.dtype)


# ----------------------------------------------------------------------------
# Wrapper
# ----------------------------------------------------------------------------
def att_operation_pallas(x, params, heads, d_k, eps=1e-5, slope=0.2):
    B, N, C = x.shape
    assert heads * d_k == C
    assert params["bn_gamma"].shape[0] == N                # BatchNorm1d(N)
    att_scale = 1.0 / math.sqrt(d_k)
    qc = 128 if N % 128 == 0 else N                        # query-chunk width

    def prep_block(p):
        # Stack Q/K/V weights into one (3C, C) bf16 matrix; fold softmax scale
        # into the Q rows / bias.  Biases stay f32 (added to the f32 acc).
        w_qkv = jnp.concatenate([(p["wq"] * att_scale).T, p["wk"].T, p["wv"].T],
                                axis=0).astype(jnp.bfloat16)          # (3C, C)
        b_qkv = jnp.concatenate([p["bq"] * att_scale, p["bk"], p["bv"]],
                                axis=0).reshape(3 * C, 1).astype(jnp.float32)
        wf_t = p["wf"].T.astype(jnp.bfloat16)                         # (C, C)
        b_f = p["bf"].reshape(C, 1).astype(jnp.float32)
        return w_qkv, b_qkv, wf_t, b_f

    blk0 = prep_block(params["blk0"])
    blk1 = prep_block(params["blk1"])

    # Fold BatchNorm (eval mode) into a per-token (lane) scale/shift.
    bn_scale = params["bn_gamma"] * jax.lax.rsqrt(params["bn_var"] + eps)
    bn_shift = params["bn_beta"] - params["bn_mean"] * bn_scale
    bn_scale = bn_scale.reshape(1, N).astype(jnp.float32)
    bn_shift = bn_shift.reshape(1, N).astype(jnp.float32)

    x_t = jnp.transpose(x, (0, 2, 1))                      # (B, C, N) lane-dense

    x_spec = pl.BlockSpec((None, C, N), lambda b: (b, 0, 0))
    wqkv_spec = pl.BlockSpec((3 * C, C), lambda b: (0, 0))
    bqkv_spec = pl.BlockSpec((3 * C, 1), lambda b: (0, 0))
    wf_spec = pl.BlockSpec((C, C), lambda b: (0, 0))
    bf_spec = pl.BlockSpec((C, 1), lambda b: (0, 0))
    brow_spec = pl.BlockSpec((1, N), lambda b: (0, 0))
    blk_specs = [wqkv_spec, bqkv_spec, wf_spec, bf_spec]

    out_t = pl.pallas_call(
        functools.partial(att_op_kernel, heads=heads, d_k=d_k, qc=qc,
                          slope=slope),
        out_shape=jax.ShapeDtypeStruct((B, C, N), x.dtype),
        grid_spec=pltpu.PrefetchScalarGridSpec(
            num_scalar_prefetch=0,
            grid=(B,),
            in_specs=[x_spec] + blk_specs + blk_specs + [brow_spec, brow_spec],
            out_specs=x_spec,
            scratch_shapes=[pltpu.VMEM((3 * C, N), jnp.float32),   # staged QKV
                            pltpu.VMEM((C, N), jnp.float32)]),     # head concat
        compiler_params=pltpu.CompilerParams(
            dimension_semantics=("parallel",)),
    )(x_t, *blk0, *blk1, bn_scale, bn_shift)

    return jnp.transpose(out_t, (0, 2, 1))                 # back to (B, N, C)


# ----------------------------------------------------------------------------
# Pure-JAX reference (mirrors the PyTorch module semantics, f32)
# ----------------------------------------------------------------------------
def mha_block_ref(x, p, heads, d_k):
    B, N, C = x.shape
    scale = 1.0 / math.sqrt(d_k)
    q = (x @ p["wq"] + p["bq"]).reshape(B, N, heads, d_k)
    k = (x @ p["wk"] + p["bk"]).reshape(B, N, heads, d_k)
    v = (x @ p["wv"] + p["bv"]).reshape(B, N, heads, d_k)
    s = jnp.einsum("bihd,bjhd->bijh", q, k) * scale
    a = jax.nn.softmax(s, axis=2)                          # softmax over keys j
    o = jnp.einsum("bijh,bjhd->bihd", a, v).reshape(B, N, heads * d_k)
    return o @ p["wf"] + p["bf"]


def att_operation_ref(x, params, heads, d_k, eps=1e-5, slope=0.2):
    x_r = mha_block_ref(x, params["blk0"], heads, d_k)
    x_r = mha_block_ref(x_r, params["blk1"], heads, d_k)
    d = x - x_r
    g = params["bn_gamma"][None, :, None]
    b = params["bn_beta"][None, :, None]
    m = params["bn_mean"][None, :, None]
    v = params["bn_var"][None, :, None]
    y = (d - m) / jnp.sqrt(v + eps) * g + b
    y = jnp.where(y >= 0, y, slope * y)
    return x + y


# ----------------------------------------------------------------------------
# Deterministic parameter init
# ----------------------------------------------------------------------------
def init_block_params(key, in_feature, d_model):
    ks = jax.random.split(key, 8)

    def lin(kw, kb, fan_in, fan_out):
        bound = 1.0 / math.sqrt(fan_in)
        w = jax.random.uniform(kw, (fan_in, fan_out), jnp.float32, -bound, bound)
        b = jax.random.uniform(kb, (fan_out,), jnp.float32, -bound, bound)
        return w, b

    wq, bq = lin(ks[0], ks[1], in_feature, d_model)
    wk, bk = lin(ks[2], ks[3], in_feature, d_model)
    wv, bv = lin(ks[4], ks[5], in_feature, d_model)
    wf, bf = lin(ks[6], ks[7], d_model, in_feature)
    return dict(wq=wq, bq=bq, wk=wk, bk=bk, wv=wv, bv=bv, wf=wf, bf=bf)


def init_params(key, in_feature, d_model, n_bn=256):
    k0, k1, k2, k3, k4, k5 = jax.random.split(key, 6)
    return {
        "blk0": init_block_params(k0, in_feature, d_model),
        "blk1": init_block_params(k1, in_feature, d_model),
        "bn_gamma": 1.0 + 0.1 * jax.random.normal(k2, (n_bn,), jnp.float32),
        "bn_beta": 0.1 * jax.random.normal(k3, (n_bn,), jnp.float32),
        "bn_mean": 0.1 * jax.random.normal(k4, (n_bn,), jnp.float32),
        "bn_var": 1.0 + 0.1 * jnp.abs(jax.random.normal(k5, (n_bn,), jnp.float32)),
    }


# ----------------------------------------------------------------------------
if __name__ == "__main__":
    # AttOperation(layer=1): in_feature = d_model = 64, heads = 8, d_k = 8.
    # BatchNorm1d(256) forces the token dimension N to be 256.
    B, N, C, HEADS = 2, 256, 64, 8
    D_K = C // HEADS

    key = jax.random.PRNGKey(0)
    kp, kx = jax.random.split(key)
    params = init_params(kp, in_feature=C, d_model=C, n_bn=N)
    x = jax.random.normal(kx, (B, N, C), jnp.float32)

    out = jax.block_until_ready(att_operation_pallas(x, params, HEADS, D_K))
    ref = att_operation_ref(x, params, HEADS, D_K)

    assert out.shape == (B, N, C)
    max_err = float(jnp.max(jnp.abs(out - ref)))
    assert jnp.allclose(out, ref, rtol=5e-3, atol=5e-3), max_err

    print("KERNEL_OK")
</pallas_src>

<mosaic_0001>
module attributes {stable_mosaic.version = 11 : i64} {
  func.func @att_op_kernel(%arg0: i32, %arg1: memref<1x64x256xf32, #tpu.memory_space<vmem>>, %arg2: memref<192x64xbf16, #tpu.memory_space<vmem>>, %arg3: memref<192x1xf32, #tpu.memory_space<vmem>>, %arg4: memref<64x64xbf16, #tpu.memory_space<vmem>>, %arg5: memref<64x1xf32, #tpu.memory_space<vmem>>, %arg6: memref<192x64xbf16, #tpu.memory_space<vmem>>, %arg7: memref<192x1xf32, #tpu.memory_space<vmem>>, %arg8: memref<64x64xbf16, #tpu.memory_space<vmem>>, %arg9: memref<64x1xf32, #tpu.memory_space<vmem>>, %arg10: memref<1x256xf32, #tpu.memory_space<vmem>>, %arg11: memref<1x256xf32, #tpu.memory_space<vmem>>, %arg12: memref<1x64x256xf32, #tpu.memory_space<vmem>>, %arg13: memref<192x256xf32, #tpu.memory_space<vmem>>, %arg14: memref<64x256xf32, #tpu.memory_space<vmem>>) attributes {dimension_semantics = [#tpu.dimension_semantics<parallel>], iteration_bounds = array<i64: 2>, scalar_prefetch = 0 : i64, scratch_operands = 2 : i64, tpu.core_type = #tpu.core_type<tc>, window_params = [{transform_indices = @transform_0, window_bounds = array<i64: 1, 64, 256>}, {pipeline_mode = #tpu.pipeline_mode<synchronous>, transform_indices = @transform_1, window_bounds = array<i64: 192, 64>}, {pipeline_mode = #tpu.pipeline_mode<synchronous>, transform_indices = @transform_2, window_bounds = array<i64: 192, 1>}, {pipeline_mode = #tpu.pipeline_mode<synchronous>, transform_indices = @transform_3, window_bounds = array<i64: 64, 64>}, {pipeline_mode = #tpu.pipeline_mode<synchronous>, transform_indices = @transform_4, window_bounds = array<i64: 64, 1>}, {pipeline_mode = #tpu.pipeline_mode<synchronous>, transform_indices = @transform_5, window_bounds = array<i64: 192, 64>}, {pipeline_mode = #tpu.pipeline_mode<synchronous>, transform_indices = @transform_6, window_bounds = array<i64: 192, 1>}, {pipeline_mode = #tpu.pipeline_mode<synchronous>, transform_indices = @transform_7, window_bounds = array<i64: 64, 64>}, {pipeline_mode = #tpu.pipeline_mode<synchronous>, transform_indices = @transform_8, window_bounds = array<i64: 64, 1>}, {pipeline_mode = #tpu.pipeline_mode<synchronous>, transform_indices = @transform_9, window_bounds = array<i64: 1, 256>}, {pipeline_mode = #tpu.pipeline_mode<synchronous>, transform_indices = @transform_10, window_bounds = array<i64: 1, 256>}, {transform_indices = @transform_11, window_bounds = array<i64: 1, 64, 256>}]} {
    %c0 = arith.constant 0 : index
    %c0_0 = arith.constant 0 : index
    %c0_1 = arith.constant 0 : index
    %0 = vector.load %arg1[%c0, %c0_0, %c0_1] : memref<1x64x256xf32, #tpu.memory_space<vmem>>, vector<1x64x256xf32>
    %1 = vector.shape_cast %0 : vector<1x64x256xf32> to vector<64x256xf32>
    %2 = arith.truncf %1 : vector<64x256xf32> to vector<64x256xbf16>
    %c0_2 = arith.constant 0 : index
    %c0_3 = arith.constant 0 : index
    %3 = vector.load %arg2[%c0_2, %c0_3] : memref<192x64xbf16, #tpu.memory_space<vmem>>, vector<192x64xbf16>
    %cst = arith.constant dense<0.000000e+00> : vector<192x256xf32>
    %4 = tpu.matmul %3, %2, %cst {dimension_numbers = #tpu.dot_dimension_numbers<[1], [0], [0], [1], [0, 0, 1, 1], [], []>} : vector<192x64xbf16>, vector<64x256xbf16>, vector<192x256xf32> -> vector<192x256xf32>
    %c0_4 = arith.constant 0 : index
    %c0_5 = arith.constant 0 : index
    %5 = vector.load %arg3[%c0_4, %c0_5] : memref<192x1xf32, #tpu.memory_space<vmem>>, vector<192x1xf32>
    %6 = vector.broadcast %5 : vector<192x1xf32> to vector<192x256xf32>
    %7 = arith.addf %4, %6 : vector<192x256xf32>
    %c0_6 = arith.constant 0 : index
    %c0_7 = arith.constant 0 : index
    %8 = vector.load %arg13[%c0_6, %c0_7] : memref<192x256xf32, #tpu.memory_space<vmem>>, vector<192x256xf32>
    tpu.vector_store %arg13[%c0_6, %c0_7], %7 {strides = array<i32>} : memref<192x256xf32, #tpu.memory_space<vmem>>, vector<192x256xf32>,
    %c0_i32 = arith.constant 0 : i32
    %c8_i32 = arith.constant 8 : i32
    %9 = arith.addi %c0_i32, %c8_i32 : i32
    %c1_i32 = arith.constant 1 : i32
    scf.for %arg15 = %c0_i32 to %9 step %c1_i32  : i32 {
      %c8_i32_54 = arith.constant 8 : i32
      %52 = arith.muli %arg15, %c8_i32_54 : i32
      %53 = tpu.assume_multiple %52, 8 : i32
      %c64_i32 = arith.constant 64 : i32
      %54 = arith.addi %c64_i32, %52 : i32
      %55 = tpu.assume_multiple %54, 8 : i32
      %c128_i32 = arith.constant 128 : i32
      %56 = arith.addi %c128_i32, %52 : i32
      %57 = tpu.assume_multiple %56, 8 : i32
      %58 = arith.index_cast %53 : i32 to index
      %c0_55 = arith.constant 0 : index
      %59 = vector.load %arg13[%58, %c0_55] : memref<192x256xf32, #tpu.memory_space<vmem>>, vector<8x128xf32>
      %60 = arith.truncf %59 : vector<8x128xf32> to vector<8x128xbf16>
      %61 = arith.index_cast %55 : i32 to index
      %c0_56 = arith.constant 0 : index
      %62 = vector.load %arg13[%61, %c0_56] : memref<192x256xf32, #tpu.memory_space<vmem>>, vector<8x256xf32>
      %63 = arith.truncf %62 : vector<8x256xf32> to vector<8x256xbf16>
      %64 = arith.index_cast %57 : i32 to index
      %c0_57 = arith.constant 0 : index
      %65 = vector.load %arg13[%64, %c0_57] : memref<192x256xf32, #tpu.memory_space<vmem>>, vector<8x256xf32>
      %66 = arith.truncf %65 : vector<8x256xf32> to vector<8x256xbf16>
      %cst_58 = arith.constant dense<0.000000e+00> : vector<256x128xf32>
      %67 = tpu.matmul %63, %60, %cst_58 {dimension_numbers = #tpu.dot_dimension_numbers<[0], [0], [1], [1], [0, 1, 1, 1], [], []>} : vector<8x256xbf16>, vector<8x128xbf16>, vector<256x128xf32> -> vector<256x128xf32>
      %cst_59 = arith.constant dense<0xFF800000> : vector<128xf32>
      %68 = vector.multi_reduction <maximumf>, %67, %cst_59 [0] : vector<256x128xf32> to vector<128xf32>
      %69 = vector.shape_cast %68 : vector<128xf32> to vector<1x128xf32>
      %70 = vector.broadcast %69 : vector<1x128xf32> to vector<256x128xf32>
      %71 = arith.subf %67, %70 : vector<256x128xf32>
      %72 = math.exp %71 : vector<256x128xf32>
      %cst_60 = arith.constant dense<0.000000e+00> : vector<128xf32>
      %73 = vector.multi_reduction <add>, %72, %cst_60 [0] : vector<256x128xf32> to vector<128xf32>
      %74 = vector.shape_cast %73 : vector<128xf32> to vector<1x128xf32>
      %75 = tpu.reciprocal %74 {approx = true} : vector<1x128xf32> -> vector<1x128xf32>
      %76 = arith.truncf %72 : vector<256x128xf32> to vector<256x128xbf16>
      %cst_61 = arith.constant dense<0.000000e+00> : vector<8x128xf32>
      %77 = tpu.matmul %66, %76, %cst_61 {dimension_numbers = #tpu.dot_dimension_numbers<[1], [0], [0], [1], [0, 0, 1, 1], [], []>} : vector<8x256xbf16>, vector<256x128xbf16>, vector<8x128xf32> -> vector<8x128xf32>
      %78 = vector.broadcast %75 : vector<1x128xf32> to vector<8x128xf32>
      %79 = arith.mulf %77, %78 : vector<8x128xf32>
      %80 = arith.index_cast %53 : i32 to index
      %c0_62 = arith.constant 0 : index
      %81 = vector.load %arg14[%80, %c0_62] : memref<64x256xf32, #tpu.memory_space<vmem>>, vector<8x128xf32>
      tpu.vector_store %arg14[%80, %c0_62], %79 {strides = array<i32>} : memref<64x256xf32, #tpu.memory_space<vmem>>, vector<8x128xf32>,
    }
    %c8_i32_8 = arith.constant 8 : i32
    %c0_i32_9 = arith.constant 0 : i32
    %c8_i32_10 = arith.constant 8 : i32
    %10 = arith.addi %c0_i32_9, %c8_i32_10 : i32
    %c1_i32_11 = arith.constant 1 : i32
    scf.for %arg15 = %c0_i32_9 to %10 step %c1_i32_11  : i32 {
      %c8_i32_54 = arith.constant 8 : i32
      %52 = arith.muli %arg15, %c8_i32_54 : i32
      %53 = tpu.assume_multiple %52, 8 : i32
      %c64_i32 = arith.constant 64 : i32
      %54 = arith.addi %c64_i32, %52 : i32
      %55 = tpu.assume_multiple %54, 8 : i32
      %c128_i32 = arith.constant 128 : i32
      %56 = arith.addi %c128_i32, %52 : i32
      %57 = tpu.assume_multiple %56, 8 : i32
      %58 = arith.index_cast %53 : i32 to index
      %c128 = arith.constant 128 : index
      %59 = vector.load %arg13[%58, %c128] : memref<192x256xf32, #tpu.memory_space<vmem>>, vector<8x128xf32>
      %60 = arith.truncf %59 : vector<8x128xf32> to vector<8x128xbf16>
      %61 = arith.index_cast %55 : i32 to index
      %c0_55 = arith.constant 0 : index
      %62 = vector.load %arg13[%61, %c0_55] : memref<192x256xf32, #tpu.memory_space<vmem>>, vector<8x256xf32>
      %63 = arith.truncf %62 : vector<8x256xf32> to vector<8x256xbf16>
      %64 = arith.index_cast %57 : i32 to index
      %c0_56 = arith.constant 0 : index
      %65 = vector.load %arg13[%64, %c0_56] : memref<192x256xf32, #tpu.memory_space<vmem>>, vector<8x256xf32>
      %66 = arith.truncf %65 : vector<8x256xf32> to vector<8x256xbf16>
      %cst_57 = arith.constant dense<0.000000e+00> : vector<256x128xf32>
      %67 = tpu.matmul %63, %60, %cst_57 {dimension_numbers = #tpu.dot_dimension_numbers<[0], [0], [1], [1], [0, 1, 1, 1], [], []>} : vector<8x256xbf16>, vector<8x128xbf16>, vector<256x128xf32> -> vector<256x128xf32>
      %cst_58 = arith.constant dense<0xFF800000> : vector<128xf32>
      %68 = vector.multi_reduction <maximumf>, %67, %cst_58 [0] : vector<256x128xf32> to vector<128xf32>
      %69 = vector.shape_cast %68 : vector<128xf32> to vector<1x128xf32>
      %70 = vector.broadcast %69 : vector<1x128xf32> to vector<256x128xf32>
      %71 = arith.subf %67, %70 : vector<256x128xf32>
      %72 = math.exp %71 : vector<256x128xf32>
      %cst_59 = arith.constant dense<0.000000e+00> : vector<128xf32>
      %73 = vector.multi_reduction <add>, %72, %cst_59 [0] : vector<256x128xf32> to vector<128xf32>
      %74 = vector.shape_cast %73 : vector<128xf32> to vector<1x128xf32>
      %75 = tpu.reciprocal %74 {approx = true} : vector<1x128xf32> -> vector<1x128xf32>
      %76 = arith.truncf %72 : vector<256x128xf32> to vector<256x128xbf16>
      %cst_60 = arith.constant dense<0.000000e+00> : vector<8x128xf32>
      %77 = tpu.matmul %66, %76, %cst_60 {dimension_numbers = #tpu.dot_dimension_numbers<[1], [0], [0], [1], [0, 0, 1, 1], [], []>} : vector<8x256xbf16>, vector<256x128xbf16>, vector<8x128xf32> -> vector<8x128xf32>
      %78 = vector.broadcast %75 : vector<1x128xf32> to vector<8x128xf32>
      %79 = arith.mulf %77, %78 : vector<8x128xf32>
      %80 = arith.index_cast %53 : i32 to index
      %c128_61 = arith.constant 128 : index
      %81 = vector.load %arg14[%80, %c128_61] : memref<64x256xf32, #tpu.memory_space<vmem>>, vector<8x128xf32>
      tpu.vector_store %arg14[%80, %c128_61], %79 {strides = array<i32>} : memref<64x256xf32, #tpu.memory_space<vmem>>, vector<8x128xf32>,
    }
    %c8_i32_12 = arith.constant 8 : i32
    %c0_13 = arith.constant 0 : index
    %c0_14 = arith.constant 0 : index
    %11 = vector.load %arg4[%c0_13, %c0_14] : memref<64x64xbf16, #tpu.memory_space<vmem>>, vector<64x64xbf16>
    %c0_15 = arith.constant 0 : index
    %c0_16 = arith.constant 0 : index
    %12 = vector.load %arg14[%c0_15, %c0_16] : memref<64x256xf32, #tpu.memory_space<vmem>>, vector<64x256xf32>
    %13 = arith.truncf %12 : vector<64x256xf32> to vector<64x256xbf16>
    %cst_17 = arith.constant dense<0.000000e+00> : vector<64x256xf32>
    %14 = tpu.matmul %11, %13, %cst_17 {dimension_numbers = #tpu.dot_dimension_numbers<[1], [0], [0], [1], [0, 0, 1, 1], [], []>} : vector<64x64xbf16>, vector<64x256xbf16>, vector<64x256xf32> -> vector<64x256xf32>
    %c0_18 = arith.constant 0 : index
    %c0_19 = arith.constant 0 : index
    %15 = vector.load %arg5[%c0_18, %c0_19] : memref<64x1xf32, #tpu.memory_space<vmem>>, vector<64x1xf32>
    %16 = vector.broadcast %15 : vector<64x1xf32> to vector<64x256xf32>
    %17 = arith.addf %14, %16 : vector<64x256xf32>
    %18 = arith.truncf %17 : vector<64x256xf32> to vector<64x256xbf16>
    %c0_20 = arith.constant 0 : index
    %c0_21 = arith.constant 0 : index
    %19 = vector.load %arg6[%c0_20, %c0_21] : memref<192x64xbf16, #tpu.memory_space<vmem>>, vector<192x64xbf16>
    %cst_22 = arith.constant dense<0.000000e+00> : vector<192x256xf32>
    %20 = tpu.matmul %19, %18, %cst_22 {dimension_numbers = #tpu.dot_dimension_numbers<[1], [0], [0], [1], [0, 0, 1, 1], [], []>} : vector<192x64xbf16>, vector<64x256xbf16>, vector<192x256xf32> -> vector<192x256xf32>
    %c0_23 = arith.constant 0 : index
    %c0_24 = arith.constant 0 : index
    %21 = vector.load %arg7[%c0_23, %c0_24] : memref<192x1xf32, #tpu.memory_space<vmem>>, vector<192x1xf32>
    %22 = vector.broadcast %21 : vector<192x1xf32> to vector<192x256xf32>
    %23 = arith.addf %20, %22 : vector<192x256xf32>
    %c0_25 = arith.constant 0 : index
    %c0_26 = arith.constant 0 : index
    %24 = vector.load %arg13[%c0_25, %c0_26] : memref<192x256xf32, #tpu.memory_space<vmem>>, vector<192x256xf32>
    tpu.vector_store %arg13[%c0_25, %c0_26], %23 {strides = array<i32>} : memref<192x256xf32, #tpu.memory_space<vmem>>, vector<192x256xf32>,
    %c0_i32_27 = arith.constant 0 : i32
    %c8_i32_28 = arith.constant 8 : i32
    %25 = arith.addi %c0_i32_27, %c8_i32_28 : i32
    %c1_i32_29 = arith.constant 1 : i32
    scf.for %arg15 = %c0_i32_27 to %25 step %c1_i32_29  : i32 {
      %c8_i32_54 = arith.constant 8 : i32
      %52 = arith.muli %arg15, %c8_i32_54 : i32
      %53 = tpu.assume_multiple %52, 8 : i32
      %c64_i32 = arith.constant 64 : i32
      %54 = arith.addi %c64_i32, %52 : i32
      %55 = tpu.assume_multiple %54, 8 : i32
      %c128_i32 = arith.constant 128 : i32
      %56 = arith.addi %c128_i32, %52 : i32
      %57 = tpu.assume_multiple %56, 8 : i32
      %58 = arith.index_cast %53 : i32 to index
      %c0_55 = arith.constant 0 : index
      %59 = vector.load %arg13[%58, %c0_55] : memref<192x256xf32, #tpu.memory_space<vmem>>, vector<8x128xf32>
      %60 = arith.truncf %59 : vector<8x128xf32> to vector<8x128xbf16>
      %61 = arith.index_cast %55 : i32 to index
      %c0_56 = arith.constant 0 : index
      %62 = vector.load %arg13[%61, %c0_56] : memref<192x256xf32, #tpu.memory_space<vmem>>, vector<8x256xf32>
      %63 = arith.truncf %62 : vector<8x256xf32> to vector<8x256xbf16>
      %64 = arith.index_cast %57 : i32 to index
      %c0_57 = arith.constant 0 : index
      %65 = vector.load %arg13[%64, %c0_57] : memref<192x256xf32, #tpu.memory_space<vmem>>, vector<8x256xf32>
      %66 = arith.truncf %65 : vector<8x256xf32> to vector<8x256xbf16>
      %cst_58 = arith.constant dense<0.000000e+00> : vector<256x128xf32>
      %67 = tpu.matmul %63, %60, %cst_58 {dimension_numbers = #tpu.dot_dimension_numbers<[0], [0], [1], [1], [0, 1, 1, 1], [], []>} : vector<8x256xbf16>, vector<8x128xbf16>, vector<256x128xf32> -> vector<256x128xf32>
      %cst_59 = arith.constant dense<0xFF800000> : vector<128xf32>
      %68 = vector.multi_reduction <maximumf>, %67, %cst_59 [0] : vector<256x128xf32> to vector<128xf32>
      %69 = vector.shape_cast %68 : vector<128xf32> to vector<1x128xf32>
      %70 = vector.broadcast %69 : vector<1x128xf32> to vector<256x128xf32>
      %71 = arith.subf %67, %70 : vector<256x128xf32>
      %72 = math.exp %71 : vector<256x128xf32>
      %cst_60 = arith.constant dense<0.000000e+00> : vector<128xf32>
      %73 = vector.multi_reduction <add>, %72, %cst_60 [0] : vector<256x128xf32> to vector<128xf32>
      %74 = vector.shape_cast %73 : vector<128xf32> to vector<1x128xf32>
      %75 = tpu.reciprocal %74 {approx = true} : vector<1x128xf32> -> vector<1x128xf32>
      %76 = arith.truncf %72 : vector<256x128xf32> to vector<256x128xbf16>
      %cst_61 = arith.constant dense<0.000000e+00> : vector<8x128xf32>
      %77 = tpu.matmul %66, %76, %cst_61 {dimension_numbers = #tpu.dot_dimension_numbers<[1], [0], [0], [1], [0, 0, 1, 1], [], []>} : vector<8x256xbf16>, vector<256x128xbf16>, vector<8x128xf32> -> vector<8x128xf32>
      %78 = vector.broadcast %75 : vector<1x128xf32> to vector<8x128xf32>
      %79 = arith.mulf %77, %78 : vector<8x128xf32>
      %80 = arith.index_cast %53 : i32 to index
      %c0_62 = arith.constant 0 : index
      %81 = vector.load %arg14[%80, %c0_62] : memref<64x256xf32, #tpu.memory_space<vmem>>, vector<8x128xf32>
      tpu.vector_store %arg14[%80, %c0_62], %79 {strides = array<i32>} : memref<64x256xf32, #tpu.memory_space<vmem>>, vector<8x128xf32>,
    }
    %c8_i32_30 = arith.constant 8 : i32
    %c0_i32_31 = arith.constant 0 : i32
    %c8_i32_32 = arith.constant 8 : i32
    %26 = arith.addi %c0_i32_31, %c8_i32_32 : i32
    %c1_i32_33 = arith.constant 1 : i32
    scf.for %arg15 = %c0_i32_31 to %26 step %c1_i32_33  : i32 {
      %c8_i32_54 = arith.constant 8 : i32
      %52 = arith.muli %arg15, %c8_i32_54 : i32
      %53 = tpu.assume_multiple %52, 8 : i32
      %c64_i32 = arith.constant 64 : i32
      %54 = arith.addi %c64_i32, %52 : i32
      %55 = tpu.assume_multiple %54, 8 : i32
      %c128_i32 = arith.constant 128 : i32
      %56 = arith.addi %c128_i32, %52 : i32
      %57 = tpu.assume_multiple %56, 8 : i32
      %58 = arith.index_cast %53 : i32 to index
      %c128 = arith.constant 128 : index
      %59 = vector.load %arg13[%58, %c128] : memref<192x256xf32, #tpu.memory_space<vmem>>, vector<8x128xf32>
      %60 = arith.truncf %59 : vector<8x128xf32> to vector<8x128xbf16>
      %61 = arith.index_cast %55 : i32 to index
      %c0_55 = arith.constant 0 : index
      %62 = vector.load %arg13[%61, %c0_55] : memref<192x256xf32, #tpu.memory_space<vmem>>, vector<8x256xf32>
      %63 = arith.truncf %62 : vector<8x256xf32> to vector<8x256xbf16>
      %64 = arith.index_cast %57 : i32 to index
      %c0_56 = arith.constant 0 : index
      %65 = vector.load %arg13[%64, %c0_56] : memref<192x256xf32, #tpu.memory_space<vmem>>, vector<8x256xf32>
      %66 = arith.truncf %65 : vector<8x256xf32> to vector<8x256xbf16>
      %cst_57 = arith.constant dense<0.000000e+00> : vector<256x128xf32>
      %67 = tpu.matmul %63, %60, %cst_57 {dimension_numbers = #tpu.dot_dimension_numbers<[0], [0], [1], [1], [0, 1, 1, 1], [], []>} : vector<8x256xbf16>, vector<8x128xbf16>, vector<256x128xf32> -> vector<256x128xf32>
      %cst_58 = arith.constant dense<0xFF800000> : vector<128xf32>
      %68 = vector.multi_reduction <maximumf>, %67, %cst_58 [0] : vector<256x128xf32> to vector<128xf32>
      %69 = vector.shape_cast %68 : vector<128xf32> to vector<1x128xf32>
      %70 = vector.broadcast %69 : vector<1x128xf32> to vector<256x128xf32>
      %71 = arith.subf %67, %70 : vector<256x128xf32>
      %72 = math.exp %71 : vector<256x128xf32>
      %cst_59 = arith.constant dense<0.000000e+00> : vector<128xf32>
      %73 = vector.multi_reduction <add>, %72, %cst_59 [0] : vector<256x128xf32> to vector<128xf32>
      %74 = vector.shape_cast %73 : vector<128xf32> to vector<1x128xf32>
      %75 = tpu.reciprocal %74 {approx = true} : vector<1x128xf32> -> vector<1x128xf32>
      %76 = arith.truncf %72 : vector<256x128xf32> to vector<256x128xbf16>
      %cst_60 = arith.constant dense<0.000000e+00> : vector<8x128xf32>
      %77 = tpu.matmul %66, %76, %cst_60 {dimension_numbers = #tpu.dot_dimension_numbers<[1], [0], [0], [1], [0, 0, 1, 1], [], []>} : vector<8x256xbf16>, vector<256x128xbf16>, vector<8x128xf32> -> vector<8x128xf32>
      %78 = vector.broadcast %75 : vector<1x128xf32> to vector<8x128xf32>
      %79 = arith.mulf %77, %78 : vector<8x128xf32>
      %80 = arith.index_cast %53 : i32 to index
      %c128_61 = arith.constant 128 : index
      %81 = vector.load %arg14[%80, %c128_61] : memref<64x256xf32, #tpu.memory_space<vmem>>, vector<8x128xf32>
      tpu.vector_store %arg14[%80, %c128_61], %79 {strides = array<i32>} : memref<64x256xf32, #tpu.memory_space<vmem>>, vector<8x128xf32>,
    }
    %c8_i32_34 = arith.constant 8 : i32
    %c0_35 = arith.constant 0 : index
    %c0_36 = arith.constant 0 : index
    %27 = vector.load %arg8[%c0_35, %c0_36] : memref<64x64xbf16, #tpu.memory_space<vmem>>, vector<64x64xbf16>
    %c0_37 = arith.constant 0 : index
    %c0_38 = arith.constant 0 : index
    %28 = vector.load %arg14[%c0_37, %c0_38] : memref<64x256xf32, #tpu.memory_space<vmem>>, vector<64x256xf32>
    %29 = arith.truncf %28 : vector<64x256xf32> to vector<64x256xbf16>
    %cst_39 = arith.constant dense<0.000000e+00> : vector<64x256xf32>
    %30 = tpu.matmul %27, %29, %cst_39 {dimension_numbers = #tpu.dot_dimension_numbers<[1], [0], [0], [1], [0, 0, 1, 1], [], []>} : vector<64x64xbf16>, vector<64x256xbf16>, vector<64x256xf32> -> vector<64x256xf32>
    %c0_40 = arith.constant 0 : index
    %c0_41 = arith.constant 0 : index
    %31 = vector.load %arg9[%c0_40, %c0_41] : memref<64x1xf32, #tpu.memory_space<vmem>>, vector<64x1xf32>
    %32 = vector.broadcast %31 : vector<64x1xf32> to vector<64x256xf32>
    %33 = arith.addf %30, %32 : vector<64x256xf32>
    %c0_42 = arith.constant 0 : index
    %c0_43 = arith.constant 0 : index
    %c0_44 = arith.constant 0 : index
    %34 = vector.load %arg1[%c0_42, %c0_43, %c0_44] : memref<1x64x256xf32, #tpu.memory_space<vmem>>, vector<1x64x256xf32>
    %35 = vector.shape_cast %34 : vector<1x64x256xf32> to vector<64x256xf32>
    %36 = arith.subf %35, %33 : vector<64x256xf32>
    %c0_45 = arith.constant 0 : index
    %c0_46 = arith.constant 0 : index
    %37 = vector.load %arg10[%c0_45, %c0_46] : memref<1x256xf32, #tpu.memory_space<vmem>>, vector<1x256xf32>
    %38 = vector.broadcast %37 : vector<1x256xf32> to vector<64x256xf32>
    %39 = arith.mulf %36, %38 : vector<64x256xf32>
    %c0_47 = arith.constant 0 : index
    %c0_48 = arith.constant 0 : index
    %40 = vector.load %arg11[%c0_47, %c0_48] : memref<1x256xf32, #tpu.memory_space<vmem>>, vector<1x256xf32>
    %41 = vector.broadcast %40 : vector<1x256xf32> to vector<64x256xf32>
    %42 = arith.addf %39, %41 : vector<64x256xf32>
    %cst_49 = arith.constant 0.000000e+00 : f32
    %43 = vector.broadcast %cst_49 : f32 to vector<64x256xf32>
    %44 = arith.cmpf oge, %42, %43 : vector<64x256xf32>
    %cst_50 = arith.constant 2.000000e-01 : f32
    %45 = vector.broadcast %cst_50 : f32 to vector<64x256xf32>
    %46 = arith.mulf %45, %42 : vector<64x256xf32>
    %47 = arith.select %44, %42, %46 : vector<64x256xi1>, vector<64x256xf32>
    %48 = arith.addf %35, %47 : vector<64x256xf32>
    %c0_51 = arith.constant 0 : index
    %c0_52 = arith.constant 0 : index
    %c0_53 = arith.constant 0 : index
    %49 = vector.load %arg12[%c0_51, %c0_52, %c0_53] : memref<1x64x256xf32, #tpu.memory_space<vmem>>, vector<1x64x256xf32>
    %50 = vector.shape_cast %49 : vector<1x64x256xf32> to vector<64x256xf32>
    %51 = vector.shape_cast %48 : vector<64x256xf32> to vector<1x64x256xf32>
    tpu.vector_store %arg12[%c0_51, %c0_52, %c0_53], %51 {strides = array<i32>} : memref<1x64x256xf32, #tpu.memory_space<vmem>>, vector<1x64x256xf32>,
    return
  }
  func.func @transform_0(%arg0: i32) -> (i32, i32, i32) {
    %c0_i32 = arith.constant 0 : i32
    %c0_i32_0 = arith.constant 0 : i32
    %c0_i32_1 = arith.constant 0 : i32
    return %arg0, %c0_i32, %c0_i32_0 : i32, i32, i32
  }
  func.func @transform_1(%arg0: i32) -> (i32, i32) {
    %c0_i32 = arith.constant 0 : i32
    %c0_i32_0 = arith.constant 0 : i32
    %c0_i32_1 = arith.constant 0 : i32
    return %c0_i32, %c0_i32_0 : i32, i32
  }
  func.func @transform_2(%arg0: i32) -> (i32, i32) {
    %c0_i32 = arith.constant 0 : i32
    %c0_i32_0 = arith.constant 0 : i32
    %c0_i32_1 = arith.constant 0 : i32
    return %c0_i32, %c0_i32_0 : i32, i32
  }
  func.func @transform_3(%arg0: i32) -> (i32, i32) {
    %c0_i32 = arith.constant 0 : i32
    %c0_i32_0 = arith.constant 0 : i32
    %c0_i32_1 = arith.constant 0 : i32
    return %c0_i32, %c0_i32_0 : i32, i32
  }
  func.func @transform_4(%arg0: i32) -> (i32, i32) {
    %c0_i32 = arith.constant 0 : i32
    %c0_i32_0 = arith.constant 0 : i32
    %c0_i32_1 = arith.constant 0 : i32
    return %c0_i32, %c0_i32_0 : i32, i32
  }
  func.func @transform_5(%arg0: i32) -> (i32, i32) {
    %c0_i32 = arith.constant 0 : i32
    %c0_i32_0 = arith.constant 0 : i32
    %c0_i32_1 = arith.constant 0 : i32
    return %c0_i32, %c0_i32_0 : i32, i32
  }
  func.func @transform_6(%arg0: i32) -> (i32, i32) {
    %c0_i32 = arith.constant 0 : i32
    %c0_i32_0 = arith.constant 0 : i32
    %c0_i32_1 = arith.constant 0 : i32
    return %c0_i32, %c0_i32_0 : i32, i32
  }
  func.func @transform_7(%arg0: i32) -> (i32, i32) {
    %c0_i32 = arith.constant 0 : i32
    %c0_i32_0 = arith.constant 0 : i32
    %c0_i32_1 = arith.constant 0 : i32
    return %c0_i32, %c0_i32_0 : i32, i32
  }
  func.func @transform_8(%arg0: i32) -> (i32, i32) {
    %c0_i32 = arith.constant 0 : i32
    %c0_i32_0 = arith.constant 0 : i32
    %c0_i32_1 = arith.constant 0 : i32
    return %c0_i32, %c0_i32_0 : i32, i32
  }
  func.func @transform_9(%arg0: i32) -> (i32, i32) {
    %c0_i32 = arith.constant 0 : i32
    %c0_i32_0 = arith.constant 0 : i32
    %c0_i32_1 = arith.constant 0 : i32
    return %c0_i32, %c0_i32_0 : i32, i32
  }
  func.func @transform_10(%arg0: i32) -> (i32, i32) {
    %c0_i32 = arith.constant 0 : i32
    %c0_i32_0 = arith.constant 0 : i32
    %c0_i32_1 = arith.constant 0 : i32
    return %c0_i32, %c0_i32_0 : i32, i32
  }
  func.func @transform_11(%arg0: i32) -> (i32, i32, i32) {
    %c0_i32 = arith.constant 0 : i32
    %c0_i32_0 = arith.constant 0 : i32
    %c0_i32_1 = arith.constant 0 : i32
    return %arg0, %c0_i32, %c0_i32_0 : i32, i32, i32
  }
}

</mosaic_0001>

<llo_original>
// kernel: tpu_custom_call.1
$region0: #{tpu_custom_call.1}
  #allocation0 [shape = 'u32[]', space=smem, size = 0x4, offset = 0x4, fixed_abs, tag = 'smem constant byte address 0x4 - core index']
  #allocation1 [shape = 'u32[144,128]{1,0:T(1,128)}', space=vmem, size = 0x12000, scoped, tag = 'internal scratch']
  #allocation2 [shape = 'f32[192,256]{1,0:T(8,128)}', space=vmem, size = 0x30000, scoped, tag = 'scratch operand']
  #allocation3 [shape = 'f32[64,256]{1,0:T(8,128)}', space=vmem, size = 0x10000, scoped, tag = 'scratch operand']
  %s0 = inlined_call_operand.vmem [shape: f32[2,64,256], index: 0, kind: input, shape index: {}]
  %s1 = inlined_call_operand.vmem [shape: bf16[192,64], index: 1, kind: input, shape index: {}]
  %s2 = inlined_call_operand.vmem [shape: f32[192,1], index: 2, kind: input, shape index: {}]
  %s3 = inlined_call_operand.vmem [shape: bf16[64,64], index: 3, kind: input, shape index: {}]
  %s4 = inlined_call_operand.vmem [shape: f32[64,1], index: 4, kind: input, shape index: {}]
  %s5 = inlined_call_operand.vmem [shape: bf16[192,64], index: 5, kind: input, shape index: {}]
  %s6 = inlined_call_operand.vmem [shape: f32[192,1], index: 6, kind: input, shape index: {}]
  %s7 = inlined_call_operand.vmem [shape: bf16[64,64], index: 7, kind: input, shape index: {}]
  %s8 = inlined_call_operand.vmem [shape: f32[64,1], index: 8, kind: input, shape index: {}]
  %s9 = inlined_call_operand.vmem [shape: f32[1,256], index: 9, kind: input, shape index: {}]
  %s10 = inlined_call_operand.vmem [shape: f32[1,256], index: 10, kind: input, shape index: {}]
  %s11 = inlined_call_operand.hbm [shape: f32[2,64,256], index: 11, kind: output, shape index: {}]
  %s12 = sld [smem:[#allocation0]]
  $region105: #{tpu_custom_call.1} parent=0
    _
  %s14 = ssub.s32 1, %s12
  %s15 = scalar_select 0, %s14, %s12
  $region1: #{tpu_custom_call.1} parent=0
    #allocation4 [shape = 'u8[131072]{0}', space=vmem, size = 0x20000, scoped, tag = 'output window, operand 0']
    #allocation5 [shape = 's32[2]{0}', space=sflag, size = 0x8, scoped, tag = 'scoped memory for tpu_custom_call.1']
    %16 = vsyncpa [#allocation5], 0
    %s17 = scalar_lea.sflag [#allocation5], 1
    %18 = vsyncpa %s17, 0
    loop: start=0, step=1, limit=4
    $region2: #{tpu_custom_call.1} parent=1 // loop_pre_header
      _
    $region3: #{tpu_custom_call.1} parent=1 // loop_header
      %s20 = sphi 0, %s24
      %p21 = scmp.ge.s32.totalorder %s20, 4
      %s30 = sphi 0, %s32
      %s33 = sphi 0, %s30
      %s34 = sphi 0, %s33
      %s50 = sphi 0, %s34
      %s54 = sphi 0, %s54
      %s56 = sphi 0, %s54
      %s57 = sphi 0, %s56
      %s71 = sphi 0, %s57
      %s75 = sphi 0, %s75
      %s77 = sphi 0, %s75
      %s78 = sphi 0, %s77
      %s92 = sphi 0, %s78
      %s96 = sphi 0, %s96
      %s98 = sphi 0, %s96
      %s99 = sphi 0, %s98
      %s113 = sphi 0, %s99
      %s117 = sphi 0, %s117
      %s119 = sphi 0, %s117
      %s120 = sphi 0, %s119
      %s134 = sphi 0, %s120
      %s138 = sphi 0, %s138
      %s140 = sphi 0, %s138
      %s141 = sphi 0, %s140
      %s155 = sphi 0, %s141
      %s159 = sphi 0, %s159
      %s161 = sphi 0, %s159
      %s162 = sphi 0, %s161
      %s176 = sphi 0, %s162
      %s180 = sphi 0, %s180
      %s182 = sphi 0, %s180
      %s183 = sphi 0, %s182
      %s197 = sphi 0, %s183
      %s201 = sphi 0, %s201
      %s203 = sphi 0, %s201
      %s204 = sphi 0, %s203
      %s218 = sphi 0, %s204
      %s222 = sphi 0, %s222
      %s224 = sphi 0, %s222
      %s225 = sphi 0, %s224
      %s239 = sphi 0, %s225
      %s243 = sphi 0, %s243
      %s245 = sphi 0, %s243
      %s246 = sphi 0, %s245
      %s260 = sphi 0, %s246
      %s266 = sphi 0, %s268
      %s269 = sphi 0, %s266
      %s270 = sphi 0, %s269
      %s286 = sphi 0, %s270
    $region4: #{tpu_custom_call.1} parent=1 // loop_header_branch
      %23 = sbr.rel (%p21) target = $region8
    $region5: #{tpu_custom_call.1} parent=1 // loop_body
      %s25 = ssub.s32 %s20, 1
      %s26 = ssub.s32 %s20, 2
      %s27 = sadd.s32 %s20, 1
      %s28 = ssub.s32 %s20, %s27
      %p29 = scmp.eq.s32.totalorder %s28, 0
      %s31 = sadd.s32 %s30, 1
      %s32 = scalar_select %p29, %s30, %s31
      %p35 = pneg %p29
      %p36 = scmp.eq.s32.totalorder %s20, 1
      %p37 = por %p35, %p36
      %p38 = scmp.ne.s32.totalorder %s30, %s33
      %p39 = scmp.eq.s32.totalorder %s20, 0
      %p40 = por %p38, %p39
      %p41 = scmp.ne.s32.totalorder %s30, %s33
      %p42 = scmp.eq.s32.totalorder %s25, 1
      %p43 = por %p41, %p42
      %p44 = scmp.ne.s32.totalorder %s33, %s34
      %p45 = scmp.eq.s32.totalorder %s25, 0
      %p46 = por %p44, %p45
      %p47 = scmp.ne.s32.totalorder %s33, %s34
      %p48 = scmp.eq.s32.totalorder %s26, 1
      %p49 = por %p47, %p48
      %p51 = scmp.ne.s32.totalorder %s34, %s50
      %p52 = scmp.eq.s32.totalorder %s26, 0
      %p53 = por %p51, %p52
      %s55 = sadd.s32 %s54, 1
      %p58 = scmp.eq.s32.totalorder %s20, 1
      %p59 = scmp.ne.s32.totalorder %s54, %s56
      %p60 = scmp.eq.s32.totalorder %s20, 0
      %p61 = por %p59, %p60
      %p62 = scmp.ne.s32.totalorder %s54, %s56
      %p63 = scmp.eq.s32.totalorder %s25, 1
      %p64 = por %p62, %p63
      %p65 = scmp.ne.s32.totalorder %s56, %s57
      %p66 = scmp.eq.s32.totalorder %s25, 0
      %p67 = por %p65, %p66
      %p68 = scmp.ne.s32.totalorder %s56, %s57
      %p69 = scmp.eq.s32.totalorder %s26, 1
      %p70 = por %p68, %p69
      %p72 = scmp.ne.s32.totalorder %s57, %s71
      %p73 = scmp.eq.s32.totalorder %s26, 0
      %p74 = por %p72, %p73
      %s76 = sadd.s32 %s75, 1
      %p79 = scmp.eq.s32.totalorder %s20, 1
      %p80 = scmp.ne.s32.totalorder %s75, %s77
      %p81 = scmp.eq.s32.totalorder %s20, 0
      %p82 = por %p80, %p81
      %p83 = scmp.ne.s32.totalorder %s75, %s77
      %p84 = scmp.eq.s32.totalorder %s25, 1
      %p85 = por %p83, %p84
      %p86 = scmp.ne.s32.totalorder %s77, %s78
      %p87 = scmp.eq.s32.totalorder %s25, 0
      %p88 = por %p86, %p87
      %p89 = scmp.ne.s32.totalorder %s77, %s78
      %p90 = scmp.eq.s32.totalorder %s26, 1
      %p91 = por %p89, %p90
      %p93 = scmp.ne.s32.totalorder %s78, %s92
      %p94 = scmp.eq.s32.totalorder %s26, 0
      %p95 = por %p93, %p94
      %s97 = sadd.s32 %s96, 1
      %p100 = scmp.eq.s32.totalorder %s20, 1
      %p101 = scmp.ne.s32.totalorder %s96, %s98
      %p102 = scmp.eq.s32.totalorder %s20, 0
      %p103 = por %p101, %p102
      %p104 = scmp.ne.s32.totalorder %s96, %s98
      %p105 = scmp.eq.s32.totalorder %s25, 1
      %p106 = por %p104, %p105
      %p107 = scmp.ne.s32.totalorder %s98, %s99
      %p108 = scmp.eq.s32.totalorder %s25, 0
      %p109 = por %p107, %p108
      %p110 = scmp.ne.s32.totalorder %s98, %s99
      %p111 = scmp.eq.s32.totalorder %s26, 1
      %p112 = por %p110, %p111
      %p114 = scmp.ne.s32.totalorder %s99, %s113
      %p115 = scmp.eq.s32.totalorder %s26, 0
      %p116 = por %p114, %p115
      %s118 = sadd.s32 %s117, 1
      %p121 = scmp.eq.s32.totalorder %s20, 1
      %p122 = scmp.ne.s32.totalorder %s117, %s119
      %p123 = scmp.eq.s32.totalorder %s20, 0
      %p124 = por %p122, %p123
      %p125 = scmp.ne.s32.totalorder %s117, %s119
      %p126 = scmp.eq.s32.totalorder %s25, 1
      %p127 = por %p125, %p126
      %p128 = scmp.ne.s32.totalorder %s119, %s120
      %p129 = scmp.eq.s32.totalorder %s25, 0
      %p130 = por %p128, %p129
      %p131 = scmp.ne.s32.totalorder %s119, %s120
      %p132 = scmp.eq.s32.totalorder %s26, 1
      %p133 = por %p131, %p132
      %p135 = scmp.ne.s32.totalorder %s120, %s134
      %p136 = scmp.eq.s32.totalorder %s26, 0
      %p137 = por %p135, %p136
      %s139 = sadd.s32 %s138, 1
      %p142 = scmp.eq.s32.totalorder %s20, 1
      %p143 = scmp.ne.s32.totalorder %s138, %s140
      %p144 = scmp.eq.s32.totalorder %s20, 0
      %p145 = por %p143, %p144
      %p146 = scmp.ne.s32.totalorder %s138, %s140
      %p147 = scmp.eq.s32.totalorder %s25, 1
      %p148 = por %p146, %p147
      %p149 = scmp.ne.s32.totalorder %s140, %s141
      %p150 = scmp.eq.s32.totalorder %s25, 0
      %p151 = por %p149, %p150
      %p152 = scmp.ne.s32.totalorder %s140, %s141
      %p153 = scmp.eq.s32.totalorder %s26, 1
      %p154 = por %p152, %p153
      %p156 = scmp.ne.s32.totalorder %s141, %s155
      %p157 = scmp.eq.s32.totalorder %s26, 0
      %p158 = por %p156, %p157
      %s160 = sadd.s32 %s159, 1
      %p163 = scmp.eq.s32.totalorder %s20, 1
      %p164 = scmp.ne.s32.totalorder %s159, %s161
      %p165 = scmp.eq.s32.totalorder %s20, 0
      %p166 = por %p164, %p165
      %p167 = scmp.ne.s32.totalorder %s159, %s161
      %p168 = scmp.eq.s32.totalorder %s25, 1
      %p169 = por %p167, %p168
      %p170 = scmp.ne.s32.totalorder %s161, %s162
      %p171 = scmp.eq.s32.totalorder %s25, 0
      %p172 = por %p170, %p171
      %p173 = scmp.ne.s32.totalorder %s161, %s162
      %p174 = scmp.eq.s32.totalorder %s26, 1
      %p175 = por %p173, %p174
      %p177 = scmp.ne.s32.totalorder %s162, %s176
      %p178 = scmp.eq.s32.totalorder %s26, 0
      %p179 = por %p177, %p178
      %s181 = sadd.s32 %s180, 1
      %p184 = scmp.eq.s32.totalorder %s20, 1
      %p185 = scmp.ne.s32.totalorder %s180, %s182
      %p186 = scmp.eq.s32.totalorder %s20, 0
      %p187 = por %p185, %p186
      %p188 = scmp.ne.s32.totalorder %s180, %s182
      %p189 = scmp.eq.s32.totalorder %s25, 1
      %p190 = por %p188, %p189
      %p191 = scmp.ne.s32.totalorder %s182, %s183
      %p192 = scmp.eq.s32.totalorder %s25, 0
      %p193 = por %p191, %p192
      %p194 = scmp.ne.s32.totalorder %s182, %s183
      %p195 = scmp.eq.s32.totalorder %s26, 1
      %p196 = por %p194, %p195
      %p198 = scmp.ne.s32.totalorder %s183, %s197
      %p199 = scmp.eq.s32.totalorder %s26, 0
      %p200 = por %p198, %p199
      %s202 = sadd.s32 %s201, 1
      %p205 = scmp.eq.s32.totalorder %s20, 1
      %p206 = scmp.ne.s32.totalorder %s201, %s203
      %p207 = scmp.eq.s32.totalorder %s20, 0
      %p208 = por %p206, %p207
      %p209 = scmp.ne.s32.totalorder %s201, %s203
      %p210 = scmp.eq.s32.totalorder %s25, 1
      %p211 = por %p209, %p210
      %p212 = scmp.ne.s32.totalorder %s203, %s204
      %p213 = scmp.eq.s32.totalorder %s25, 0
      %p214 = por %p212, %p213
      %p215 = scmp.ne.s32.totalorder %s203, %s204
      %p216 = scmp.eq.s32.totalorder %s26, 1
      %p217 = por %p215, %p216
      %p219 = scmp.ne.s32.totalorder %s204, %s218
      %p220 = scmp.eq.s32.totalorder %s26, 0
      %p221 = por %p219, %p220
      %s223 = sadd.s32 %s222, 1
      %p226 = scmp.eq.s32.totalorder %s20, 1
      %p227 = scmp.ne.s32.totalorder %s222, %s224
      %p228 = scmp.eq.s32.totalorder %s20, 0
      %p229 = por %p227, %p228
      %p230 = scmp.ne.s32.totalorder %s222, %s224
      %p231 = scmp.eq.s32.totalorder %s25, 1
      %p232 = por %p230, %p231
      %p233 = scmp.ne.s32.totalorder %s224, %s225
      %p234 = scmp.eq.s32.totalorder %s25, 0
      %p235 = por %p233, %p234
      %p236 = scmp.ne.s32.totalorder %s224, %s225
      %p237 = scmp.eq.s32.totalorder %s26, 1
      %p238 = por %p236, %p237
      %p240 = scmp.ne.s32.totalorder %s225, %s239
      %p241 = scmp.eq.s32.totalorder %s26, 0
      %p242 = por %p240, %p241
      %s244 = sadd.s32 %s243, 1
      %p247 = scmp.eq.s32.totalorder %s20, 1
      %p248 = scmp.ne.s32.totalorder %s243, %s245
      %p249 = scmp.eq.s32.totalorder %s20, 0
      %p250 = por %p248, %p249
      %p251 = scmp.ne.s32.totalorder %s243, %s245
      %p252 = scmp.eq.s32.totalorder %s25, 1
      %p253 = por %p251, %p252
      %p254 = scmp.ne.s32.totalorder %s245, %s246
      %p255 = scmp.eq.s32.totalorder %s25, 0
      %p256 = por %p254, %p255
      %p257 = scmp.ne.s32.totalorder %s245, %s246
      %p258 = scmp.eq.s32.totalorder %s26, 1
      %p259 = por %p257, %p258
      %p261 = scmp.ne.s32.totalorder %s246, %s260
      %p262 = scmp.eq.s32.totalorder %s26, 0
      %p263 = por %p261, %p262
      %s264 = ssub.s32 %s20, %s27
      %p265 = scmp.eq.s32.totalorder %s264, 0
      %s267 = sadd.s32 %s266, 1
      %s268 = scalar_select %p265, %s266, %s267
      %p271 = pneg %p265
      %p272 = scmp.eq.s32.totalorder %s20, 1
      %p273 = por %p271, %p272
      %p274 = scmp.ne.s32.totalorder %s266, %s269
      %p275 = scmp.eq.s32.totalorder %s20, 0
      %p276 = por %p274, %p275
      %p277 = scmp.ne.s32.totalorder %s266, %s269
      %p278 = scmp.eq.s32.totalorder %s25, 1
      %p279 = por %p277, %p278
      %p280 = scmp.ne.s32.totalorder %s269, %s270
      %p281 = scmp.eq.s32.totalorder %s25, 0
      %p282 = por %p280, %p281
      %p283 = scmp.ne.s32.totalorder %s269, %s270
      %p284 = scmp.eq.s32.totalorder %s26, 1
      %p285 = por %p283, %p284
      %p287 = scmp.ne.s32.totalorder %s270, %s286
      %p288 = scmp.eq.s32.totalorder %s26, 0
      %p289 = por %p287, %p288
      %p290 = scmp.le.s32.totalorder 1, %s20
      %p291 = scmp.lt.s32.totalorder %s20, 3
      %p292 = pnand %p290, %p291
      %p293 = pneg %p292
      // Predicated region
      $region9: #{tpu_custom_call.1} parent=5 // pred_check
        _
      $region10: #{tpu_custom_call.1} parent=5 // pred_check_branch
        %295 = sbr.rel (%p292) target = $region12
      $region11: #{tpu_custom_call.1} parent=5 // pred_region
        %s296 = ssub.s32 %s20, 1
        // Predicated region
        $region13: #{tpu_custom_call.1} parent=11 // pred_check
          %p297 = pneg %p67
        $region14: #{tpu_custom_call.1} parent=11 // pred_check_branch
          %299 = sbr.rel (%p297) target = $region16
        $region15: #{tpu_custom_call.1} parent=11 // pred_region
          _
        $region16: #{tpu_custom_call.1} parent=11 // pred_fallthru
          _
        // Predicated region
        $region17: #{tpu_custom_call.1} parent=11 // pred_check
          %p300 = pneg %p88
        $region18: #{tpu_custom_call.1} parent=11 // pred_check_branch
          %302 = sbr.rel (%p300) target = $region20
        $region19: #{tpu_custom_call.1} parent=11 // pred_region
          _
        $region20: #{tpu_custom_call.1} parent=11 // pred_fallthru
          _
        // Predicated region
        $region21: #{tpu_custom_call.1} parent=11 // pred_check
          %p303 = pneg %p109
        $region22: #{tpu_custom_call.1} parent=11 // pred_check_branch
          %305 = sbr.rel (%p303) target = $region24
        $region23: #{tpu_custom_call.1} parent=11 // pred_region
          _
        $region24: #{tpu_custom_call.1} parent=11 // pred_fallthru
          _
        // Predicated region
        $region25: #{tpu_custom_call.1} parent=11 // pred_check
          %p306 = pneg %p130
        $region26: #{tpu_custom_call.1} parent=11 // pred_check_branch
          %308 = sbr.rel (%p306) target = $region28
        $region27: #{tpu_custom_call.1} parent=11 // pred_region
          _
        $region28: #{tpu_custom_call.1} parent=11 // pred_fallthru
          _
        // Predicated region
        $region29: #{tpu_custom_call.1} parent=11 // pred_check
          %p309 = pneg %p151
        $region30: #{tpu_custom_call.1} parent=11 // pred_check_branch
          %311 = sbr.rel (%p309) target = $region32
        $region31: #{tpu_custom_call.1} parent=11 // pred_region
          _
        $region32: #{tpu_custom_call.1} parent=11 // pred_fallthru
          _
        // Predicated region
        $region33: #{tpu_custom_call.1} parent=11 // pred_check
          %p312 = pneg %p172
        $region34: #{tpu_custom_call.1} parent=11 // pred_check_branch
          %314 = sbr.rel (%p312) target = $region36
        $region35: #{tpu_custom_call.1} parent=11 // pred_region
          _
        $region36: #{tpu_custom_call.1} parent=11 // pred_fallthru
          _
        // Predicated region
        $region37: #{tpu_custom_call.1} parent=11 // pred_check
          %p315 = pneg %p193
        $region38: #{tpu_custom_call.1} parent=11 // pred_check_branch
          %317 = sbr.rel (%p315) target = $region40
        $region39: #{tpu_custom_call.1} parent=11 // pred_region
          _
        $region40: #{tpu_custom_call.1} parent=11 // pred_fallthru
          _
        // Predicated region
        $region41: #{tpu_custom_call.1} parent=11 // pred_check
          %p318 = pneg %p214
        $region42: #{tpu_custom_call.1} parent=11 // pred_check_branch
          %320 = sbr.rel (%p318) target = $region44
        $region43: #{tpu_custom_call.1} parent=11 // pred_region
          _
        $region44: #{tpu_custom_call.1} parent=11 // pred_fallthru
          _
        // Predicated region
        $region45: #{tpu_custom_call.1} parent=11 // pred_check
          %p321 = pneg %p235
        $region46: #{tpu_custom_call.1} parent=11 // pred_check_branch
          %323 = sbr.rel (%p321) target = $region48
        $region47: #{tpu_custom_call.1} parent=11 // pred_region
          _
        $region48: #{tpu_custom_call.1} parent=11 // pred_fallthru
          _
        // Predicated region
        $region49: #{tpu_custom_call.1} parent=11 // pred_check
          %p324 = pneg %p256
        $region50: #{tpu_custom_call.1} parent=11 // pred_check_branch
          %326 = sbr.rel (%p324) target = $region52
        $region51: #{tpu_custom_call.1} parent=11 // pred_region
          _
        $region52: #{tpu_custom_call.1} parent=11 // pred_fallthru
          _
      $region12: #{tpu_custom_call.1} parent=5 // pred_fallthru
        _
      %p327 = scmp.lt.s32.totalorder %s20, 2
      // Predicated region
      $region53: #{tpu_custom_call.1} parent=5 // pred_check
        %p328 = pneg %p327
      $region54: #{tpu_custom_call.1} parent=5 // pred_check_branch
        %330 = sbr.rel (%p328) target = $region56
      $region55: #{tpu_custom_call.1} parent=5 // pred_region
        // Predicated region
        $region57: #{tpu_custom_call.1} parent=55 // pred_check
          %p331 = pneg %p40
        $region58: #{tpu_custom_call.1} parent=55 // pred_check_branch
          %333 = sbr.rel (%p331) target = $region60
        $region59: #{tpu_custom_call.1} parent=55 // pred_region
          %p334 = scmp.lt.s32.totalorder %s20, 1
          %s335 = scalar_select %p334, %s20, 1
          %s336 = smul.addr %s335, 16
          %s337 = smul.addr %s336, 8
          %s338 = scalar_lea.vmem %s0, %s337
        $region60: #{tpu_custom_call.1} parent=55 // pred_fallthru
          _
      $region56: #{tpu_custom_call.1} parent=5 // pred_fallthru
        _
      %p339 = scmp.le.s32.totalorder 1, %s20
      %p340 = scmp.lt.s32.totalorder %s20, 3
      %p341 = pnand %p339, %p340
      %p342 = pneg %p341
      // Predicated region
      $region61: #{tpu_custom_call.1} parent=5 // pred_check
        _
      $region62: #{tpu_custom_call.1} parent=5 // pred_check_branch
        %344 = sbr.rel (%p341) target = $region64
      $region63: #{tpu_custom_call.1} parent=5 // pred_region
        %s345 = ssub.s32 %s20, 1
        %p346 = scmp.lt.s32.totalorder %s25, 1
        %s347 = scalar_select %p346, %s25, 1
        %s348 = smul.addr %s347, 16
        %s349 = smul.addr %s348, 8
        %s350 = scalar_lea.vmem %s0, %s349
        %p351 = pneg %p46
        %p352 = pneg %p43
        %p353 = pneg %p67
        %p354 = pneg %p64
        %p355 = pneg %p88
        %p356 = pneg %p85
        %p357 = pneg %p109
        %p358 = pneg %p106
        %p359 = pneg %p130
        %p360 = pneg %p127
        %p361 = pneg %p151
        %p362 = pneg %p148
        %p363 = pneg %p172
        %p364 = pneg %p169
        %p365 = pneg %p193
        %p366 = pneg %p190
        %p367 = pneg %p214
        %p368 = pneg %p211
        %p369 = pneg %p235
        %p370 = pneg %p232
        %p371 = pneg %p256
        %p372 = pneg %p253
        %p373 = pneg %p282
        %p374 = pneg %p279
        %s375 = sand.u32 %s269, 1
        %s376 = scalar_lea.sflag [#allocation5], %s375
        %s377 = sand.u32 %s269, 1
        %s378 = smul.addr %s377, 128
        %s379 = scalar_lea.vmem [#allocation4], %s378
        %p380 = scmp.lt.s32.totalorder %s25, 1
        %s381 = scalar_select %p380, %s25, 1
        %s382 = smul.addr %s381, 16
        %s383 = smul.addr %s382, 8
        %s384 = scalar_lea.vmem %s0, %s383
        %v386 = vld [vmem:[%s384] sm:$0xff]
        %v387 = vld [vmem:[%s384 + $0x8] sm:$0xff]
        %v388 = vld [vmem:[%s384 + $0x10] sm:$0xff]
        %v389 = vld [vmem:[%s384 + $0x18] sm:$0xff]
        %v390 = vld [vmem:[%s384 + $0x20] sm:$0xff]
        %v391 = vld [vmem:[%s384 + $0x28] sm:$0xff]
        %v392 = vld [vmem:[%s384 + $0x30] sm:$0xff]
        %v393 = vld [vmem:[%s384 + $0x38] sm:$0xff]
        %v394 = vld [vmem:[%s384 + $0x40] sm:$0xff]
        %v395 = vld [vmem:[%s384 + $0x48] sm:$0xff]
        %v396 = vld [vmem:[%s384 + $0x50] sm:$0xff]
        %v397 = vld [vmem:[%s384 + $0x58] sm:$0xff]
        %v398 = vld [vmem:[%s384 + $0x60] sm:$0xff]
        %v399 = vld [vmem:[%s384 + $0x68] sm:$0xff]
        %v400 = vld [vmem:[%s384 + $0x70] sm:$0xff]
        %v401 = vld [vmem:[%s384 + $0x78] sm:$0xff]
        %v402 = vpack.c.bf16 %v388, %v386
        %v403 = vpack.c.bf16 %v389, %v387
        %v404 = vpack.c.bf16 %v392, %v390
        %v405 = vpack.c.bf16 %v393, %v391
        %v406 = vpack.c.bf16 %v396, %v394
        %v407 = vpack.c.bf16 %v397, %v395
        %v408 = vpack.c.bf16 %v400, %v398
        %v409 = vpack.c.bf16 %v401, %v399
        %v410 = vld [vmem:[%s1] sm:$0xf]
        %v411 = vld [vmem:[%s1 + $0x4] sm:$0xf]
        %v412 = vld [vmem:[%s1 + $0x8] sm:$0xf]
        %v413 = vld [vmem:[%s1 + $0xc] sm:$0xf]
        %v414 = vld [vmem:[%s1 + $0x10] sm:$0xf]
        %v415 = vld [vmem:[%s1 + $0x14] sm:$0xf]
        %v416 = vld [vmem:[%s1 + $0x18] sm:$0xf]
        %v417 = vld [vmem:[%s1 + $0x1c] sm:$0xf]
        %v418 = vld [vmem:[%s1 + $0x20] sm:$0xf]
        %v419 = vld [vmem:[%s1 + $0x24] sm:$0xf]
        %v420 = vld [vmem:[%s1 + $0x28] sm:$0xf]
        %v421 = vld [vmem:[%s1 + $0x2c] sm:$0xf]
        %v422 = vld [vmem:[%s1 + $0x30] sm:$0xf]
        %v423 = vld [vmem:[%s1 + $0x34] sm:$0xf]
        %v424 = vld [vmem:[%s1 + $0x38] sm:$0xf]
        %v425 = vld [vmem:[%s1 + $0x3c] sm:$0xf]
        %v426 = vld [vmem:[%s1 + $0x40] sm:$0xf]
        %v427 = vld [vmem:[%s1 + $0x44] sm:$0xf]
        %v428 = vld [vmem:[%s1 + $0x48] sm:$0xf]
        %v429 = vld [vmem:[%s1 + $0x4c] sm:$0xf]
        %v430 = vld [vmem:[%s1 + $0x50] sm:$0xf]
        %v431 = vld [vmem:[%s1 + $0x54] sm:$0xf]
        %v432 = vld [vmem:[%s1 + $0x58] sm:$0xf]
        %v433 = vld [vmem:[%s1 + $0x5c] sm:$0xf]
        %v434 = vld [vmem:[%s2] sm:$0xff]
        %v435 = vld [vmem:[%s2 + $0x8] sm:$0xff]
        %v436 = vld [vmem:[%s2 + $0x10] sm:$0xff]
        %v437 = vld [vmem:[%s2 + $0x18] sm:$0xff]
        %v438 = vld [vmem:[%s2 + $0x20] sm:$0xff]
        %v439 = vld [vmem:[%s2 + $0x28] sm:$0xff]
        %v440 = vld [vmem:[%s2 + $0x30] sm:$0xff]
        %v441 = vld [vmem:[%s2 + $0x38] sm:$0xff]
        %v442 = vld [vmem:[%s2 + $0x40] sm:$0xff]
        %v443 = vld [vmem:[%s2 + $0x48] sm:$0xff]
        %v444 = vld [vmem:[%s2 + $0x50] sm:$0xff]
        %v445 = vld [vmem:[%s2 + $0x58] sm:$0xff]
        %v446 = vld [vmem:[%s2 + $0x60] sm:$0xff]
        %v447 = vld [vmem:[%s2 + $0x68] sm:$0xff]
        %v448 = vld [vmem:[%s2 + $0x70] sm:$0xff]
        %v449 = vld [vmem:[%s2 + $0x78] sm:$0xff]
        %v450 = vld [vmem:[%s2 + $0x80] sm:$0xff]
        %v451 = vld [vmem:[%s2 + $0x88] sm:$0xff]
        %v452 = vld [vmem:[%s2 + $0x90] sm:$0xff]
        %v453 = vld [vmem:[%s2 + $0x98] sm:$0xff]
        %v454 = vld [vmem:[%s2 + $0xa0] sm:$0xff]
        %v455 = vld [vmem:[%s2 + $0xa8] sm:$0xff]
        %v456 = vld [vmem:[%s2 + $0xb0] sm:$0xff]
        %v457 = vld [vmem:[%s2 + $0xb8] sm:$0xff]
        %459 = vset.pattern.permute.xlu0 0
        %460 = vperm.xlu0 %459, %v434
        %v461 = vpop.permute.xlu0 %460
        %464 = vset.pattern.permute.xlu0 0
        %465 = vperm.xlu0 %464, %v435
        %v466 = vpop.permute.xlu0 %465
        %469 = vset.pattern.permute.xlu0 0
        %470 = vperm.xlu0 %469, %v436
        %v471 = vpop.permute.xlu0 %470
        %474 = vset.pattern.permute.xlu0 0
        %475 = vperm.xlu0 %474, %v437
        %v476 = vpop.permute.xlu0 %475
        %479 = vset.pattern.permute.xlu0 0
        %480 = vperm.xlu0 %479, %v438
        %v481 = vpop.permute.xlu0 %480
        %484 = vset.pattern.permute.xlu0 0
        %485 = vperm.xlu0 %484, %v439
        %v486 = vpop.permute.xlu0 %485
        %489 = vset.pattern.permute.xlu0 0
        %490 = vperm.xlu0 %489, %v440
        %v491 = vpop.permute.xlu0 %490
        %494 = vset.pattern.permute.xlu0 0
        %495 = vperm.xlu0 %494, %v441
        %v496 = vpop.permute.xlu0 %495
        %499 = vset.pattern.permute.xlu0 0
        %500 = vperm.xlu0 %499, %v442
        %v501 = vpop.permute.xlu0 %500
        %504 = vset.pattern.permute.xlu0 0
        %505 = vperm.xlu0 %504, %v443
        %v506 = vpop.permute.xlu0 %505
        %509 = vset.pattern.permute.xlu0 0
        %510 = vperm.xlu0 %509, %v444
        %v511 = vpop.permute.xlu0 %510
        %514 = vset.pattern.permute.xlu0 0
        %515 = vperm.xlu0 %514, %v445
        %v516 = vpop.permute.xlu0 %515
        %519 = vset.pattern.permute.xlu0 0
        %520 = vperm.xlu0 %519, %v446
        %v521 = vpop.permute.xlu0 %520
        %524 = vset.pattern.permute.xlu0 0
        %525 = vperm.xlu0 %524, %v447
        %v526 = vpop.permute.xlu0 %525
        %529 = vset.pattern.permute.xlu0 0
        %530 = vperm.xlu0 %529, %v448
        %v531 = vpop.permute.xlu0 %530
        %534 = vset.pattern.permute.xlu0 0
        %535 = vperm.xlu0 %534, %v449
        %v536 = vpop.permute.xlu0 %535
        %539 = vset.pattern.permute.xlu0 0
        %540 = vperm.xlu0 %539, %v450
        %v541 = vpop.permute.xlu0 %540
        %544 = vset.pattern.permute.xlu0 0
        %545 = vperm.xlu0 %544, %v451
        %v546 = vpop.permute.xlu0 %545
        %549 = vset.pattern.permute.xlu0 0
        %550 = vperm.xlu0 %549, %v452
        %v551 = vpop.permute.xlu0 %550
        %554 = vset.pattern.permute.xlu0 0
        %555 = vperm.xlu0 %554, %v453
        %v556 = vpop.permute.xlu0 %555
        %559 = vset.pattern.permute.xlu0 0
        %560 = vperm.xlu0 %559, %v454
        %v561 = vpop.permute.xlu0 %560
        %564 = vset.pattern.permute.xlu0 0
        %565 = vperm.xlu0 %564, %v455
        %v566 = vpop.permute.xlu0 %565
        %569 = vset.pattern.permute.xlu0 0
        %570 = vperm.xlu0 %569, %v456
        %v571 = vpop.permute.xlu0 %570
        %574 = vset.pattern.permute.xlu0 0
        %575 = vperm.xlu0 %574, %v457
        %v576 = vpop.permute.xlu0 %575
        %v602 = vunpack.c.l.b16 %v410
        %v603 = vunpack.c.l.b16 %v411
        %v604 = vunpack.c.l.b16 %v412
        %v605 = vunpack.c.l.b16 %v413
        %v606 = vunpack.c.l.b16 %v414
        %v607 = vunpack.c.l.b16 %v415
        %v608 = vunpack.c.l.b16 %v416
        %v609 = vunpack.c.l.b16 %v417
        %v610 = vunpack.c.l.b16 %v418
        %v611 = vunpack.c.l.b16 %v419
        %v612 = vunpack.c.l.b16 %v420
        %v613 = vunpack.c.l.b16 %v421
        %v614 = vunpack.c.l.b16 %v422
        %v615 = vunpack.c.l.b16 %v423
        %v616 = vunpack.c.l.b16 %v424
        %v617 = vunpack.c.l.b16 %v425
        %v618 = vunpack.c.l.b16 %v426
        %v619 = vunpack.c.l.b16 %v427
        %v620 = vunpack.c.l.b16 %v428
        %v621 = vunpack.c.l.b16 %v429
        %v622 = vunpack.c.l.b16 %v430
        %v623 = vunpack.c.l.b16 %v431
        %v624 = vunpack.c.l.b16 %v432
        %v625 = vunpack.c.l.b16 %v433
        %v626 = vpack.c.b16 %v603, %v602
        %v627 = vpack.c.b16 %v605, %v604
        %v628 = vpack.c.b16 %v607, %v606
        %v629 = vpack.c.b16 %v609, %v608
        %v630 = vpack.c.b16 %v611, %v610
        %v631 = vpack.c.b16 %v613, %v612
        %v632 = vpack.c.b16 %v615, %v614
        %v633 = vpack.c.b16 %v617, %v616
        %v634 = vpack.c.b16 %v619, %v618
        %v635 = vpack.c.b16 %v621, %v620
        %v636 = vpack.c.b16 %v623, %v622
        %v637 = vpack.c.b16 %v625, %v624
        %vm638 = vcmask 523264
        %v640 = vsel %vm638, %v626, 0
        %v643 = vsel %vm638, %v627, 0
        %v646 = vsel %vm638, %v628, 0
        %v649 = vsel %vm638, %v629, 0
        %v652 = vsel %vm638, %v630, 0
        %v655 = vsel %vm638, %v631, 0
        %v658 = vsel %vm638, %v632, 0
        %v661 = vsel %vm638, %v633, 0
        %v664 = vsel %vm638, %v634, 0
        %v667 = vsel %vm638, %v635, 0
        %v670 = vsel %vm638, %v636, 0
        %v673 = vsel %vm638, %v637, 0
        %675 = vmatprep.subr.bf16.mxu0 0
        %676 = vmatpush1.bf16.msra.mxu0 0
        %677 = vmatprep.subr.bf16.mxu0 0
        %678 = vmatpush1.bf16.msra.mxu0 0
        %679 = vmatprep.subr.bf16.mxu0 0
        %680 = vmatpush1.bf16.msra.mxu0 0
        %681 = vmatprep.subr.bf16.mxu0 0
        %682 = vmatpush1.bf16.msra.mxu0 0
        %683 = vmatprep.subr.bf16.mxu0 %v409
        %684 = vmatpush1.bf16.msra.mxu0 %v408
        %685 = vmatprep.subr.bf16.mxu0 %v407
        %686 = vmatpush1.bf16.msra.mxu0 %v406
        %687 = vmatprep.subr.bf16.mxu0 %v405
        %688 = vmatpush1.bf16.msra.mxu0 %v404
        %689 = vmatprep.subr.bf16.mxu0 %v403
        %690 = vmatpush1.bf16.msra.mxu0 %v402
        %691 = vmatprep.subr.bf16.mxu0 0
        %692 = vmatpush2.bf16.msra.mxu0 0
        %693 = vmatprep.subr.bf16.mxu0 0
        %694 = vmatpush2.bf16.msra.mxu0 0
        %695 = vmatprep.subr.bf16.mxu0 0
        %696 = vmatpush2.bf16.msra.mxu0 0
        %697 = vmatprep.subr.bf16.mxu0 0
        %698 = vmatpush2.bf16.msra.mxu0 0
        %699 = vmatprep.subr.bf16.mxu0 0
        %700 = vmatpush2.bf16.msra.mxu0 0
        %701 = vmatprep.subr.bf16.mxu0 0
        %702 = vmatpush2.bf16.msra.mxu0 0
        %703 = vmatprep.subr.bf16.mxu0 0
        %704 = vmatpush2.bf16.msra.mxu0 0
        %705 = vmatprep.subr.bf16.mxu0 0
        %706 = vmatpush2.bf16.msra.mxu0 0
        %707 = vmatprep.mubr.bf16.mxu0 0
        %708 = vmatmul.mubr.bf16.gmra.mxu0 %v640
        %v709 = vpop.f32.mrf.mxu0
        %v710 = vadd.f32 %v461, %v709
        %v711 = vpop.f32.mrf.mxu0
        %v712 = vadd.f32 %v461, %v711
        %v713 = vpop.f32.mrf.mxu0
        %v714 = vadd.f32 %v466, %v713
        %v715 = vpop.f32.mrf.mxu0
        %v716 = vadd.f32 %v466, %v715
        %717 = vmatprep.mubr.bf16.mxu0 0
        %718 = vmatmul.mubr.bf16.gmra.mxu0 %v643
        %v719 = vpop.f32.mrf.mxu0
        %v720 = vadd.f32 %v471, %v719
        %v721 = vpop.f32.mrf.mxu0
        %v722 = vadd.f32 %v471, %v721
        %v723 = vpop.f32.mrf.mxu0
        %v724 = vadd.f32 %v476, %v723
        %v725 = vpop.f32.mrf.mxu0
        %v726 = vadd.f32 %v476, %v725
        %727 = vmatprep.mubr.bf16.mxu0 0
        %728 = vmatmul.mubr.bf16.gmra.mxu0 %v646
        %v729 = vpop.f32.mrf.mxu0
        %v730 = vadd.f32 %v481, %v729
        %v731 = vpop.f32.mrf.mxu0
        %v732 = vadd.f32 %v481, %v731
        %v733 = vpop.f32.mrf.mxu0
        %v734 = vadd.f32 %v486, %v733
        %v735 = vpop.f32.mrf.mxu0
        %v736 = vadd.f32 %v486, %v735
        %737 = vmatprep.mubr.bf16.mxu0 0
        %738 = vmatmul.mubr.bf16.gmra.mxu0 %v649
        %v739 = vpop.f32.mrf.mxu0
        %v740 = vadd.f32 %v491, %v739
        %v741 = vpop.f32.mrf.mxu0
        %v742 = vadd.f32 %v491, %v741
        %v743 = vpop.f32.mrf.mxu0
        %v744 = vadd.f32 %v496, %v743
        %v745 = vpop.f32.mrf.mxu0
        %v746 = vadd.f32 %v496, %v745
        %747 = vmatprep.mubr.bf16.mxu0 0
        %748 = vmatmul.mubr.bf16.gmra.mxu0 %v652
        %v749 = vpop.f32.mrf.mxu0
        %v750 = vadd.f32 %v501, %v749
        %v751 = vpop.f32.mrf.mxu0
        %v752 = vadd.f32 %v501, %v751
        %v753 = vpop.f32.mrf.mxu0
        %v754 = vadd.f32 %v506, %v753
        %v755 = vpop.f32.mrf.mxu0
        %v756 = vadd.f32 %v506, %v755
        %757 = vmatprep.mubr.bf16.mxu0 0
        %758 = vmatmul.mubr.bf16.gmra.mxu0 %v655
        %v759 = vpop.f32.mrf.mxu0
        %v760 = vadd.f32 %v511, %v759
        %v761 = vpop.f32.mrf.mxu0
        %v762 = vadd.f32 %v511, %v761
        %v763 = vpop.f32.mrf.mxu0
        %v764 = vadd.f32 %v516, %v763
        %v765 = vpop.f32.mrf.mxu0
        %v766 = vadd.f32 %v516, %v765
        %767 = vmatprep.mubr.bf16.mxu0 0
        %768 = vmatmul.mubr.bf16.gmra.mxu0 %v658
        %v769 = vpop.f32.mrf.mxu0
        %v770 = vadd.f32 %v521, %v769
        %v771 = vpop.f32.mrf.mxu0
        %v772 = vadd.f32 %v521, %v771
        %v773 = vpop.f32.mrf.mxu0
        %v774 = vadd.f32 %v526, %v773
        %v775 = vpop.f32.mrf.mxu0
        %v776 = vadd.f32 %v526, %v775
        %777 = vmatprep.mubr.bf16.mxu0 0
        %778 = vmatmul.mubr.bf16.gmra.mxu0 %v661
        %v779 = vpop.f32.mrf.mxu0
        %v780 = vadd.f32 %v531, %v779
        %v781 = vpop.f32.mrf.mxu0
        %v782 = vadd.f32 %v531, %v781
        %v783 = vpop.f32.mrf.mxu0
        %v784 = vadd.f32 %v536, %v783
        %v785 = vpop.f32.mrf.mxu0
        %v786 = vadd.f32 %v536, %v785
        %787 = vmatprep.mubr.bf16.mxu0 0
        %788 = vmatmul.mubr.bf16.gmra.mxu0 %v664
        %v789 = vpop.f32.mrf.mxu0
        %v790 = vadd.f32 %v541, %v789
        %v791 = vpop.f32.mrf.mxu0
        %v792 = vadd.f32 %v541, %v791
        %v793 = vpop.f32.mrf.mxu0
        %v794 = vadd.f32 %v546, %v793
        %v795 = vpop.f32.mrf.mxu0
        %v796 = vadd.f32 %v546, %v795
        %797 = vmatprep.mubr.bf16.mxu0 0
        %798 = vmatmul.mubr.bf16.gmra.mxu0 %v667
        %v799 = vpop.f32.mrf.mxu0
        %v800 = vadd.f32 %v551, %v799
        %v801 = vpop.f32.mrf.mxu0
        %v802 = vadd.f32 %v551, %v801
        %v803 = vpop.f32.mrf.mxu0
        %v804 = vadd.f32 %v556, %v803
        %v805 = vpop.f32.mrf.mxu0
        %v806 = vadd.f32 %v556, %v805
        %807 = vmatprep.mubr.bf16.mxu0 0
        %808 = vmatmul.mubr.bf16.gmra.mxu0 %v670
        %v809 = vpop.f32.mrf.mxu0
        %v810 = vadd.f32 %v561, %v809
        %v811 = vpop.f32.mrf.mxu0
        %v812 = vadd.f32 %v561, %v811
        %v813 = vpop.f32.mrf.mxu0
        %v814 = vadd.f32 %v566, %v813
        %v815 = vpop.f32.mrf.mxu0
        %v816 = vadd.f32 %v566, %v815
        %817 = vmatprep.mubr.bf16.mxu0 0
        %818 = vmatmul.mubr.bf16.gmra.mxu0 %v673
        %v819 = vpop.f32.mrf.mxu0
        %v820 = vadd.f32 %v571, %v819
        %v821 = vpop.f32.mrf.mxu0
        %v822 = vadd.f32 %v571, %v821
        %v823 = vpop.f32.mrf.mxu0
        %v824 = vadd.f32 %v576, %v823
        %v825 = vpop.f32.mrf.mxu0
        %v826 = vadd.f32 %v576, %v825
        %827 = vdwg.mxu0
        %828 = vst [vmem:[#allocation2] sm:$0xff] %v710
        %829 = vst [vmem:[#allocation2 + $0x8] sm:$0xff] %v712
        %830 = vst [vmem:[#allocation2 + $0x10] sm:$0xff] %v714
        %831 = vst [vmem:[#allocation2 + $0x18] sm:$0xff] %v716
        %832 = vst [vmem:[#allocation2 + $0x20] sm:$0xff] %v720
        %833 = vst [vmem:[#allocation2 + $0x28] sm:$0xff] %v722
        %834 = vst [vmem:[#allocation2 + $0x30] sm:$0xff] %v724
        %835 = vst [vmem:[#allocation2 + $0x38] sm:$0xff] %v726
        %836 = vst [vmem:[#allocation2 + $0x40] sm:$0xff] %v730
        %837 = vst [vmem:[#allocation2 + $0x48] sm:$0xff] %v732
        %838 = vst [vmem:[#allocation2 + $0x50] sm:$0xff] %v734
        %839 = vst [vmem:[#allocation2 + $0x58] sm:$0xff] %v736
        %840 = vst [vmem:[#allocation2 + $0x60] sm:$0xff] %v740
        %841 = vst [vmem:[#allocation2 + $0x68] sm:$0xff] %v742
        %842 = vst [vmem:[#allocation2 + $0x70] sm:$0xff] %v744
        %843 = vst [vmem:[#allocation2 + $0x78] sm:$0xff] %v746
        %844 = vst [vmem:[#allocation2 + $0x80] sm:$0xff] %v750
        %845 = vst [vmem:[#allocation2 + $0x88] sm:$0xff] %v752
        %846 = vst [vmem:[#allocation2 + $0x90] sm:$0xff] %v754
        %847 = vst [vmem:[#allocation2 + $0x98] sm:$0xff] %v756
        %848 = vst [vmem:[#allocation2 + $0xa0] sm:$0xff] %v760
        %849 = vst [vmem:[#allocation2 + $0xa8] sm:$0xff] %v762
        %850 = vst [vmem:[#allocation2 + $0xb0] sm:$0xff] %v764
        %851 = vst [vmem:[#allocation2 + $0xb8] sm:$0xff] %v766
        %852 = vst [vmem:[#allocation2 + $0xc0] sm:$0xff] %v770
        %853 = vst [vmem:[#allocation2 + $0xc8] sm:$0xff] %v772
        %854 = vst [vmem:[#allocation2 + $0xd0] sm:$0xff] %v774
        %855 = vst [vmem:[#allocation2 + $0xd8] sm:$0xff] %v776
        %856 = vst [vmem:[#allocation2 + $0xe0] sm:$0xff] %v780
        %857 = vst [vmem:[#allocation2 + $0xe8] sm:$0xff] %v782
        %858 = vst [vmem:[#allocation2 + $0xf0] sm:$0xff] %v784
        %859 = vst [vmem:[#allocation2 + $0xf8] sm:$0xff] %v786
        %860 = vst [vmem:[#allocation2 + $0x100] sm:$0xff] %v790
        %861 = vst [vmem:[#allocation2 + $0x108] sm:$0xff] %v792
        %862 = vst [vmem:[#allocation2 + $0x110] sm:$0xff] %v794
        %863 = vst [vmem:[#allocation2 + $0x118] sm:$0xff] %v796
        %864 = vst [vmem:[#allocation2 + $0x120] sm:$0xff] %v800
        %865 = vst [vmem:[#allocation2 + $0x128] sm:$0xff] %v802
        %866 = vst [vmem:[#allocation2 + $0x130] sm:$0xff] %v804
        %867 = vst [vmem:[#allocation2 + $0x138] sm:$0xff] %v806
        %868 = vst [vmem:[#allocation2 + $0x140] sm:$0xff] %v810
        %869 = vst [vmem:[#allocation2 + $0x148] sm:$0xff] %v812
        %870 = vst [vmem:[#allocation2 + $0x150] sm:$0xff] %v814
        %871 = vst [vmem:[#allocation2 + $0x158] sm:$0xff] %v816
        %872 = vst [vmem:[#allocation2 + $0x160] sm:$0xff] %v820
        %873 = vst [vmem:[#allocation2 + $0x168] sm:$0xff] %v822
        %874 = vst [vmem:[#allocation2 + $0x170] sm:$0xff] %v824
        %875 = vst [vmem:[#allocation2 + $0x178] sm:$0xff] %v826
        loop: start=0, step=1, limit=8
        $region65: #{tpu_custom_call.1} parent=63 // loop_pre_header
          _
        $region66: #{tpu_custom_call.1} parent=63 // loop_header
          %s877 = sphi 0, %s881
          %p878 = scmp.ge.s32.totalorder %s877, 8
        $region67: #{tpu_custom_call.1} parent=63 // loop_header_branch
          %880 = sbr.rel (%p878) target = $region71
        $region68: #{tpu_custom_call.1} parent=63 // loop_body
          %s882 = smul.u32 %s877, 8
          %s883 = sadd.s32 %s882, 64
          %s884 = sadd.s32 %s882, 128
          %s885 = sshra.s32 %s882, 3
          %s886 = sand.u32 %s882, 7
          %s887 = smul.u32 %s885, 2
          %s888 = smul.addr %s887, 8
          %s889 = scalar_lea.vmem [#allocation2], %s888
          %v890 = vld [vmem:[%s889] sm:$0xff]
          %v891 = vpack.c.bf16 %v890, %v890
          %s892 = sshra.s32 %s883, 3
          %s893 = sand.u32 %s883, 7
          %s894 = smul.u32 %s892, 2
          %s895 = smul.addr %s894, 8
          %s896 = scalar_lea.vmem [#allocation2], %s895
          %v897 = vld [vmem:[%s896] sm:$0xff]
          %v898 = vld [vmem:[%s896 + $0x8] sm:$0xff]
          %v899 = vpack.c.bf16 %v897, %v897
          %v900 = vpack.c.bf16 %v898, %v898
          %s901 = sshra.s32 %s884, 3
          %s902 = sand.u32 %s884, 7
          %s903 = smul.u32 %s901, 2
          %s904 = smul.addr %s903, 8
          %s905 = scalar_lea.vmem [#allocation2], %s904
          %v906 = vld [vmem:[%s905] sm:$0xff]
          %v907 = vld [vmem:[%s905 + $0x8] sm:$0xff]
          %v908 = vpack.c.bf16 %v906, %v906
          %v909 = vpack.c.bf16 %v907, %v907
          %910 = vxpose.xlu0.c.b16.start [1/8] %v899, 128
          %911 = vxpose.xlu0.c.b16.cont [2/8] 0, 128
          %912 = vxpose.xlu0.c.b16.cont [3/8] 0, 128
          %913 = vxpose.xlu0.c.b16.cont [4/8] 0, 128
          %914 = vxpose.xlu0.c.b16.cont [5/8] 0, 128
          %915 = vxpose.xlu0.c.b16.cont [6/8] 0, 128
          %916 = vxpose.xlu0.c.b16.cont [7/8] 0, 128
          %917 = vxpose.xlu0.c.b16.end [8/8] 0, 128
          %v918 = vpop.trf.xlu0
          %v919 = vpop.trf.xlu0
          %v920 = vpop.trf.xlu0
          %v921 = vpop.trf.xlu0
          %v922 = vpop.trf.xlu0
          %v923 = vpop.trf.xlu0
          %v924 = vpop.trf.xlu0
          %v925 = vpop.trf.xlu0
          %926 = vxpose.xlu0.c.b16.start [1/8] %v900, 128
          %927 = vxpose.xlu0.c.b16.cont [2/8] 0, 128
          %928 = vxpose.xlu0.c.b16.cont [3/8] 0, 128
          %929 = vxpose.xlu0.c.b16.cont [4/8] 0, 128
          %930 = vxpose.xlu0.c.b16.cont [5/8] 0, 128
          %931 = vxpose.xlu0.c.b16.cont [6/8] 0, 128
          %932 = vxpose.xlu0.c.b16.cont [7/8] 0, 128
          %933 = vxpose.xlu0.c.b16.end [8/8] 0, 128
          %v934 = vpop.trf.xlu0
          %v935 = vpop.trf.xlu0
          %v936 = vpop.trf.xlu0
          %v937 = vpop.trf.xlu0
          %v938 = vpop.trf.xlu0
          %v939 = vpop.trf.xlu0
          %v940 = vpop.trf.xlu0
          %v941 = vpop.trf.xlu0
          %vm942 = vcmask 64512
          %v944 = vsel %vm942, %v918, 0
          %v947 = vsel %vm942, %v919, 0
          %v950 = vsel %vm942, %v920, 0
          %v953 = vsel %vm942, %v921, 0
          %v956 = vsel %vm942, %v922, 0
          %v959 = vsel %vm942, %v923, 0
          %v962 = vsel %vm942, %v924, 0
          %v965 = vsel %vm942, %v925, 0
          %v968 = vsel %vm942, %v934, 0
          %v971 = vsel %vm942, %v935, 0
          %v974 = vsel %vm942, %v936, 0
          %v977 = vsel %vm942, %v937, 0
          %v980 = vsel %vm942, %v938, 0
          %v983 = vsel %vm942, %v939, 0
          %v986 = vsel %vm942, %v940, 0
          %v989 = vsel %vm942, %v941, 0
          %vm991 = vcmask 1043456
          %v993 = vsel %vm991, %v891, 0
          %995 = vmatprep.subr.bf16.mxu0 0
          %996 = vmatpush1.bf16.msra.mxu0 0
          %997 = vmatprep.subr.bf16.mxu0 0
          %998 = vmatpush1.bf16.msra.mxu0 0
          %999 = vmatprep.subr.bf16.mxu0 0
          %1000 = vmatpush1.bf16.msra.mxu0 0
          %1001 = vmatprep.subr.bf16.mxu0 0
          %1002 = vmatpush1.bf16.msra.mxu0 0
          %1003 = vmatprep.subr.bf16.mxu0 0
          %1004 = vmatpush1.bf16.msra.mxu0 0
          %1005 = vmatprep.subr.bf16.mxu0 0
          %1006 = vmatpush1.bf16.msra.mxu0 0
          %1007 = vmatprep.subr.bf16.mxu0 0
          %1008 = vmatpush1.bf16.msra.mxu0 0
          %1009 = vmatprep.subr.bf16.mxu0 0
          %1010 = vmatpush1.bf16.msra.mxu0 %v993
          %1011 = vmatprep.subr.bf16.mxu0 0
          %1012 = vmatpush2.bf16.msra.mxu0 0
          %1013 = vmatprep.subr.bf16.mxu0 0
          %1014 = vmatpush2.bf16.msra.mxu0 0
          %1015 = vmatprep.subr.bf16.mxu0 0
          %1016 = vmatpush2.bf16.msra.mxu0 0
          %1017 = vmatprep.subr.bf16.mxu0 0
          %1018 = vmatpush2.bf16.msra.mxu0 0
          %1019 = vmatprep.subr.bf16.mxu0 0
          %1020 = vmatpush2.bf16.msra.mxu0 0
          %1021 = vmatprep.subr.bf16.mxu0 0
          %1022 = vmatpush2.bf16.msra.mxu0 0
          %1023 = vmatprep.subr.bf16.mxu0 0
          %1024 = vmatpush2.bf16.msra.mxu0 0
          %1025 = vmatprep.subr.bf16.mxu0 0
          %1026 = vmatpush2.bf16.msra.mxu0 0
          %1027 = vmatprep.mubr.bf16.mxu0 0
          %1028 = vmatmul.mubr.bf16.gmra.mxu0 %v944
          %v1029 = vpop.f32.mrf.mxu0
          %v1030 = vadd.f32 0.0, %v1029
          %v1031 = vpop.f32.mrf.mxu0
          %v1032 = vpop.f32.mrf.mxu0
          %v1033 = vadd.f32 0.0, %v1032
          %v1034 = vpop.f32.mrf.mxu0
          %1035 = vmatprep.mubr.bf16.mxu0 0
          %1036 = vmatmul.mubr.bf16.gmra.mxu0 %v947
          %v1037 = vpop.f32.mrf.mxu0
          %v1038 = vadd.f32 0.0, %v1037
          %v1039 = vpop.f32.mrf.mxu0
          %v1040 = vpop.f32.mrf.mxu0
          %v1041 = vadd.f32 0.0, %v1040
          %v1042 = vpop.f32.mrf.mxu0
          %1043 = vmatprep.mubr.bf16.mxu0 0
          %1044 = vmatmul.mubr.bf16.gmra.mxu0 %v950
          %v1045 = vpop.f32.mrf.mxu0
          %v1046 = vadd.f32 0.0, %v1045
          %v1047 = vpop.f32.mrf.mxu0
          %v1048 = vpop.f32.mrf.mxu0
          %v1049 = vadd.f32 0.0, %v1048
          %v1050 = vpop.f32.mrf.mxu0
          %1051 = vmatprep.mubr.bf16.mxu0 0
          %1052 = vmatmul.mubr.bf16.gmra.mxu0 %v953
          %v1053 = vpop.f32.mrf.mxu0
          %v1054 = vadd.f32 0.0, %v1053
          %v1055 = vpop.f32.mrf.mxu0
          %v1056 = vpop.f32.mrf.mxu0
          %v1057 = vadd.f32 0.0, %v1056
          %v1058 = vpop.f32.mrf.mxu0
          %1059 = vmatprep.mubr.bf16.mxu0 0
          %1060 = vmatmul.mubr.bf16.gmra.mxu0 %v956
          %v1061 = vpop.f32.mrf.mxu0
          %v1062 = vadd.f32 0.0, %v1061
          %v1063 = vpop.f32.mrf.mxu0
          %v1064 = vpop.f32.mrf.mxu0
          %v1065 = vadd.f32 0.0, %v1064
          %v1066 = vpop.f32.mrf.mxu0
          %1067 = vmatprep.mubr.bf16.mxu0 0
          %1068 = vmatmul.mubr.bf16.gmra.mxu0 %v959
          %v1069 = vpop.f32.mrf.mxu0
          %v1070 = vadd.f32 0.0, %v1069
          %v1071 = vpop.f32.mrf.mxu0
          %v1072 = vpop.f32.mrf.mxu0
          %v1073 = vadd.f32 0.0, %v1072
          %v1074 = vpop.f32.mrf.mxu0
          %1075 = vmatprep.mubr.bf16.mxu0 0
          %1076 = vmatmul.mubr.bf16.gmra.mxu0 %v962
          %v1077 = vpop.f32.mrf.mxu0
          %v1078 = vadd.f32 0.0, %v1077
          %v1079 = vpop.f32.mrf.mxu0
          %v1080 = vpop.f32.mrf.mxu0
          %v1081 = vadd.f32 0.0, %v1080
          %v1082 = vpop.f32.mrf.mxu0
          %1083 = vmatprep.mubr.bf16.mxu0 0
          %1084 = vmatmul.mubr.bf16.gmra.mxu0 %v965
          %v1085 = vpop.f32.mrf.mxu0
          %v1086 = vadd.f32 0.0, %v1085
          %v1087 = vpop.f32.mrf.mxu0
          %v1088 = vpop.f32.mrf.mxu0
          %v1089 = vadd.f32 0.0, %v1088
          %v1090 = vpop.f32.mrf.mxu0
          %1091 = vmatprep.mubr.bf16.mxu0 0
          %1092 = vmatmul.mubr.bf16.gmra.mxu0 %v968
          %v1093 = vpop.f32.mrf.mxu0
          %v1094 = vadd.f32 0.0, %v1093
          %v1095 = vpop.f32.mrf.mxu0
          %v1096 = vpop.f32.mrf.mxu0
          %v1097 = vadd.f32 0.0, %v1096
          %v1098 = vpop.f32.mrf.mxu0
          %1099 = vmatprep.mubr.bf16.mxu0 0
          %1100 = vmatmul.mubr.bf16.gmra.mxu0 %v971
          %v1101 = vpop.f32.mrf.mxu0
          %v1102 = vadd.f32 0.0, %v1101
          %v1103 = vpop.f32.mrf.mxu0
          %v1104 = vpop.f32.mrf.mxu0
          %v1105 = vadd.f32 0.0, %v1104
          %v1106 = vpop.f32.mrf.mxu0
          %1107 = vmatprep.mubr.bf16.mxu0 0
          %1108 = vmatmul.mubr.bf16.gmra.mxu0 %v974
          %v1109 = vpop.f32.mrf.mxu0
          %v1110 = vadd.f32 0.0, %v1109
          %v1111 = vpop.f32.mrf.mxu0
          %v1112 = vpop.f32.mrf.mxu0
          %v1113 = vadd.f32 0.0, %v1112
          %v1114 = vpop.f32.mrf.mxu0
          %1115 = vmatprep.mubr.bf16.mxu0 0
          %1116 = vmatmul.mubr.bf16.gmra.mxu0 %v977
          %v1117 = vpop.f32.mrf.mxu0
          %v1118 = vadd.f32 0.0, %v1117
          %v1119 = vpop.f32.mrf.mxu0
          %v1120 = vpop.f32.mrf.mxu0
          %v1121 = vadd.f32 0.0, %v1120
          %v1122 = vpop.f32.mrf.mxu0
          %1123 = vmatprep.mubr.bf16.mxu0 0
          %1124 = vmatmul.mubr.bf16.gmra.mxu0 %v980
          %v1125 = vpop.f32.mrf.mxu0
          %v1126 = vadd.f32 0.0, %v1125
          %v1127 = vpop.f32.mrf.mxu0
          %v1128 = vpop.f32.mrf.mxu0
          %v1129 = vadd.f32 0.0, %v1128
          %v1130 = vpop.f32.mrf.mxu0
          %1131 = vmatprep.mubr.bf16.mxu0 0
          %1132 = vmatmul.mubr.bf16.gmra.mxu0 %v983
          %v1133 = vpop.f32.mrf.mxu0
          %v1134 = vadd.f32 0.0, %v1133
          %v1135 = vpop.f32.mrf.mxu0
          %v1136 = vpop.f32.mrf.mxu0
          %v1137 = vadd.f32 0.0, %v1136
          %v1138 = vpop.f32.mrf.mxu0
          %1139 = vmatprep.mubr.bf16.mxu0 0
          %1140 = vmatmul.mubr.bf16.gmra.mxu0 %v986
          %v1141 = vpop.f32.mrf.mxu0
          %v1142 = vadd.f32 0.0, %v1141
          %v1143 = vpop.f32.mrf.mxu0
          %v1144 = vpop.f32.mrf.mxu0
          %v1145 = vadd.f32 0.0, %v1144
          %v1146 = vpop.f32.mrf.mxu0
          %1147 = vmatprep.mubr.bf16.mxu0 0
          %1148 = vmatmul.mubr.bf16.gmra.mxu0 %v989
          %v1149 = vpop.f32.mrf.mxu0
          %v1150 = vadd.f32 0.0, %v1149
          %v1151 = vpop.f32.mrf.mxu0
          %v1152 = vpop.f32.mrf.mxu0
          %v1153 = vadd.f32 0.0, %v1152
          %v1154 = vpop.f32.mrf.mxu0
          %1155 = vdwg.mxu0
          %v1156 = vmax.f32 %v1030, %v1046
          %v1157 = vmax.f32 %v1033, %v1049
          %v1158 = vmax.f32 %v1038, %v1054
          %v1159 = vmax.f32 %v1041, %v1057
          %v1160 = vmax.f32 %v1156, %v1062
          %v1161 = vmax.f32 %v1157, %v1065
          %v1162 = vmax.f32 %v1158, %v1070
          %v1163 = vmax.f32 %v1159, %v1073
          %v1164 = vmax.f32 %v1160, %v1078
          %v1165 = vmax.f32 %v1161, %v1081
          %v1166 = vmax.f32 %v1162, %v1086
          %v1167 = vmax.f32 %v1163, %v1089
          %v1168 = vmax.f32 %v1164, %v1094
          %v1169 = vmax.f32 %v1165, %v1097
          %v1170 = vmax.f32 %v1166, %v1102
          %v1171 = vmax.f32 %v1167, %v1105
          %v1172 = vmax.f32 %v1168, %v1110
          %v1173 = vmax.f32 %v1169, %v1113
          %v1174 = vmax.f32 %v1170, %v1118
          %v1175 = vmax.f32 %v1171, %v1121
          %v1176 = vmax.f32 %v1172, %v1126
          %v1177 = vmax.f32 %v1173, %v1129
          %v1178 = vmax.f32 %v1174, %v1134
          %v1179 = vmax.f32 %v1175, %v1137
          %v1180 = vmax.f32 %v1176, %v1142
          %v1181 = vmax.f32 %v1177, %v1145
          %v1182 = vmax.f32 %v1178, %v1150
          %v1183 = vmax.f32 %v1179, %v1153
          %v1184 = vmax.f32 %v1180, %v1181
          %v1185 = vmax.f32 %v1182, %v1183
          %v1186 = vmax.f32 %v1184, %v1185
          %v1187 = vrot.slane %v1186, 4
          %v1188 = vmax.f32 %v1186, %v1187
          %v1189 = vrot.slane %v1188, 2
          %v1190 = vmax.f32 %v1188, %v1189
          %v1191 = vrot.slane %v1190, 1
          %v1192 = vmax.f32 %v1190, %v1191
          %v1193 = vsub.f32 %v1030, %v1192
          %v1194 = vsub.f32 %v1033, %v1192
          %v1195 = vsub.f32 %v1038, %v1192
          %v1196 = vsub.f32 %v1041, %v1192
          %v1197 = vsub.f32 %v1046, %v1192
          %v1198 = vsub.f32 %v1049, %v1192
          %v1199 = vsub.f32 %v1054, %v1192
          %v1200 = vsub.f32 %v1057, %v1192
          %v1201 = vsub.f32 %v1062, %v1192
          %v1202 = vsub.f32 %v1065, %v1192
          %v1203 = vsub.f32 %v1070, %v1192
          %v1204 = vsub.f32 %v1073, %v1192
          %v1205 = vsub.f32 %v1078, %v1192
          %v1206 = vsub.f32 %v1081, %v1192
          %v1207 = vsub.f32 %v1086, %v1192
          %v1208 = vsub.f32 %v1089, %v1192
          %v1209 = vsub.f32 %v1094, %v1192
          %v1210 = vsub.f32 %v1097, %v1192
          %v1211 = vsub.f32 %v1102, %v1192
          %v1212 = vsub.f32 %v1105, %v1192
          %v1213 = vsub.f32 %v1110, %v1192
          %v1214 = vsub.f32 %v1113, %v1192
          %v1215 = vsub.f32 %v1118, %v1192
          %v1216 = vsub.f32 %v1121, %v1192
          %v1217 = vsub.f32 %v1126, %v1192
          %v1218 = vsub.f32 %v1129, %v1192
          %v1219 = vsub.f32 %v1134, %v1192
          %v1220 = vsub.f32 %v1137, %v1192
          %v1221 = vsub.f32 %v1142, %v1192
          %v1222 = vsub.f32 %v1145, %v1192
          %v1223 = vsub.f32 %v1150, %v1192
          %v1224 = vsub.f32 %v1153, %v1192
          %v1225 = vmul.f32 %v1193, 1.442695
          %v1226 = vpow.pop %v1225
          %v1227 = vmul.f32 %v1194, 1.442695
          %v1228 = vpow.pop %v1227
          %v1229 = vmul.f32 %v1195, 1.442695
          %v1230 = vpow.pop %v1229
          %v1231 = vmul.f32 %v1196, 1.442695
          %v1232 = vpow.pop %v1231
          %v1233 = vmul.f32 %v1197, 1.442695
          %v1234 = vpow.pop %v1233
          %v1235 = vmul.f32 %v1198, 1.442695
          %v1236 = vpow.pop %v1235
          %v1237 = vmul.f32 %v1199, 1.442695
          %v1238 = vpow.pop %v1237
          %v1239 = vmul.f32 %v1200, 1.442695
          %v1240 = vpow.pop %v1239
          %v1241 = vmul.f32 %v1201, 1.442695
          %v1242 = vpow.pop %v1241
          %v1243 = vmul.f32 %v1202, 1.442695
          %v1244 = vpow.pop %v1243
          %v1245 = vmul.f32 %v1203, 1.442695
          %v1246 = vpow.pop %v1245
          %v1247 = vmul.f32 %v1204, 1.442695
          %v1248 = vpow.pop %v1247
          %v1249 = vmul.f32 %v1205, 1.442695
          %v1250 = vpow.pop %v1249
          %v1251 = vmul.f32 %v1206, 1.442695
          %v1252 = vpow.pop %v1251
          %v1253 = vmul.f32 %v1207, 1.442695
          %v1254 = vpow.pop %v1253
          %v1255 = vmul.f32 %v1208, 1.442695
          %v1256 = vpow.pop %v1255
          %v1257 = vmul.f32 %v1209, 1.442695
          %v1258 = vpow.pop %v1257
          %v1259 = vmul.f32 %v1210, 1.442695
          %v1260 = vpow.pop %v1259
          %v1261 = vmul.f32 %v1211, 1.442695
          %v1262 = vpow.pop %v1261
          %v1263 = vmul.f32 %v1212, 1.442695
          %v1264 = vpow.pop %v1263
          %v1265 = vmul.f32 %v1213, 1.442695
          %v1266 = vpow.pop %v1265
          %v1267 = vmul.f32 %v1214, 1.442695
          %v1268 = vpow.pop %v1267
          %v1269 = vmul.f32 %v1215, 1.442695
          %v1270 = vpow.pop %v1269
          %v1271 = vmul.f32 %v1216, 1.442695
          %v1272 = vpow.pop %v1271
          %v1273 = vmul.f32 %v1217, 1.442695
          %v1274 = vpow.pop %v1273
          %v1275 = vmul.f32 %v1218, 1.442695
          %v1276 = vpow.pop %v1275
          %v1277 = vmul.f32 %v1219, 1.442695
          %v1278 = vpow.pop %v1277
          %v1279 = vmul.f32 %v1220, 1.442695
          %v1280 = vpow.pop %v1279
          %v1281 = vmul.f32 %v1221, 1.442695
          %v1282 = vpow.pop %v1281
          %v1283 = vmul.f32 %v1222, 1.442695
          %v1284 = vpow.pop %v1283
          %v1285 = vmul.f32 %v1223, 1.442695
          %v1286 = vpow.pop %v1285
          %v1287 = vmul.f32 %v1224, 1.442695
          %v1288 = vpow.pop %v1287
          %v1289 = vadd.f32 %v1226, %v1228
          %v1290 = vadd.f32 %v1289, %v1230
          %v1291 = vadd.f32 %v1290, %v1232
          %v1292 = vadd.f32 %v1291, %v1234
          %v1293 = vadd.f32 %v1292, %v1236
          %v1294 = vadd.f32 %v1293, %v1238
          %v1295 = vadd.f32 %v1294, %v1240
          %v1296 = vadd.f32 %v1295, %v1242
          %v1297 = vadd.f32 %v1296, %v1244
          %v1298 = vadd.f32 %v1297, %v1246
          %v1299 = vadd.f32 %v1298, %v1248
          %v1300 = vadd.f32 %v1299, %v1250
          %v1301 = vadd.f32 %v1300, %v1252
          %v1302 = vadd.f32 %v1301, %v1254
          %v1303 = vadd.f32 %v1302, %v1256
          %v1304 = vadd.f32 %v1303, %v1258
          %v1305 = vadd.f32 %v1304, %v1260
          %v1306 = vadd.f32 %v1305, %v1262
          %v1307 = vadd.f32 %v1306, %v1264
          %v1308 = vadd.f32 %v1307, %v1266
          %v1309 = vadd.f32 %v1308, %v1268
          %v1310 = vadd.f32 %v1309, %v1270
          %v1311 = vadd.f32 %v1310, %v1272
          %v1312 = vadd.f32 %v1311, %v1274
          %v1313 = vadd.f32 %v1312, %v1276
          %v1314 = vadd.f32 %v1313, %v1278
          %v1315 = vadd.f32 %v1314, %v1280
          %v1316 = vadd.f32 %v1315, %v1282
          %v1317 = vadd.f32 %v1316, %v1284
          %v1318 = vadd.f32 %v1317, %v1286
          %v1319 = vadd.f32 %v1318, %v1288
          %v1320 = vrot.slane %v1319, 4
          %v1321 = vadd.f32 %v1319, %v1320
          %v1322 = vrot.slane %v1321, 2
          %v1323 = vadd.f32 %v1321, %v1322
          %v1324 = vrot.slane %v1323, 1
          %v1325 = vadd.f32 %v1323, %v1324
          %v1326 = vrcp.pop %v1325
          %v1327 = vpack.c.bf16 %v1228, %v1226
          %v1328 = vpack.c.bf16 %v1232, %v1230
          %v1329 = vpack.c.bf16 %v1236, %v1234
          %v1330 = vpack.c.bf16 %v1240, %v1238
          %v1331 = vpack.c.bf16 %v1244, %v1242
          %v1332 = vpack.c.bf16 %v1248, %v1246
          %v1333 = vpack.c.bf16 %v1252, %v1250
          %v1334 = vpack.c.bf16 %v1256, %v1254
          %v1335 = vpack.c.bf16 %v1260, %v1258
          %v1336 = vpack.c.bf16 %v1264, %v1262
          %v1337 = vpack.c.bf16 %v1268, %v1266
          %v1338 = vpack.c.bf16 %v1272, %v1270
          %v1339 = vpack.c.bf16 %v1276, %v1274
          %v1340 = vpack.c.bf16 %v1280, %v1278
          %v1341 = vpack.c.bf16 %v1284, %v1282
          %v1342 = vpack.c.bf16 %v1288, %v1286
          %1343 = vmatprep.subr.bf16.mxu0 0
          %1344 = vmatpush1.bf16.msra.mxu0 %v1334
          %1345 = vmatprep.subr.bf16.mxu0 0
          %1346 = vmatpush1.bf16.msra.mxu0 %v1333
          %1347 = vmatprep.subr.bf16.mxu0 0
          %1348 = vmatpush1.bf16.msra.mxu0 %v1332
          %1349 = vmatprep.subr.bf16.mxu0 0
          %1350 = vmatpush1.bf16.msra.mxu0 %v1331
          %1351 = vmatprep.subr.bf16.mxu0 0
          %1352 = vmatpush1.bf16.msra.mxu0 %v1330
          %1353 = vmatprep.subr.bf16.mxu0 0
          %1354 = vmatpush1.bf16.msra.mxu0 %v1329
          %1355 = vmatprep.subr.bf16.mxu0 0
          %1356 = vmatpush1.bf16.msra.mxu0 %v1328
          %1357 = vmatprep.subr.bf16.mxu0 0
          %1358 = vmatpush1.bf16.msra.mxu0 %v1327
          %1359 = vmatprep.subr.bf16.mxu0 0
          %1360 = vmatpush2.bf16.msra.mxu0 %v1342
          %1361 = vmatprep.subr.bf16.mxu0 0
          %1362 = vmatpush2.bf16.msra.mxu0 %v1341
          %1363 = vmatprep.subr.bf16.mxu0 0
          %1364 = vmatpush2.bf16.msra.mxu0 %v1340
          %1365 = vmatprep.subr.bf16.mxu0 0
          %1366 = vmatpush2.bf16.msra.mxu0 %v1339
          %1367 = vmatprep.subr.bf16.mxu0 0
          %1368 = vmatpush2.bf16.msra.mxu0 %v1338
          %1369 = vmatprep.subr.bf16.mxu0 0
          %1370 = vmatpush2.bf16.msra.mxu0 %v1337
          %1371 = vmatprep.subr.bf16.mxu0 0
          %1372 = vmatpush2.bf16.msra.mxu0 %v1336
          %1373 = vmatprep.subr.bf16.mxu0 0
          %1374 = vmatpush2.bf16.msra.mxu0 %v1335
          %1375 = vmatprep.mubr.bf16.mxu0 %v909
          %1376 = vmatmul.mubr.bf16.gmra.mxu0 %v908
          %v1377 = vpop.f32.mrf.mxu0
          %v1378 = vadd.f32 0.0, %v1377
          %v1379 = vpop.f32.mrf.mxu0
          %v1380 = vpop.f32.mrf.mxu0
          %v1381 = vpop.f32.mrf.mxu0
          %1382 = vdwg.mxu0
          %v1383 = vmul.f32 %v1378, %v1326
          %s1384 = smul.addr %s887, 8
          %s1385 = scalar_lea.vmem [#allocation3], %s1384
          %1386 = vst [vmem:[%s1385] sm:$0xff] %v1383
        $region69: #{tpu_custom_call.1} parent=63 // loop_footer
          %s881 = sadd.s32 1, %s877
        $region70: #{tpu_custom_call.1} parent=63 // loop_footer_branch
          %876 = sbr.rel target = $region66
        $region71: #{tpu_custom_call.1} parent=63 // loop_exit
          _
        loop: start=0, step=1, limit=8
        $region72: #{tpu_custom_call.1} parent=63 // loop_pre_header
          _
        $region73: #{tpu_custom_call.1} parent=63 // loop_header
          %s1388 = sphi 0, %s1392
          %p1389 = scmp.ge.s32.totalorder %s1388, 8
        $region74: #{tpu_custom_call.1} parent=63 // loop_header_branch
          %1391 = sbr.rel (%p1389) target = $region78
        $region75: #{tpu_custom_call.1} parent=63 // loop_body
          %s1393 = smul.u32 %s1388, 8
          %s1394 = sadd.s32 %s1393, 64
          %s1395 = sadd.s32 %s1393, 128
          %s1396 = sshra.s32 %s1393, 3
          %s1397 = sand.u32 %s1393, 7
          %s1398 = smul.u32 %s1396, 2
          %s1399 = smul.addr %s1398, 8
          %s1400 = scalar_lea.vmem [#allocation2], %s1399
          %v1401 = vld [vmem:[%s1400 + $0x8] sm:$0xff]
          %v1402 = vpack.c.bf16 %v1401, %v1401
          %s1403 = sshra.s32 %s1394, 3
          %s1404 = sand.u32 %s1394, 7
          %s1405 = smul.u32 %s1403, 2
          %s1406 = smul.addr %s1405, 8
          %s1407 = scalar_lea.vmem [#allocation2], %s1406
          %v1408 = vld [vmem:[%s1407] sm:$0xff]
          %v1409 = vld [vmem:[%s1407 + $0x8] sm:$0xff]
          %v1410 = vpack.c.bf16 %v1408, %v1408
          %v1411 = vpack.c.bf16 %v1409, %v1409
          %s1412 = sshra.s32 %s1395, 3
          %s1413 = sand.u32 %s1395, 7
          %s1414 = smul.u32 %s1412, 2
          %s1415 = smul.addr %s1414, 8
          %s1416 = scalar_lea.vmem [#allocation2], %s1415
          %v1417 = vld [vmem:[%s1416] sm:$0xff]
          %v1418 = vld [vmem:[%s1416 + $0x8] sm:$0xff]
          %v1419 = vpack.c.bf16 %v1417, %v1417
          %v1420 = vpack.c.bf16 %v1418, %v1418
          %1421 = vxpose.xlu0.c.b16.start [1/8] %v1410, 128
          %1422 = vxpose.xlu0.c.b16.cont [2/8] 0, 128
          %1423 = vxpose.xlu0.c.b16.cont [3/8] 0, 128
          %1424 = vxpose.xlu0.c.b16.cont [4/8] 0, 128
          %1425 = vxpose.xlu0.c.b16.cont [5/8] 0, 128
          %1426 = vxpose.xlu0.c.b16.cont [6/8] 0, 128
          %1427 = vxpose.xlu0.c.b16.cont [7/8] 0, 128
          %1428 = vxpose.xlu0.c.b16.end [8/8] 0, 128
          %v1429 = vpop.trf.xlu0
          %v1430 = vpop.trf.xlu0
          %v1431 = vpop.trf.xlu0
          %v1432 = vpop.trf.xlu0
          %v1433 = vpop.trf.xlu0
          %v1434 = vpop.trf.xlu0
          %v1435 = vpop.trf.xlu0
          %v1436 = vpop.trf.xlu0
          %1437 = vxpose.xlu0.c.b16.start [1/8] %v1411, 128
          %1438 = vxpose.xlu0.c.b16.cont [2/8] 0, 128
          %1439 = vxpose.xlu0.c.b16.cont [3/8] 0, 128
          %1440 = vxpose.xlu0.c.b16.cont [4/8] 0, 128
          %1441 = vxpose.xlu0.c.b16.cont [5/8] 0, 128
          %1442 = vxpose.xlu0.c.b16.cont [6/8] 0, 128
          %1443 = vxpose.xlu0.c.b16.cont [7/8] 0, 128
          %1444 = vxpose.xlu0.c.b16.end [8/8] 0, 128
          %v1445 = vpop.trf.xlu0
          %v1446 = vpop.trf.xlu0
          %v1447 = vpop.trf.xlu0
          %v1448 = vpop.trf.xlu0
          %v1449 = vpop.trf.xlu0
          %v1450 = vpop.trf.xlu0
          %v1451 = vpop.trf.xlu0
          %v1452 = vpop.trf.xlu0
          %vm1453 = vcmask 64512
          %v1455 = vsel %vm1453, %v1429, 0
          %v1458 = vsel %vm1453, %v1430, 0
          %v1461 = vsel %vm1453, %v1431, 0
          %v1464 = vsel %vm1453, %v1432, 0
          %v1467 = vsel %vm1453, %v1433, 0
          %v1470 = vsel %vm1453, %v1434, 0
          %v1473 = vsel %vm1453, %v1435, 0
          %v1476 = vsel %vm1453, %v1436, 0
          %v1479 = vsel %vm1453, %v1445, 0
          %v1482 = vsel %vm1453, %v1446, 0
          %v1485 = vsel %vm1453, %v1447, 0
          %v1488 = vsel %vm1453, %v1448, 0
          %v1491 = vsel %vm1453, %v1449, 0
          %v1494 = vsel %vm1453, %v1450, 0
          %v1497 = vsel %vm1453, %v1451, 0
          %v1500 = vsel %vm1453, %v1452, 0
          %vm1502 = vcmask 1043456
          %v1504 = vsel %vm1502, %v1402, 0
          %1506 = vmatprep.subr.bf16.mxu0 0
          %1507 = vmatpush1.bf16.msra.mxu0 0
          %1508 = vmatprep.subr.bf16.mxu0 0
          %1509 = vmatpush1.bf16.msra.mxu0 0
          %1510 = vmatprep.subr.bf16.mxu0 0
          %1511 = vmatpush1.bf16.msra.mxu0 0
          %1512 = vmatprep.subr.bf16.mxu0 0
          %1513 = vmatpush1.bf16.msra.mxu0 0
          %1514 = vmatprep.subr.bf16.mxu0 0
          %1515 = vmatpush1.bf16.msra.mxu0 0
          %1516 = vmatprep.subr.bf16.mxu0 0
          %1517 = vmatpush1.bf16.msra.mxu0 0
          %1518 = vmatprep.subr.bf16.mxu0 0
          %1519 = vmatpush1.bf16.msra.mxu0 0
          %1520 = vmatprep.subr.bf16.mxu0 0
          %1521 = vmatpush1.bf16.msra.mxu0 %v1504
          %1522 = vmatprep.subr.bf16.mxu0 0
          %1523 = vmatpush2.bf16.msra.mxu0 0
          %1524 = vmatprep.subr.bf16.mxu0 0
          %1525 = vmatpush2.bf16.msra.mxu0 0
          %1526 = vmatprep.subr.bf16.mxu0 0
          %1527 = vmatpush2.bf16.msra.mxu0 0
          %1528 = vmatprep.subr.bf16.mxu0 0
          %1529 = vmatpush2.bf16.msra.mxu0 0
          %1530 = vmatprep.subr.bf16.mxu0 0
          %1531 = vmatpush2.bf16.msra.mxu0 0
          %1532 = vmatprep.subr.bf16.mxu0 0
          %1533 = vmatpush2.bf16.msra.mxu0 0
          %1534 = vmatprep.subr.bf16.mxu0 0
          %1535 = vmatpush2.bf16.msra.mxu0 0
          %1536 = vmatprep.subr.bf16.mxu0 0
          %1537 = vmatpush2.bf16.msra.mxu0 0
          %1538 = vmatprep.mubr.bf16.mxu0 0
          %1539 = vmatmul.mubr.bf16.gmra.mxu0 %v1455
          %v1540 = vpop.f32.mrf.mxu0
          %v1541 = vadd.f32 0.0, %v1540
          %v1542 = vpop.f32.mrf.mxu0
          %v1543 = vpop.f32.mrf.mxu0
          %v1544 = vadd.f32 0.0, %v1543
          %v1545 = vpop.f32.mrf.mxu0
          %1546 = vmatprep.mubr.bf16.mxu0 0
          %1547 = vmatmul.mubr.bf16.gmra.mxu0 %v1458
          %v1548 = vpop.f32.mrf.mxu0
          %v1549 = vadd.f32 0.0, %v1548
          %v1550 = vpop.f32.mrf.mxu0
          %v1551 = vpop.f32.mrf.mxu0
          %v1552 = vadd.f32 0.0, %v1551
          %v1553 = vpop.f32.mrf.mxu0
          %1554 = vmatprep.mubr.bf16.mxu0 0
          %1555 = vmatmul.mubr.bf16.gmra.mxu0 %v1461
          %v1556 = vpop.f32.mrf.mxu0
          %v1557 = vadd.f32 0.0, %v1556
          %v1558 = vpop.f32.mrf.mxu0
          %v1559 = vpop.f32.mrf.mxu0
          %v1560 = vadd.f32 0.0, %v1559
          %v1561 = vpop.f32.mrf.mxu0
          %1562 = vmatprep.mubr.bf16.mxu0 0
          %1563 = vmatmul.mubr.bf16.gmra.mxu0 %v1464
          %v1564 = vpop.f32.mrf.mxu0
          %v1565 = vadd.f32 0.0, %v1564
          %v1566 = vpop.f32.mrf.mxu0
          %v1567 = vpop.f32.mrf.mxu0
          %v1568 = vadd.f32 0.0, %v1567
          %v1569 = vpop.f32.mrf.mxu0
          %1570 = vmatprep.mubr.bf16.mxu0 0
          %1571 = vmatmul.mubr.bf16.gmra.mxu0 %v1467
          %v1572 = vpop.f32.mrf.mxu0
          %v1573 = vadd.f32 0.0, %v1572
          %v1574 = vpop.f32.mrf.mxu0
          %v1575 = vpop.f32.mrf.mxu0
          %v1576 = vadd.f32 0.0, %v1575
          %v1577 = vpop.f32.mrf.mxu0
          %1578 = vmatprep.mubr.bf16.mxu0 0
          %1579 = vmatmul.mubr.bf16.gmra.mxu0 %v1470
          %v1580 = vpop.f32.mrf.mxu0
          %v1581 = vadd.f32 0.0, %v1580
          %v1582 = vpop.f32.mrf.mxu0
          %v1583 = vpop.f32.mrf.mxu0
          %v1584 = vadd.f32 0.0, %v1583
          %v1585 = vpop.f32.mrf.mxu0
          %1586 = vmatprep.mubr.bf16.mxu0 0
          %1587 = vmatmul.mubr.bf16.gmra.mxu0 %v1473
          %v1588 = vpop.f32.mrf.mxu0
          %v1589 = vadd.f32 0.0, %v1588
          %v1590 = vpop.f32.mrf.mxu0
          %v1591 = vpop.f32.mrf.mxu0
          %v1592 = vadd.f32 0.0, %v1591
          %v1593 = vpop.f32.mrf.mxu0
          %1594 = vmatprep.mubr.bf16.mxu0 0
          %1595 = vmatmul.mubr.bf16.gmra.mxu0 %v1476
          %v1596 = vpop.f32.mrf.mxu0
          %v1597 = vadd.f32 0.0, %v1596
          %v1598 = vpop.f32.mrf.mxu0
          %v1599 = vpop.f32.mrf.mxu0
          %v1600 = vadd.f32 0.0, %v1599
          %v1601 = vpop.f32.mrf.mxu0
          %1602 = vmatprep.mubr.bf16.mxu0 0
          %1603 = vmatmul.mubr.bf16.gmra.mxu0 %v1479
          %v1604 = vpop.f32.mrf.mxu0
          %v1605 = vadd.f32 0.0, %v1604
          %v1606 = vpop.f32.mrf.mxu0
          %v1607 = vpop.f32.mrf.mxu0
          %v1608 = vadd.f32 0.0, %v1607
          %v1609 = vpop.f32.mrf.mxu0
          %1610 = vmatprep.mubr.bf16.mxu0 0
          %1611 = vmatmul.mubr.bf16.gmra.mxu0 %v1482
          %v1612 = vpop.f32.mrf.mxu0
          %v1613 = vadd.f32 0.0, %v1612
          %v1614 = vpop.f32.mrf.mxu0
          %v1615 = vpop.f32.mrf.mxu0
          %v1616 = vadd.f32 0.0, %v1615
          %v1617 = vpop.f32.mrf.mxu0
          %1618 = vmatprep.mubr.bf16.mxu0 0
          %1619 = vmatmul.mubr.bf16.gmra.mxu0 %v1485
          %v1620 = vpop.f32.mrf.mxu0
          %v1621 = vadd.f32 0.0, %v1620
          %v1622 = vpop.f32.mrf.mxu0
          %v1623 = vpop.f32.mrf.mxu0
          %v1624 = vadd.f32 0.0, %v1623
          %v1625 = vpop.f32.mrf.mxu0
          %1626 = vmatprep.mubr.bf16.mxu0 0
          %1627 = vmatmul.mubr.bf16.gmra.mxu0 %v1488
          %v1628 = vpop.f32.mrf.mxu0
          %v1629 = vadd.f32 0.0, %v1628
          %v1630 = vpop.f32.mrf.mxu0
          %v1631 = vpop.f32.mrf.mxu0
          %v1632 = vadd.f32 0.0, %v1631
          %v1633 = vpop.f32.mrf.mxu0
          %1634 = vmatprep.mubr.bf16.mxu0 0
          %1635 = vmatmul.mubr.bf16.gmra.mxu0 %v1491
          %v1636 = vpop.f32.mrf.mxu0
          %v1637 = vadd.f32 0.0, %v1636
          %v1638 = vpop.f32.mrf.mxu0
          %v1639 = vpop.f32.mrf.mxu0
          %v1640 = vadd.f32 0.0, %v1639
          %v1641 = vpop.f32.mrf.mxu0
          %1642 = vmatprep.mubr.bf16.mxu0 0
          %1643 = vmatmul.mubr.bf16.gmra.mxu0 %v1494
          %v1644 = vpop.f32.mrf.mxu0
          %v1645 = vadd.f32 0.0, %v1644
          %v1646 = vpop.f32.mrf.mxu0
          %v1647 = vpop.f32.mrf.mxu0
          %v1648 = vadd.f32 0.0, %v1647
          %v1649 = vpop.f32.mrf.mxu0
          %1650 = vmatprep.mubr.bf16.mxu0 0
          %1651 = vmatmul.mubr.bf16.gmra.mxu0 %v1497
          %v1652 = vpop.f32.mrf.mxu0
          %v1653 = vadd.f32 0.0, %v1652
          %v1654 = vpop.f32.mrf.mxu0
          %v1655 = vpop.f32.mrf.mxu0
          %v1656 = vadd.f32 0.0, %v1655
          %v1657 = vpop.f32.mrf.mxu0
          %1658 = vmatprep.mubr.bf16.mxu0 0
          %1659 = vmatmul.mubr.bf16.gmra.mxu0 %v1500
          %v1660 = vpop.f32.mrf.mxu0
          %v1661 = vadd.f32 0.0, %v1660
          %v1662 = vpop.f32.mrf.mxu0
          %v1663 = vpop.f32.mrf.mxu0
          %v1664 = vadd.f32 0.0, %v1663
          %v1665 = vpop.f32.mrf.mxu0
          %1666 = vdwg.mxu0
          %v1667 = vmax.f32 %v1541, %v1557
          %v1668 = vmax.f32 %v1544, %v1560
          %v1669 = vmax.f32 %v1549, %v1565
          %v1670 = vmax.f32 %v1552, %v1568
          %v1671 = vmax.f32 %v1667, %v1573
          %v1672 = vmax.f32 %v1668, %v1576
          %v1673 = vmax.f32 %v1669, %v1581
          %v1674 = vmax.f32 %v1670, %v1584
          %v1675 = vmax.f32 %v1671, %v1589
          %v1676 = vmax.f32 %v1672, %v1592
          %v1677 = vmax.f32 %v1673, %v1597
          %v1678 = vmax.f32 %v1674, %v1600
          %v1679 = vmax.f32 %v1675, %v1605
          %v1680 = vmax.f32 %v1676, %v1608
          %v1681 = vmax.f32 %v1677, %v1613
          %v1682 = vmax.f32 %v1678, %v1616
          %v1683 = vmax.f32 %v1679, %v1621
          %v1684 = vmax.f32 %v1680, %v1624
          %v1685 = vmax.f32 %v1681, %v1629
          %v1686 = vmax.f32 %v1682, %v1632
          %v1687 = vmax.f32 %v1683, %v1637
          %v1688 = vmax.f32 %v1684, %v1640
          %v1689 = vmax.f32 %v1685, %v1645
          %v1690 = vmax.f32 %v1686, %v1648
          %v1691 = vmax.f32 %v1687, %v1653
          %v1692 = vmax.f32 %v1688, %v1656
          %v1693 = vmax.f32 %v1689, %v1661
          %v1694 = vmax.f32 %v1690, %v1664
          %v1695 = vmax.f32 %v1691, %v1692
          %v1696 = vmax.f32 %v1693, %v1694
          %v1697 = vmax.f32 %v1695, %v1696
          %v1698 = vrot.slane %v1697, 4
          %v1699 = vmax.f32 %v1697, %v1698
          %v1700 = vrot.slane %v1699, 2
          %v1701 = vmax.f32 %v1699, %v1700
          %v1702 = vrot.slane %v1701, 1
          %v1703 = vmax.f32 %v1701, %v1702
          %v1704 = vsub.f32 %v1541, %v1703
          %v1705 = vsub.f32 %v1544, %v1703
          %v1706 = vsub.f32 %v1549, %v1703
          %v1707 = vsub.f32 %v1552, %v1703
          %v1708 = vsub.f32 %v1557, %v1703
          %v1709 = vsub.f32 %v1560, %v1703
          %v1710 = vsub.f32 %v1565, %v1703
          %v1711 = vsub.f32 %v1568, %v1703
          %v1712 = vsub.f32 %v1573, %v1703
          %v1713 = vsub.f32 %v1576, %v1703
          %v1714 = vsub.f32 %v1581, %v1703
          %v1715 = vsub.f32 %v1584, %v1703
          %v1716 = vsub.f32 %v1589, %v1703
          %v1717 = vsub.f32 %v1592, %v1703
          %v1718 = vsub.f32 %v1597, %v1703
          %v1719 = vsub.f32 %v1600, %v1703
          %v1720 = vsub.f32 %v1605, %v1703
          %v1721 = vsub.f32 %v1608, %v1703
          %v1722 = vsub.f32 %v1613, %v1703
          %v1723 = vsub.f32 %v1616, %v1703
          %v1724 = vsub.f32 %v1621, %v1703
          %v1725 = vsub.f32 %v1624, %v1703
          %v1726 = vsub.f32 %v1629, %v1703
          %v1727 = vsub.f32 %v1632, %v1703
          %v1728 = vsub.f32 %v1637, %v1703
          %v1729 = vsub.f32 %v1640, %v1703
          %v1730 = vsub.f32 %v1645, %v1703
          %v1731 = vsub.f32 %v1648, %v1703
          %v1732 = vsub.f32 %v1653, %v1703
          %v1733 = vsub.f32 %v1656, %v1703
          %v1734 = vsub.f32 %v1661, %v1703
          %v1735 = vsub.f32 %v1664, %v1703
          %v1736 = vmul.f32 %v1704, 1.442695
          %v1737 = vpow.pop %v1736
          %v1738 = vmul.f32 %v1705, 1.442695
          %v1739 = vpow.pop %v1738
          %v1740 = vmul.f32 %v1706, 1.442695
          %v1741 = vpow.pop %v1740
          %v1742 = vmul.f32 %v1707, 1.442695
          %v1743 = vpow.pop %v1742
          %v1744 = vmul.f32 %v1708, 1.442695
          %v1745 = vpow.pop %v1744
          %v1746 = vmul.f32 %v1709, 1.442695
          %v1747 = vpow.pop %v1746
          %v1748 = vmul.f32 %v1710, 1.442695
          %v1749 = vpow.pop %v1748
          %v1750 = vmul.f32 %v1711, 1.442695
          %v1751 = vpow.pop %v1750
          %v1752 = vmul.f32 %v1712, 1.442695
          %v1753 = vpow.pop %v1752
          %v1754 = vmul.f32 %v1713, 1.442695
          %v1755 = vpow.pop %v1754
          %v1756 = vmul.f32 %v1714, 1.442695
          %v1757 = vpow.pop %v1756
          %v1758 = vmul.f32 %v1715, 1.442695
          %v1759 = vpow.pop %v1758
          %v1760 = vmul.f32 %v1716, 1.442695
          %v1761 = vpow.pop %v1760
          %v1762 = vmul.f32 %v1717, 1.442695
          %v1763 = vpow.pop %v1762
          %v1764 = vmul.f32 %v1718, 1.442695
          %v1765 = vpow.pop %v1764
          %v1766 = vmul.f32 %v1719, 1.442695
          %v1767 = vpow.pop %v1766
          %v1768 = vmul.f32 %v1720, 1.442695
          %v1769 = vpow.pop %v1768
          %v1770 = vmul.f32 %v1721, 1.442695
          %v1771 = vpow.pop %v1770
          %v1772 = vmul.f32 %v1722, 1.442695
          %v1773 = vpow.pop %v1772
          %v1774 = vmul.f32 %v1723, 1.442695
          %v1775 = vpow.pop %v1774
          %v1776 = vmul.f32 %v1724, 1.442695
          %v1777 = vpow.pop %v1776
          %v1778 = vmul.f32 %v1725, 1.442695
          %v1779 = vpow.pop %v1778
          %v1780 = vmul.f32 %v1726, 1.442695
          %v1781 = vpow.pop %v1780
          %v1782 = vmul.f32 %v1727, 1.442695
          %v1783 = vpow.pop %v1782
          %v1784 = vmul.f32 %v1728, 1.442695
          %v1785 = vpow.pop %v1784
          %v1786 = vmul.f32 %v1729, 1.442695
          %v1787 = vpow.pop %v1786
          %v1788 = vmul.f32 %v1730, 1.442695
          %v1789 = vpow.pop %v1788
          %v1790 = vmul.f32 %v1731, 1.442695
          %v1791 = vpow.pop %v1790
          %v1792 = vmul.f32 %v1732, 1.442695
          %v1793 = vpow.pop %v1792
          %v1794 = vmul.f32 %v1733, 1.442695
          %v1795 = vpow.pop %v1794
          %v1796 = vmul.f32 %v1734, 1.442695
          %v1797 = vpow.pop %v1796
          %v1798 = vmul.f32 %v1735, 1.442695
          %v1799 = vpow.pop %v1798
          %v1800 = vadd.f32 %v1737, %v1739
          %v1801 = vadd.f32 %v1800, %v1741
          %v1802 = vadd.f32 %v1801, %v1743
          %v1803 = vadd.f32 %v1802, %v1745
          %v1804 = vadd.f32 %v1803, %v1747
          %v1805 = vadd.f32 %v1804, %v1749
          %v1806 = vadd.f32 %v1805, %v1751
          %v1807 = vadd.f32 %v1806, %v1753
          %v1808 = vadd.f32 %v1807, %v1755
          %v1809 = vadd.f32 %v1808, %v1757
          %v1810 = vadd.f32 %v1809, %v1759
          %v1811 = vadd.f32 %v1810, %v1761
          %v1812 = vadd.f32 %v1811, %v1763
          %v1813 = vadd.f32 %v1812, %v1765
          %v1814 = vadd.f32 %v1813, %v1767
          %v1815 = vadd.f32 %v1814, %v1769
          %v1816 = vadd.f32 %v1815, %v1771
          %v1817 = vadd.f32 %v1816, %v1773
          %v1818 = vadd.f32 %v1817, %v1775
          %v1819 = vadd.f32 %v1818, %v1777
          %v1820 = vadd.f32 %v1819, %v1779
          %v1821 = vadd.f32 %v1820, %v1781
          %v1822 = vadd.f32 %v1821, %v1783
          %v1823 = vadd.f32 %v1822, %v1785
          %v1824 = vadd.f32 %v1823, %v1787
          %v1825 = vadd.f32 %v1824, %v1789
          %v1826 = vadd.f32 %v1825, %v1791
          %v1827 = vadd.f32 %v1826, %v1793
          %v1828 = vadd.f32 %v1827, %v1795
          %v1829 = vadd.f32 %v1828, %v1797
          %v1830 = vadd.f32 %v1829, %v1799
          %v1831 = vrot.slane %v1830, 4
          %v1832 = vadd.f32 %v1830, %v1831
          %v1833 = vrot.slane %v1832, 2
          %v1834 = vadd.f32 %v1832, %v1833
          %v1835 = vrot.slane %v1834, 1
          %v1836 = vadd.f32 %v1834, %v1835
          %v1837 = vrcp.pop %v1836
          %v1838 = vpack.c.bf16 %v1739, %v1737
          %v1839 = vpack.c.bf16 %v1743, %v1741
          %v1840 = vpack.c.bf16 %v1747, %v1745
          %v1841 = vpack.c.bf16 %v1751, %v1749
          %v1842 = vpack.c.bf16 %v1755, %v1753
          %v1843 = vpack.c.bf16 %v1759, %v1757
          %v1844 = vpack.c.bf16 %v1763, %v1761
          %v1845 = vpack.c.bf16 %v1767, %v1765
          %v1846 = vpack.c.bf16 %v1771, %v1769
          %v1847 = vpack.c.bf16 %v1775, %v1773
          %v1848 = vpack.c.bf16 %v1779, %v1777
          %v1849 = vpack.c.bf16 %v1783, %v1781
          %v1850 = vpack.c.bf16 %v1787, %v1785
          %v1851 = vpack.c.bf16 %v1791, %v1789
          %v1852 = vpack.c.bf16 %v1795, %v1793
          %v1853 = vpack.c.bf16 %v1799, %v1797
          %1854 = vmatprep.subr.bf16.mxu0 0
          %1855 = vmatpush1.bf16.msra.mxu0 %v1845
          %1856 = vmatprep.subr.bf16.mxu0 0
          %1857 = vmatpush1.bf16.msra.mxu0 %v1844
          %1858 = vmatprep.subr.bf16.mxu0 0
          %1859 = vmatpush1.bf16.msra.mxu0 %v1843
          %1860 = vmatprep.subr.bf16.mxu0 0
          %1861 = vmatpush1.bf16.msra.mxu0 %v1842
          %1862 = vmatprep.subr.bf16.mxu0 0
          %1863 = vmatpush1.bf16.msra.mxu0 %v1841
          %1864 = vmatprep.subr.bf16.mxu0 0
          %1865 = vmatpush1.bf16.msra.mxu0 %v1840
          %1866 = vmatprep.subr.bf16.mxu0 0
          %1867 = vmatpush1.bf16.msra.mxu0 %v1839
          %1868 = vmatprep.subr.bf16.mxu0 0
          %1869 = vmatpush1.bf16.msra.mxu0 %v1838
          %1870 = vmatprep.subr.bf16.mxu0 0
          %1871 = vmatpush2.bf16.msra.mxu0 %v1853
          %1872 = vmatprep.subr.bf16.mxu0 0
          %1873 = vmatpush2.bf16.msra.mxu0 %v1852
          %1874 = vmatprep.subr.bf16.mxu0 0
          %1875 = vmatpush2.bf16.msra.mxu0 %v1851
          %1876 = vmatprep.subr.bf16.mxu0 0
          %1877 = vmatpush2.bf16.msra.mxu0 %v1850
          %1878 = vmatprep.subr.bf16.mxu0 0
          %1879 = vmatpush2.bf16.msra.mxu0 %v1849
          %1880 = vmatprep.subr.bf16.mxu0 0
          %1881 = vmatpush2.bf16.msra.mxu0 %v1848
          %1882 = vmatprep.subr.bf16.mxu0 0
          %1883 = vmatpush2.bf16.msra.mxu0 %v1847
          %1884 = vmatprep.subr.bf16.mxu0 0
          %1885 = vmatpush2.bf16.msra.mxu0 %v1846
          %1886 = vmatprep.mubr.bf16.mxu0 %v1420
          %1887 = vmatmul.mubr.bf16.gmra.mxu0 %v1419
          %v1888 = vpop.f32.mrf.mxu0
          %v1889 = vadd.f32 0.0, %v1888
          %v1890 = vpop.f32.mrf.mxu0
          %v1891 = vpop.f32.mrf.mxu0
          %v1892 = vpop.f32.mrf.mxu0
          %1893 = vdwg.mxu0
          %v1894 = vmul.f32 %v1889, %v1837
          %s1895 = smul.addr %s1398, 8
          %s1896 = scalar_lea.vmem [#allocation3], %s1895
          %1897 = vst [vmem:[%s1896 + $0x8] sm:$0xff] %v1894
        $region76: #{tpu_custom_call.1} parent=63 // loop_footer
          %s1392 = sadd.s32 1, %s1388
        $region77: #{tpu_custom_call.1} parent=63 // loop_footer_branch
          %1387 = sbr.rel target = $region73
        $region78: #{tpu_custom_call.1} parent=63 // loop_exit
          _
        %v1898 = vld [vmem:[%s3] sm:$0xf]
        %v1899 = vld [vmem:[%s3 + $0x4] sm:$0xf]
        %v1900 = vld [vmem:[%s3 + $0x8] sm:$0xf]
        %v1901 = vld [vmem:[%s3 + $0xc] sm:$0xf]
        %v1902 = vld [vmem:[%s3 + $0x10] sm:$0xf]
        %v1903 = vld [vmem:[%s3 + $0x14] sm:$0xf]
        %v1904 = vld [vmem:[%s3 + $0x18] sm:$0xf]
        %v1905 = vld [vmem:[%s3 + $0x1c] sm:$0xf]
        %v1906 = vld [vmem:[#allocation3] sm:$0xff]
        %v1907 = vld [vmem:[#allocation3 + $0x8] sm:$0xff]
        %v1908 = vld [vmem:[#allocation3 + $0x10] sm:$0xff]
        %v1909 = vld [vmem:[#allocation3 + $0x18] sm:$0xff]
        %v1910 = vld [vmem:[#allocation3 + $0x20] sm:$0xff]
        %v1911 = vld [vmem:[#allocation3 + $0x28] sm:$0xff]
        %v1912 = vld [vmem:[#allocation3 + $0x30] sm:$0xff]
        %v1913 = vld [vmem:[#allocation3 + $0x38] sm:$0xff]
        %v1914 = vld [vmem:[#allocation3 + $0x40] sm:$0xff]
        %v1915 = vld [vmem:[#allocation3 + $0x48] sm:$0xff]
        %v1916 = vld [vmem:[#allocation3 + $0x50] sm:$0xff]
        %v1917 = vld [vmem:[#allocation3 + $0x58] sm:$0xff]
        %v1918 = vld [vmem:[#allocation3 + $0x60] sm:$0xff]
        %v1919 = vld [vmem:[#allocation3 + $0x68] sm:$0xff]
        %v1920 = vld [vmem:[#allocation3 + $0x70] sm:$0xff]
        %v1921 = vld [vmem:[#allocation3 + $0x78] sm:$0xff]
        %v1922 = vpack.c.bf16 %v1908, %v1906
        %v1923 = vpack.c.bf16 %v1909, %v1907
        %v1924 = vpack.c.bf16 %v1912, %v1910
        %v1925 = vpack.c.bf16 %v1913, %v1911
        %v1926 = vpack.c.bf16 %v1916, %v1914
        %v1927 = vpack.c.bf16 %v1917, %v1915
        %v1928 = vpack.c.bf16 %v1920, %v1918
        %v1929 = vpack.c.bf16 %v1921, %v1919
        %v1930 = vld [vmem:[%s4] sm:$0xff]
        %v1931 = vld [vmem:[%s4 + $0x8] sm:$0xff]
        %v1932 = vld [vmem:[%s4 + $0x10] sm:$0xff]
        %v1933 = vld [vmem:[%s4 + $0x18] sm:$0xff]
        %v1934 = vld [vmem:[%s4 + $0x20] sm:$0xff]
        %v1935 = vld [vmem:[%s4 + $0x28] sm:$0xff]
        %v1936 = vld [vmem:[%s4 + $0x30] sm:$0xff]
        %v1937 = vld [vmem:[%s4 + $0x38] sm:$0xff]
        %1939 = vset.pattern.permute.xlu0 0
        %1940 = vperm.xlu0 %1939, %v1930
        %v1941 = vpop.permute.xlu0 %1940
        %1944 = vset.pattern.permute.xlu0 0
        %1945 = vperm.xlu0 %1944, %v1931
        %v1946 = vpop.permute.xlu0 %1945
        %1949 = vset.pattern.permute.xlu0 0
        %1950 = vperm.xlu0 %1949, %v1932
        %v1951 = vpop.permute.xlu0 %1950
        %1954 = vset.pattern.permute.xlu0 0
        %1955 = vperm.xlu0 %1954, %v1933
        %v1956 = vpop.permute.xlu0 %1955
        %1959 = vset.pattern.permute.xlu0 0
        %1960 = vperm.xlu0 %1959, %v1934
        %v1961 = vpop.permute.xlu0 %1960
        %1964 = vset.pattern.permute.xlu0 0
        %1965 = vperm.xlu0 %1964, %v1935
        %v1966 = vpop.permute.xlu0 %1965
        %1969 = vset.pattern.permute.xlu0 0
        %1970 = vperm.xlu0 %1969, %v1936
        %v1971 = vpop.permute.xlu0 %1970
        %1974 = vset.pattern.permute.xlu0 0
        %1975 = vperm.xlu0 %1974, %v1937
        %v1976 = vpop.permute.xlu0 %1975
        %v1986 = vunpack.c.l.b16 %v1898
        %v1987 = vunpack.c.l.b16 %v1899
        %v1988 = vunpack.c.l.b16 %v1900
        %v1989 = vunpack.c.l.b16 %v1901
        %v1990 = vunpack.c.l.b16 %v1902
        %v1991 = vunpack.c.l.b16 %v1903
        %v1992 = vunpack.c.l.b16 %v1904
        %v1993 = vunpack.c.l.b16 %v1905
        %v1994 = vpack.c.b16 %v1987, %v1986
        %v1995 = vpack.c.b16 %v1989, %v1988
        %v1996 = vpack.c.b16 %v1991, %v1990
        %v1997 = vpack.c.b16 %v1993, %v1992
        %v1999 = vsel %vm638, %v1994, 0
        %v2002 = vsel %vm638, %v1995, 0
        %v2005 = vsel %vm638, %v1996, 0
        %v2008 = vsel %vm638, %v1997, 0
        %2010 = vmatprep.subr.bf16.mxu0 0
        %2011 = vmatpush1.bf16.msra.mxu0 0
        %2012 = vmatprep.subr.bf16.mxu0 0
        %2013 = vmatpush1.bf16.msra.mxu0 0
        %2014 = vmatprep.subr.bf16.mxu0 0
        %2015 = vmatpush1.bf16.msra.mxu0 0
        %2016 = vmatprep.subr.bf16.mxu0 0
        %2017 = vmatpush1.bf16.msra.mxu0 0
        %2018 = vmatprep.subr.bf16.mxu0 %v1929
        %2019 = vmatpush1.bf16.msra.mxu0 %v1928
        %2020 = vmatprep.subr.bf16.mxu0 %v1927
        %2021 = vmatpush1.bf16.msra.mxu0 %v1926
        %2022 = vmatprep.subr.bf16.mxu0 %v1925
        %2023 = vmatpush1.bf16.msra.mxu0 %v1924
        %2024 = vmatprep.subr.bf16.mxu0 %v1923
        %2025 = vmatpush1.bf16.msra.mxu0 %v1922
        %2026 = vmatprep.subr.bf16.mxu0 0
        %2027 = vmatpush2.bf16.msra.mxu0 0
        %2028 = vmatprep.subr.bf16.mxu0 0
        %2029 = vmatpush2.bf16.msra.mxu0 0
        %2030 = vmatprep.subr.bf16.mxu0 0
        %2031 = vmatpush2.bf16.msra.mxu0 0
        %2032 = vmatprep.subr.bf16.mxu0 0
        %2033 = vmatpush2.bf16.msra.mxu0 0
        %2034 = vmatprep.subr.bf16.mxu0 0
        %2035 = vmatpush2.bf16.msra.mxu0 0
        %2036 = vmatprep.subr.bf16.mxu0 0
        %2037 = vmatpush2.bf16.msra.mxu0 0
        %2038 = vmatprep.subr.bf16.mxu0 0
        %2039 = vmatpush2.bf16.msra.mxu0 0
        %2040 = vmatprep.subr.bf16.mxu0 0
        %2041 = vmatpush2.bf16.msra.mxu0 0
        %2042 = vmatprep.mubr.bf16.mxu0 0
        %2043 = vmatmul.mubr.bf16.gmra.mxu0 %v1999
        %v2044 = vpop.f32.mrf.mxu0
        %v2045 = vadd.f32 %v1941, %v2044
        %v2046 = vpop.f32.mrf.mxu0
        %v2047 = vadd.f32 %v1941, %v2046
        %v2048 = vpop.f32.mrf.mxu0
        %v2049 = vadd.f32 %v1946, %v2048
        %v2050 = vpop.f32.mrf.mxu0
        %v2051 = vadd.f32 %v1946, %v2050
        %2052 = vmatprep.mubr.bf16.mxu0 0
        %2053 = vmatmul.mubr.bf16.gmra.mxu0 %v2002
        %v2054 = vpop.f32.mrf.mxu0
        %v2055 = vadd.f32 %v1951, %v2054
        %v2056 = vpop.f32.mrf.mxu0
        %v2057 = vadd.f32 %v1951, %v2056
        %v2058 = vpop.f32.mrf.mxu0
        %v2059 = vadd.f32 %v1956, %v2058
        %v2060 = vpop.f32.mrf.mxu0
        %v2061 = vadd.f32 %v1956, %v2060
        %2062 = vmatprep.mubr.bf16.mxu0 0
        %2063 = vmatmul.mubr.bf16.gmra.mxu0 %v2005
        %v2064 = vpop.f32.mrf.mxu0
        %v2065 = vadd.f32 %v1961, %v2064
        %v2066 = vpop.f32.mrf.mxu0
        %v2067 = vadd.f32 %v1961, %v2066
        %v2068 = vpop.f32.mrf.mxu0
        %v2069 = vadd.f32 %v1966, %v2068
        %v2070 = vpop.f32.mrf.mxu0
        %v2071 = vadd.f32 %v1966, %v2070
        %2072 = vmatprep.mubr.bf16.mxu0 0
        %2073 = vmatmul.mubr.bf16.gmra.mxu0 %v2008
        %v2074 = vpop.f32.mrf.mxu0
        %v2075 = vadd.f32 %v1971, %v2074
        %v2076 = vpop.f32.mrf.mxu0
        %v2077 = vadd.f32 %v1971, %v2076
        %v2078 = vpop.f32.mrf.mxu0
        %v2079 = vadd.f32 %v1976, %v2078
        %v2080 = vpop.f32.mrf.mxu0
        %v2081 = vadd.f32 %v1976, %v2080
        %2082 = vdwg.mxu0
        %v2083 = vpack.c.bf16 %v2049, %v2045
        %v2084 = vpack.c.bf16 %v2051, %v2047
        %v2085 = vpack.c.bf16 %v2059, %v2055
        %v2086 = vpack.c.bf16 %v2061, %v2057
        %v2087 = vpack.c.bf16 %v2069, %v2065
        %v2088 = vpack.c.bf16 %v2071, %v2067
        %v2089 = vpack.c.bf16 %v2079, %v2075
        %v2090 = vpack.c.bf16 %v2081, %v2077
        %v2091 = vld [vmem:[%s5] sm:$0xf]
        %v2092 = vld [vmem:[%s5 + $0x4] sm:$0xf]
        %v2093 = vld [vmem:[%s5 + $0x8] sm:$0xf]
        %v2094 = vld [vmem:[%s5 + $0xc] sm:$0xf]
        %v2095 = vld [vmem:[%s5 + $0x10] sm:$0xf]
        %v2096 = vld [vmem:[%s5 + $0x14] sm:$0xf]
        %v2097 = vld [vmem:[%s5 + $0x18] sm:$0xf]
        %v2098 = vld [vmem:[%s5 + $0x1c] sm:$0xf]
        %v2099 = vld [vmem:[%s5 + $0x20] sm:$0xf]
        %v2100 = vld [vmem:[%s5 + $0x24] sm:$0xf]
        %v2101 = vld [vmem:[%s5 + $0x28] sm:$0xf]
        %v2102 = vld [vmem:[%s5 + $0x2c] sm:$0xf]
        %v2103 = vld [vmem:[%s5 + $0x30] sm:$0xf]
        %v2104 = vld [vmem:[%s5 + $0x34] sm:$0xf]
        %v2105 = vld [vmem:[%s5 + $0x38] sm:$0xf]
        %v2106 = vld [vmem:[%s5 + $0x3c] sm:$0xf]
        %v2107 = vld [vmem:[%s5 + $0x40] sm:$0xf]
        %v2108 = vld [vmem:[%s5 + $0x44] sm:$0xf]
        %v2109 = vld [vmem:[%s5 + $0x48] sm:$0xf]
        %v2110 = vld [vmem:[%s5 + $0x4c] sm:$0xf]
        %v2111 = vld [vmem:[%s5 + $0x50] sm:$0xf]
        %v2112 = vld [vmem:[%s5 + $0x54] sm:$0xf]
        %v2113 = vld [vmem:[%s5 + $0x58] sm:$0xf]
        %v2114 = vld [vmem:[%s5 + $0x5c] sm:$0xf]
        %v2115 = vld [vmem:[%s6] sm:$0xff]
        %v2116 = vld [vmem:[%s6 + $0x8] sm:$0xff]
        %v2117 = vld [vmem:[%s6 + $0x10] sm:$0xff]
        %v2118 = vld [vmem:[%s6 + $0x18] sm:$0xff]
        %v2119 = vld [vmem:[%s6 + $0x20] sm:$0xff]
        %v2120 = vld [vmem:[%s6 + $0x28] sm:$0xff]
        %v2121 = vld [vmem:[%s6 + $0x30] sm:$0xff]
        %v2122 = vld [vmem:[%s6 + $0x38] sm:$0xff]
        %v2123 = vld [vmem:[%s6 + $0x40] sm:$0xff]
        %v2124 = vld [vmem:[%s6 + $0x48] sm:$0xff]
        %v2125 = vld [vmem:[%s6 + $0x50] sm:$0xff]
        %v2126 = vld [vmem:[%s6 + $0x58] sm:$0xff]
        %v2127 = vld [vmem:[%s6 + $0x60] sm:$0xff]
        %v2128 = vld [vmem:[%s6 + $0x68] sm:$0xff]
        %v2129 = vld [vmem:[%s6 + $0x70] sm:$0xff]
        %v2130 = vld [vmem:[%s6 + $0x78] sm:$0xff]
        %v2131 = vld [vmem:[%s6 + $0x80] sm:$0xff]
        %v2132 = vld [vmem:[%s6 + $0x88] sm:$0xff]
        %v2133 = vld [vmem:[%s6 + $0x90] sm:$0xff]
        %v2134 = vld [vmem:[%s6 + $0x98] sm:$0xff]
        %v2135 = vld [vmem:[%s6 + $0xa0] sm:$0xff]
        %v2136 = vld [vmem:[%s6 + $0xa8] sm:$0xff]
        %v2137 = vld [vmem:[%s6 + $0xb0] sm:$0xff]
        %v2138 = vld [vmem:[%s6 + $0xb8] sm:$0xff]
        %2140 = vset.pattern.permute.xlu0 0
        %2141 = vperm.xlu0 %2140, %v2115
        %v2142 = vpop.permute.xlu0 %2141
        %2145 = vset.pattern.permute.xlu0 0
        %2146 = vperm.xlu0 %2145, %v2116
        %v2147 = vpop.permute.xlu0 %2146
        %2150 = vset.pattern.permute.xlu0 0
        %2151 = vperm.xlu0 %2150, %v2117
        %v2152 = vpop.permute.xlu0 %2151
        %2155 = vset.pattern.permute.xlu0 0
        %2156 = vperm.xlu0 %2155, %v2118
        %v2157 = vpop.permute.xlu0 %2156
        %2160 = vset.pattern.permute.xlu0 0
        %2161 = vperm.xlu0 %2160, %v2119
        %v2162 = vpop.permute.xlu0 %2161
        %2165 = vset.pattern.permute.xlu0 0
        %2166 = vperm.xlu0 %2165, %v2120
        %v2167 = vpop.permute.xlu0 %2166
        %2170 = vset.pattern.permute.xlu0 0
        %2171 = vperm.xlu0 %2170, %v2121
        %v2172 = vpop.permute.xlu0 %2171
        %2175 = vset.pattern.permute.xlu0 0
        %2176 = vperm.xlu0 %2175, %v2122
        %v2177 = vpop.permute.xlu0 %2176
        %2180 = vset.pattern.permute.xlu0 0
        %2181 = vperm.xlu0 %2180, %v2123
        %v2182 = vpop.permute.xlu0 %2181
        %2185 = vset.pattern.permute.xlu0 0
        %2186 = vperm.xlu0 %2185, %v2124
        %v2187 = vpop.permute.xlu0 %2186
        %2190 = vset.pattern.permute.xlu0 0
        %2191 = vperm.xlu0 %2190, %v2125
        %v2192 = vpop.permute.xlu0 %2191
        %2195 = vset.pattern.permute.xlu0 0
        %2196 = vperm.xlu0 %2195, %v2126
        %v2197 = vpop.permute.xlu0 %2196
        %2200 = vset.pattern.permute.xlu0 0
        %2201 = vperm.xlu0 %2200, %v2127
        %v2202 = vpop.permute.xlu0 %2201
        %2205 = vset.pattern.permute.xlu0 0
        %2206 = vperm.xlu0 %2205, %v2128
        %v2207 = vpop.permute.xlu0 %2206
        %2210 = vset.pattern.permute.xlu0 0
        %2211 = vperm.xlu0 %2210, %v2129
        %v2212 = vpop.permute.xlu0 %2211
        %2215 = vset.pattern.permute.xlu0 0
        %2216 = vperm.xlu0 %2215, %v2130
        %v2217 = vpop.permute.xlu0 %2216
        %2220 = vset.pattern.permute.xlu0 0
        %2221 = vperm.xlu0 %2220, %v2131
        %v2222 = vpop.permute.xlu0 %2221
        %2225 = vset.pattern.permute.xlu0 0
        %2226 = vperm.xlu0 %2225, %v2132
        %v2227 = vpop.permute.xlu0 %2226
        %2230 = vset.pattern.permute.xlu0 0
        %2231 = vperm.xlu0 %2230, %v2133
        %v2232 = vpop.permute.xlu0 %2231
        %2235 = vset.pattern.permute.xlu0 0
        %2236 = vperm.xlu0 %2235, %v2134
        %v2237 = vpop.permute.xlu0 %2236
        %2240 = vset.pattern.permute.xlu0 0
        %2241 = vperm.xlu0 %2240, %v2135
        %v2242 = vpop.permute.xlu0 %2241
        %2245 = vset.pattern.permute.xlu0 0
        %2246 = vperm.xlu0 %2245, %v2136
        %v2247 = vpop.permute.xlu0 %2246
        %2250 = vset.pattern.permute.xlu0 0
        %2251 = vperm.xlu0 %2250, %v2137
        %v2252 = vpop.permute.xlu0 %2251
        %2255 = vset.pattern.permute.xlu0 0
        %2256 = vperm.xlu0 %2255, %v2138
        %v2257 = vpop.permute.xlu0 %2256
        %v2283 = vunpack.c.l.b16 %v2091
        %v2284 = vunpack.c.l.b16 %v2092
        %v2285 = vunpack.c.l.b16 %v2093
        %v2286 = vunpack.c.l.b16 %v2094
        %v2287 = vunpack.c.l.b16 %v2095
        %v2288 = vunpack.c.l.b16 %v2096
        %v2289 = vunpack.c.l.b16 %v2097
        %v2290 = vunpack.c.l.b16 %v2098
        %v2291 = vunpack.c.l.b16 %v2099
        %v2292 = vunpack.c.l.b16 %v2100
        %v2293 = vunpack.c.l.b16 %v2101
        %v2294 = vunpack.c.l.b16 %v2102
        %v2295 = vunpack.c.l.b16 %v2103
        %v2296 = vunpack.c.l.b16 %v2104
        %v2297 = vunpack.c.l.b16 %v2105
        %v2298 = vunpack.c.l.b16 %v2106
        %v2299 = vunpack.c.l.b16 %v2107
        %v2300 = vunpack.c.l.b16 %v2108
        %v2301 = vunpack.c.l.b16 %v2109
        %v2302 = vunpack.c.l.b16 %v2110
        %v2303 = vunpack.c.l.b16 %v2111
        %v2304 = vunpack.c.l.b16 %v2112
        %v2305 = vunpack.c.l.b16 %v2113
        %v2306 = vunpack.c.l.b16 %v2114
        %v2307 = vpack.c.b16 %v2284, %v2283
        %v2308 = vpack.c.b16 %v2286, %v2285
        %v2309 = vpack.c.b16 %v2288, %v2287
        %v2310 = vpack.c.b16 %v2290, %v2289
        %v2311 = vpack.c.b16 %v2292, %v2291
        %v2312 = vpack.c.b16 %v2294, %v2293
        %v2313 = vpack.c.b16 %v2296, %v2295
        %v2314 = vpack.c.b16 %v2298, %v2297
        %v2315 = vpack.c.b16 %v2300, %v2299
        %v2316 = vpack.c.b16 %v2302, %v2301
        %v2317 = vpack.c.b16 %v2304, %v2303
        %v2318 = vpack.c.b16 %v2306, %v2305
        %v2320 = vsel %vm638, %v2307, 0
        %v2323 = vsel %vm638, %v2308, 0
        %v2326 = vsel %vm638, %v2309, 0
        %v2329 = vsel %vm638, %v2310, 0
        %v2332 = vsel %vm638, %v2311, 0
        %v2335 = vsel %vm638, %v2312, 0
        %v2338 = vsel %vm638, %v2313, 0
        %v2341 = vsel %vm638, %v2314, 0
        %v2344 = vsel %vm638, %v2315, 0
        %v2347 = vsel %vm638, %v2316, 0
        %v2350 = vsel %vm638, %v2317, 0
        %v2353 = vsel %vm638, %v2318, 0
        %2355 = vmatprep.subr.bf16.mxu0 0
        %2356 = vmatpush1.bf16.msra.mxu0 0
        %2357 = vmatprep.subr.bf16.mxu0 0
        %2358 = vmatpush1.bf16.msra.mxu0 0
        %2359 = vmatprep.subr.bf16.mxu0 0
        %2360 = vmatpush1.bf16.msra.mxu0 0
        %2361 = vmatprep.subr.bf16.mxu0 0
        %2362 = vmatpush1.bf16.msra.mxu0 0
        %2363 = vmatprep.subr.bf16.mxu0 %v2090
        %2364 = vmatpush1.bf16.msra.mxu0 %v2089
        %2365 = vmatprep.subr.bf16.mxu0 %v2088
        %2366 = vmatpush1.bf16.msra.mxu0 %v2087
        %2367 = vmatprep.subr.bf16.mxu0 %v2086
        %2368 = vmatpush1.bf16.msra.mxu0 %v2085
        %2369 = vmatprep.subr.bf16.mxu0 %v2084
        %2370 = vmatpush1.bf16.msra.mxu0 %v2083
        %2371 = vmatprep.subr.bf16.mxu0 0
        %2372 = vmatpush2.bf16.msra.mxu0 0
        %2373 = vmatprep.subr.bf16.mxu0 0
        %2374 = vmatpush2.bf16.msra.mxu0 0
        %2375 = vmatprep.subr.bf16.mxu0 0
        %2376 = vmatpush2.bf16.msra.mxu0 0
        %2377 = vmatprep.subr.bf16.mxu0 0
        %2378 = vmatpush2.bf16.msra.mxu0 0
        %2379 = vmatprep.subr.bf16.mxu0 0
        %2380 = vmatpush2.bf16.msra.mxu0 0
        %2381 = vmatprep.subr.bf16.mxu0 0
        %2382 = vmatpush2.bf16.msra.mxu0 0
        %2383 = vmatprep.subr.bf16.mxu0 0
        %2384 = vmatpush2.bf16.msra.mxu0 0
        %2385 = vmatprep.subr.bf16.mxu0 0
        %2386 = vmatpush2.bf16.msra.mxu0 0
        %2387 = vmatprep.mubr.bf16.mxu0 0
        %2388 = vmatmul.mubr.bf16.gmra.mxu0 %v2320
        %v2389 = vpop.f32.mrf.mxu0
        %v2390 = vadd.f32 %v2142, %v2389
        %v2391 = vpop.f32.mrf.mxu0
        %v2392 = vadd.f32 %v2142, %v2391
        %v2393 = vpop.f32.mrf.mxu0
        %v2394 = vadd.f32 %v2147, %v2393
        %v2395 = vpop.f32.mrf.mxu0
        %v2396 = vadd.f32 %v2147, %v2395
        %2397 = vmatprep.mubr.bf16.mxu0 0
        %2398 = vmatmul.mubr.bf16.gmra.mxu0 %v2323
        %v2399 = vpop.f32.mrf.mxu0
        %v2400 = vadd.f32 %v2152, %v2399
        %v2401 = vpop.f32.mrf.mxu0
        %v2402 = vadd.f32 %v2152, %v2401
        %v2403 = vpop.f32.mrf.mxu0
        %v2404 = vadd.f32 %v2157, %v2403
        %v2405 = vpop.f32.mrf.mxu0
        %v2406 = vadd.f32 %v2157, %v2405
        %2407 = vmatprep.mubr.bf16.mxu0 0
        %2408 = vmatmul.mubr.bf16.gmra.mxu0 %v2326
        %v2409 = vpop.f32.mrf.mxu0
        %v2410 = vadd.f32 %v2162, %v2409
        %v2411 = vpop.f32.mrf.mxu0
        %v2412 = vadd.f32 %v2162, %v2411
        %v2413 = vpop.f32.mrf.mxu0
        %v2414 = vadd.f32 %v2167, %v2413
        %v2415 = vpop.f32.mrf.mxu0
        %v2416 = vadd.f32 %v2167, %v2415
        %2417 = vmatprep.mubr.bf16.mxu0 0
        %2418 = vmatmul.mubr.bf16.gmra.mxu0 %v2329
        %v2419 = vpop.f32.mrf.mxu0
        %v2420 = vadd.f32 %v2172, %v2419
        %v2421 = vpop.f32.mrf.mxu0
        %v2422 = vadd.f32 %v2172, %v2421
        %v2423 = vpop.f32.mrf.mxu0
        %v2424 = vadd.f32 %v2177, %v2423
        %v2425 = vpop.f32.mrf.mxu0
        %v2426 = vadd.f32 %v2177, %v2425
        %2427 = vmatprep.mubr.bf16.mxu0 0
        %2428 = vmatmul.mubr.bf16.gmra.mxu0 %v2332
        %v2429 = vpop.f32.mrf.mxu0
        %v2430 = vadd.f32 %v2182, %v2429
        %v2431 = vpop.f32.mrf.mxu0
        %v2432 = vadd.f32 %v2182, %v2431
        %v2433 = vpop.f32.mrf.mxu0
        %v2434 = vadd.f32 %v2187, %v2433
        %v2435 = vpop.f32.mrf.mxu0
        %v2436 = vadd.f32 %v2187, %v2435
        %2437 = vmatprep.mubr.bf16.mxu0 0
        %2438 = vmatmul.mubr.bf16.gmra.mxu0 %v2335
        %v2439 = vpop.f32.mrf.mxu0
        %v2440 = vadd.f32 %v2192, %v2439
        %v2441 = vpop.f32.mrf.mxu0
        %v2442 = vadd.f32 %v2192, %v2441
        %v2443 = vpop.f32.mrf.mxu0
        %v2444 = vadd.f32 %v2197, %v2443
        %v2445 = vpop.f32.mrf.mxu0
        %v2446 = vadd.f32 %v2197, %v2445
        %2447 = vmatprep.mubr.bf16.mxu0 0
        %2448 = vmatmul.mubr.bf16.gmra.mxu0 %v2338
        %v2449 = vpop.f32.mrf.mxu0
        %v2450 = vadd.f32 %v2202, %v2449
        %v2451 = vpop.f32.mrf.mxu0
        %v2452 = vadd.f32 %v2202, %v2451
        %v2453 = vpop.f32.mrf.mxu0
        %v2454 = vadd.f32 %v2207, %v2453
        %v2455 = vpop.f32.mrf.mxu0
        %v2456 = vadd.f32 %v2207, %v2455
        %2457 = vmatprep.mubr.bf16.mxu0 0
        %2458 = vmatmul.mubr.bf16.gmra.mxu0 %v2341
        %v2459 = vpop.f32.mrf.mxu0
        %v2460 = vadd.f32 %v2212, %v2459
        %v2461 = vpop.f32.mrf.mxu0
        %v2462 = vadd.f32 %v2212, %v2461
        %v2463 = vpop.f32.mrf.mxu0
        %v2464 = vadd.f32 %v2217, %v2463
        %v2465 = vpop.f32.mrf.mxu0
        %v2466 = vadd.f32 %v2217, %v2465
        %2467 = vmatprep.mubr.bf16.mxu0 0
        %2468 = vmatmul.mubr.bf16.gmra.mxu0 %v2344
        %v2469 = vpop.f32.mrf.mxu0
        %v2470 = vadd.f32 %v2222, %v2469
        %v2471 = vpop.f32.mrf.mxu0
        %v2472 = vadd.f32 %v2222, %v2471
        %v2473 = vpop.f32.mrf.mxu0
        %v2474 = vadd.f32 %v2227, %v2473
        %v2475 = vpop.f32.mrf.mxu0
        %v2476 = vadd.f32 %v2227, %v2475
        %2477 = vmatprep.mubr.bf16.mxu0 0
        %2478 = vmatmul.mubr.bf16.gmra.mxu0 %v2347
        %v2479 = vpop.f32.mrf.mxu0
        %v2480 = vadd.f32 %v2232, %v2479
        %v2481 = vpop.f32.mrf.mxu0
        %v2482 = vadd.f32 %v2232, %v2481
        %v2483 = vpop.f32.mrf.mxu0
        %v2484 = vadd.f32 %v2237, %v2483
        %v2485 = vpop.f32.mrf.mxu0
        %v2486 = vadd.f32 %v2237, %v2485
        %2487 = vmatprep.mubr.bf16.mxu0 0
        %2488 = vmatmul.mubr.bf16.gmra.mxu0 %v2350
        %v2489 = vpop.f32.mrf.mxu0
        %v2490 = vadd.f32 %v2242, %v2489
        %v2491 = vpop.f32.mrf.mxu0
        %v2492 = vadd.f32 %v2242, %v2491
        %v2493 = vpop.f32.mrf.mxu0
        %v2494 = vadd.f32 %v2247, %v2493
        %v2495 = vpop.f32.mrf.mxu0
        %v2496 = vadd.f32 %v2247, %v2495
        %2497 = vmatprep.mubr.bf16.mxu0 0
        %2498 = vmatmul.mubr.bf16.gmra.mxu0 %v2353
        %v2499 = vpop.f32.mrf.mxu0
        %v2500 = vadd.f32 %v2252, %v2499
        %v2501 = vpop.f32.mrf.mxu0
        %v2502 = vadd.f32 %v2252, %v2501
        %v2503 = vpop.f32.mrf.mxu0
        %v2504 = vadd.f32 %v2257, %v2503
        %v2505 = vpop.f32.mrf.mxu0
        %v2506 = vadd.f32 %v2257, %v2505
        %2507 = vdwg.mxu0
        %2508 = vst [vmem:[#allocation2] sm:$0xff] %v2390
        %2509 = vst [vmem:[#allocation2 + $0x8] sm:$0xff] %v2392
        %2510 = vst [vmem:[#allocation2 + $0x10] sm:$0xff] %v2394
        %2511 = vst [vmem:[#allocation2 + $0x18] sm:$0xff] %v2396
        %2512 = vst [vmem:[#allocation2 + $0x20] sm:$0xff] %v2400
        %2513 = vst [vmem:[#allocation2 + $0x28] sm:$0xff] %v2402
        %2514 = vst [vmem:[#allocation2 + $0x30] sm:$0xff] %v2404
        %2515 = vst [vmem:[#allocation2 + $0x38] sm:$0xff] %v2406
        %2516 = vst [vmem:[#allocation2 + $0x40] sm:$0xff] %v2410
        %2517 = vst [vmem:[#allocation2 + $0x48] sm:$0xff] %v2412
        %2518 = vst [vmem:[#allocation2 + $0x50] sm:$0xff] %v2414
        %2519 = vst [vmem:[#allocation2 + $0x58] sm:$0xff] %v2416
        %2520 = vst [vmem:[#allocation2 + $0x60] sm:$0xff] %v2420
        %2521 = vst [vmem:[#allocation2 + $0x68] sm:$0xff] %v2422
        %2522 = vst [vmem:[#allocation2 + $0x70] sm:$0xff] %v2424
        %2523 = vst [vmem:[#allocation2 + $0x78] sm:$0xff] %v2426
        %2524 = vst [vmem:[#allocation2 + $0x80] sm:$0xff] %v2430
        %2525 = vst [vmem:[#allocation2 + $0x88] sm:$0xff] %v2432
        %2526 = vst [vmem:[#allocation2 + $0x90] sm:$0xff] %v2434
        %2527 = vst [vmem:[#allocation2 + $0x98] sm:$0xff] %v2436
        %2528 = vst [vmem:[#allocation2 + $0xa0] sm:$0xff] %v2440
        %2529 = vst [vmem:[#allocation2 + $0xa8] sm:$0xff] %v2442
        %2530 = vst [vmem:[#allocation2 + $0xb0] sm:$0xff] %v2444
        %2531 = vst [vmem:[#allocation2 + $0xb8] sm:$0xff] %v2446
        %2532 = vst [vmem:[#allocation2 + $0xc0] sm:$0xff] %v2450
        %2533 = vst [vmem:[#allocation2 + $0xc8] sm:$0xff] %v2452
        %2534 = vst [vmem:[#allocation2 + $0xd0] sm:$0xff] %v2454
        %2535 = vst [vmem:[#allocation2 + $0xd8] sm:$0xff] %v2456
        %2536 = vst [vmem:[#allocation2 + $0xe0] sm:$0xff] %v2460
        %2537 = vst [vmem:[#allocation2 + $0xe8] sm:$0xff] %v2462
        %2538 = vst [vmem:[#allocation2 + $0xf0] sm:$0xff] %v2464
        %2539 = vst [vmem:[#allocation2 + $0xf8] sm:$0xff] %v2466
        %2540 = vst [vmem:[#allocation2 + $0x100] sm:$0xff] %v2470
        %2541 = vst [vmem:[#allocation2 + $0x108] sm:$0xff] %v2472
        %2542 = vst [vmem:[#allocation2 + $0x110] sm:$0xff] %v2474
        %2543 = vst [vmem:[#allocation2 + $0x118] sm:$0xff] %v2476
        %2544 = vst [vmem:[#allocation2 + $0x120] sm:$0xff] %v2480
        %2545 = vst [vmem:[#allocation2 + $0x128] sm:$0xff] %v2482
        %2546 = vst [vmem:[#allocation2 + $0x130] sm:$0xff] %v2484
        %2547 = vst [vmem:[#allocation2 + $0x138] sm:$0xff] %v2486
        %2548 = vst [vmem:[#allocation2 + $0x140] sm:$0xff] %v2490
        %2549 = vst [vmem:[#allocation2 + $0x148] sm:$0xff] %v2492
        %2550 = vst [vmem:[#allocation2 + $0x150] sm:$0xff] %v2494
        %2551 = vst [vmem:[#allocation2 + $0x158] sm:$0xff] %v2496
        %2552 = vst [vmem:[#allocation2 + $0x160] sm:$0xff] %v2500
        %2553 = vst [vmem:[#allocation2 + $0x168] sm:$0xff] %v2502
        %2554 = vst [vmem:[#allocation2 + $0x170] sm:$0xff] %v2504
        %2555 = vst [vmem:[#allocation2 + $0x178] sm:$0xff] %v2506
        loop: start=0, step=1, limit=8
        $region79: #{tpu_custom_call.1} parent=63 // loop_pre_header
          _
        $region80: #{tpu_custom_call.1} parent=63 // loop_header
          %s2557 = sphi 0, %s2561
          %p2558 = scmp.ge.s32.totalorder %s2557, 8
        $region81: #{tpu_custom_call.1} parent=63 // loop_header_branch
          %2560 = sbr.rel (%p2558) target = $region85
        $region82: #{tpu_custom_call.1} parent=63 // loop_body
          %s2562 = smul.u32 %s2557, 8
          %s2563 = sadd.s32 %s2562, 64
          %s2564 = sadd.s32 %s2562, 128
          %s2565 = sshra.s32 %s2562, 3
          %s2566 = sand.u32 %s2562, 7
          %s2567 = smul.u32 %s2565, 2
          %s2568 = smul.addr %s2567, 8
          %s2569 = scalar_lea.vmem [#allocation2], %s2568
          %v2570 = vld [vmem:[%s2569] sm:$0xff]
          %v2571 = vpack.c.bf16 %v2570, %v2570
          %s2572 = sshra.s32 %s2563, 3
          %s2573 = sand.u32 %s2563, 7
          %s2574 = smul.u32 %s2572, 2
          %s2575 = smul.addr %s2574, 8
          %s2576 = scalar_lea.vmem [#allocation2], %s2575
          %v2577 = vld [vmem:[%s2576] sm:$0xff]
          %v2578 = vld [vmem:[%s2576 + $0x8] sm:$0xff]
          %v2579 = vpack.c.bf16 %v2577, %v2577
          %v2580 = vpack.c.bf16 %v2578, %v2578
          %s2581 = sshra.s32 %s2564, 3
          %s2582 = sand.u32 %s2564, 7
          %s2583 = smul.u32 %s2581, 2
          %s2584 = smul.addr %s2583, 8
          %s2585 = scalar_lea.vmem [#allocation2], %s2584
          %v2586 = vld [vmem:[%s2585] sm:$0xff]
          %v2587 = vld [vmem:[%s2585 + $0x8] sm:$0xff]
          %v2588 = vpack.c.bf16 %v2586, %v2586
          %v2589 = vpack.c.bf16 %v2587, %v2587
          %2590 = vxpose.xlu0.c.b16.start [1/8] %v2579, 128
          %2591 = vxpose.xlu0.c.b16.cont [2/8] 0, 128
          %2592 = vxpose.xlu0.c.b16.cont [3/8] 0, 128
          %2593 = vxpose.xlu0.c.b16.cont [4/8] 0, 128
          %2594 = vxpose.xlu0.c.b16.cont [5/8] 0, 128
          %2595 = vxpose.xlu0.c.b16.cont [6/8] 0, 128
          %2596 = vxpose.xlu0.c.b16.cont [7/8] 0, 128
          %2597 = vxpose.xlu0.c.b16.end [8/8] 0, 128
          %v2598 = vpop.trf.xlu0
          %v2599 = vpop.trf.xlu0
          %v2600 = vpop.trf.xlu0
          %v2601 = vpop.trf.xlu0
          %v2602 = vpop.trf.xlu0
          %v2603 = vpop.trf.xlu0
          %v2604 = vpop.trf.xlu0
          %v2605 = vpop.trf.xlu0
          %2606 = vxpose.xlu0.c.b16.start [1/8] %v2580, 128
          %2607 = vxpose.xlu0.c.b16.cont [2/8] 0, 128
          %2608 = vxpose.xlu0.c.b16.cont [3/8] 0, 128
          %2609 = vxpose.xlu0.c.b16.cont [4/8] 0, 128
          %2610 = vxpose.xlu0.c.b16.cont [5/8] 0, 128
          %2611 = vxpose.xlu0.c.b16.cont [6/8] 0, 128
          %2612 = vxpose.xlu0.c.b16.cont [7/8] 0, 128
          %2613 = vxpose.xlu0.c.b16.end [8/8] 0, 128
          %v2614 = vpop.trf.xlu0
          %v2615 = vpop.trf.xlu0
          %v2616 = vpop.trf.xlu0
          %v2617 = vpop.trf.xlu0
          %v2618 = vpop.trf.xlu0
          %v2619 = vpop.trf.xlu0
          %v2620 = vpop.trf.xlu0
          %v2621 = vpop.trf.xlu0
          %vm2622 = vcmask 64512
          %v2624 = vsel %vm2622, %v2598, 0
          %v2627 = vsel %vm2622, %v2599, 0
          %v2630 = vsel %vm2622, %v2600, 0
          %v2633 = vsel %vm2622, %v2601, 0
          %v2636 = vsel %vm2622, %v2602, 0
          %v2639 = vsel %vm2622, %v2603, 0
          %v2642 = vsel %vm2622, %v2604, 0
          %v2645 = vsel %vm2622, %v2605, 0
          %v2648 = vsel %vm2622, %v2614, 0
          %v2651 = vsel %vm2622, %v2615, 0
          %v2654 = vsel %vm2622, %v2616, 0
          %v2657 = vsel %vm2622, %v2617, 0
          %v2660 = vsel %vm2622, %v2618, 0
          %v2663 = vsel %vm2622, %v2619, 0
          %v2666 = vsel %vm2622, %v2620, 0
          %v2669 = vsel %vm2622, %v2621, 0
          %vm2671 = vcmask 1043456
          %v2673 = vsel %vm2671, %v2571, 0
          %2675 = vmatprep.subr.bf16.mxu0 0
          %2676 = vmatpush1.bf16.msra.mxu0 0
          %2677 = vmatprep.subr.bf16.mxu0 0
          %2678 = vmatpush1.bf16.msra.mxu0 0
          %2679 = vmatprep.subr.bf16.mxu0 0
          %2680 = vmatpush1.bf16.msra.mxu0 0
          %2681 = vmatprep.subr.bf16.mxu0 0
          %2682 = vmatpush1.bf16.msra.mxu0 0
          %2683 = vmatprep.subr.bf16.mxu0 0
          %2684 = vmatpush1.bf16.msra.mxu0 0
          %2685 = vmatprep.subr.bf16.mxu0 0
          %2686 = vmatpush1.bf16.msra.mxu0 0
          %2687 = vmatprep.subr.bf16.mxu0 0
          %2688 = vmatpush1.bf16.msra.mxu0 0
          %2689 = vmatprep.subr.bf16.mxu0 0
          %2690 = vmatpush1.bf16.msra.mxu0 %v2673
          %2691 = vmatprep.subr.bf16.mxu0 0
          %2692 = vmatpush2.bf16.msra.mxu0 0
          %2693 = vmatprep.subr.bf16.mxu0 0
          %2694 = vmatpush2.bf16.msra.mxu0 0
          %2695 = vmatprep.subr.bf16.mxu0 0
          %2696 = vmatpush2.bf16.msra.mxu0 0
          %2697 = vmatprep.subr.bf16.mxu0 0
          %2698 = vmatpush2.bf16.msra.mxu0 0
          %2699 = vmatprep.subr.bf16.mxu0 0
          %2700 = vmatpush2.bf16.msra.mxu0 0
          %2701 = vmatprep.subr.bf16.mxu0 0
          %2702 = vmatpush2.bf16.msra.mxu0 0
          %2703 = vmatprep.subr.bf16.mxu0 0
          %2704 = vmatpush2.bf16.msra.mxu0 0
          %2705 = vmatprep.subr.bf16.mxu0 0
          %2706 = vmatpush2.bf16.msra.mxu0 0
          %2707 = vmatprep.mubr.bf16.mxu0 0
          %2708 = vmatmul.mubr.bf16.gmra.mxu0 %v2624
          %v2709 = vpop.f32.mrf.mxu0
          %v2710 = vadd.f32 0.0, %v2709
          %v2711 = vpop.f32.mrf.mxu0
          %v2712 = vpop.f32.mrf.mxu0
          %v2713 = vadd.f32 0.0, %v2712
          %v2714 = vpop.f32.mrf.mxu0
          %2715 = vmatprep.mubr.bf16.mxu0 0
          %2716 = vmatmul.mubr.bf16.gmra.mxu0 %v2627
          %v2717 = vpop.f32.mrf.mxu0
          %v2718 = vadd.f32 0.0, %v2717
          %v2719 = vpop.f32.mrf.mxu0
          %v2720 = vpop.f32.mrf.mxu0
          %v2721 = vadd.f32 0.0, %v2720
          %v2722 = vpop.f32.mrf.mxu0
          %2723 = vmatprep.mubr.bf16.mxu0 0
          %2724 = vmatmul.mubr.bf16.gmra.mxu0 %v2630
          %v2725 = vpop.f32.mrf.mxu0
          %v2726 = vadd.f32 0.0, %v2725
          %v2727 = vpop.f32.mrf.mxu0
          %v2728 = vpop.f32.mrf.mxu0
          %v2729 = vadd.f32 0.0, %v2728
          %v2730 = vpop.f32.mrf.mxu0
          %2731 = vmatprep.mubr.bf16.mxu0 0
          %2732 = vmatmul.mubr.bf16.gmra.mxu0 %v2633
          %v2733 = vpop.f32.mrf.mxu0
          %v2734 = vadd.f32 0.0, %v2733
          %v2735 = vpop.f32.mrf.mxu0
          %v2736 = vpop.f32.mrf.mxu0
          %v2737 = vadd.f32 0.0, %v2736
          %v2738 = vpop.f32.mrf.mxu0
          %2739 = vmatprep.mubr.bf16.mxu0 0
          %2740 = vmatmul.mubr.bf16.gmra.mxu0 %v2636
          %v2741 = vpop.f32.mrf.mxu0
          %v2742 = vadd.f32 0.0, %v2741
          %v2743 = vpop.f32.mrf.mxu0
          %v2744 = vpop.f32.mrf.mxu0
          %v2745 = vadd.f32 0.0, %v2744
          %v2746 = vpop.f32.mrf.mxu0
          %2747 = vmatprep.mubr.bf16.mxu0 0
          %2748 = vmatmul.mubr.bf16.gmra.mxu0 %v2639
          %v2749 = vpop.f32.mrf.mxu0
          %v2750 = vadd.f32 0.0, %v2749
          %v2751 = vpop.f32.mrf.mxu0
          %v2752 = vpop.f32.mrf.mxu0
          %v2753 = vadd.f32 0.0, %v2752
          %v2754 = vpop.f32.mrf.mxu0
          %2755 = vmatprep.mubr.bf16.mxu0 0
          %2756 = vmatmul.mubr.bf16.gmra.mxu0 %v2642
          %v2757 = vpop.f32.mrf.mxu0
          %v2758 = vadd.f32 0.0, %v2757
          %v2759 = vpop.f32.mrf.mxu0
          %v2760 = vpop.f32.mrf.mxu0
          %v2761 = vadd.f32 0.0, %v2760
          %v2762 = vpop.f32.mrf.mxu0
          %2763 = vmatprep.mubr.bf16.mxu0 0
          %2764 = vmatmul.mubr.bf16.gmra.mxu0 %v2645
          %v2765 = vpop.f32.mrf.mxu0
          %v2766 = vadd.f32 0.0, %v2765
          %v2767 = vpop.f32.mrf.mxu0
          %v2768 = vpop.f32.mrf.mxu0
          %v2769 = vadd.f32 0.0, %v2768
          %v2770 = vpop.f32.mrf.mxu0
          %2771 = vmatprep.mubr.bf16.mxu0 0
          %2772 = vmatmul.mubr.bf16.gmra.mxu0 %v2648
          %v2773 = vpop.f32.mrf.mxu0
          %v2774 = vadd.f32 0.0, %v2773
          %v2775 = vpop.f32.mrf.mxu0
          %v2776 = vpop.f32.mrf.mxu0
          %v2777 = vadd.f32 0.0, %v2776
          %v2778 = vpop.f32.mrf.mxu0
          %2779 = vmatprep.mubr.bf16.mxu0 0
          %2780 = vmatmul.mubr.bf16.gmra.mxu0 %v2651
          %v2781 = vpop.f32.mrf.mxu0
          %v2782 = vadd.f32 0.0, %v2781
          %v2783 = vpop.f32.mrf.mxu0
          %v2784 = vpop.f32.mrf.mxu0
          %v2785 = vadd.f32 0.0, %v2784
          %v2786 = vpop.f32.mrf.mxu0
          %2787 = vmatprep.mubr.bf16.mxu0 0
          %2788 = vmatmul.mubr.bf16.gmra.mxu0 %v2654
          %v2789 = vpop.f32.mrf.mxu0
          %v2790 = vadd.f32 0.0, %v2789
          %v2791 = vpop.f32.mrf.mxu0
          %v2792 = vpop.f32.mrf.mxu0
          %v2793 = vadd.f32 0.0, %v2792
          %v2794 = vpop.f32.mrf.mxu0
          %2795 = vmatprep.mubr.bf16.mxu0 0
          %2796 = vmatmul.mubr.bf16.gmra.mxu0 %v2657
          %v2797 = vpop.f32.mrf.mxu0
          %v2798 = vadd.f32 0.0, %v2797
          %v2799 = vpop.f32.mrf.mxu0
          %v2800 = vpop.f32.mrf.mxu0
          %v2801 = vadd.f32 0.0, %v2800
          %v2802 = vpop.f32.mrf.mxu0
          %2803 = vmatprep.mubr.bf16.mxu0 0
          %2804 = vmatmul.mubr.bf16.gmra.mxu0 %v2660
          %v2805 = vpop.f32.mrf.mxu0
          %v2806 = vadd.f32 0.0, %v2805
          %v2807 = vpop.f32.mrf.mxu0
          %v2808 = vpop.f32.mrf.mxu0
          %v2809 = vadd.f32 0.0, %v2808
          %v2810 = vpop.f32.mrf.mxu0
          %2811 = vmatprep.mubr.bf16.mxu0 0
          %2812 = vmatmul.mubr.bf16.gmra.mxu0 %v2663
          %v2813 = vpop.f32.mrf.mxu0
          %v2814 = vadd.f32 0.0, %v2813
          %v2815 = vpop.f32.mrf.mxu0
          %v2816 = vpop.f32.mrf.mxu0
          %v2817 = vadd.f32 0.0, %v2816
          %v2818 = vpop.f32.mrf.mxu0
          %2819 = vmatprep.mubr.bf16.mxu0 0
          %2820 = vmatmul.mubr.bf16.gmra.mxu0 %v2666
          %v2821 = vpop.f32.mrf.mxu0
          %v2822 = vadd.f32 0.0, %v2821
          %v2823 = vpop.f32.mrf.mxu0
          %v2824 = vpop.f32.mrf.mxu0
          %v2825 = vadd.f32 0.0, %v2824
          %v2826 = vpop.f32.mrf.mxu0
          %2827 = vmatprep.mubr.bf16.mxu0 0
          %2828 = vmatmul.mubr.bf16.gmra.mxu0 %v2669
          %v2829 = vpop.f32.mrf.mxu0
          %v2830 = vadd.f32 0.0, %v2829
          %v2831 = vpop.f32.mrf.mxu0
          %v2832 = vpop.f32.mrf.mxu0
          %v2833 = vadd.f32 0.0, %v2832
          %v2834 = vpop.f32.mrf.mxu0
          %2835 = vdwg.mxu0
          %v2836 = vmax.f32 %v2710, %v2726
          %v2837 = vmax.f32 %v2713, %v2729
          %v2838 = vmax.f32 %v2718, %v2734
          %v2839 = vmax.f32 %v2721, %v2737
          %v2840 = vmax.f32 %v2836, %v2742
          %v2841 = vmax.f32 %v2837, %v2745
          %v2842 = vmax.f32 %v2838, %v2750
          %v2843 = vmax.f32 %v2839, %v2753
          %v2844 = vmax.f32 %v2840, %v2758
          %v2845 = vmax.f32 %v2841, %v2761
          %v2846 = vmax.f32 %v2842, %v2766
          %v2847 = vmax.f32 %v2843, %v2769
          %v2848 = vmax.f32 %v2844, %v2774
          %v2849 = vmax.f32 %v2845, %v2777
          %v2850 = vmax.f32 %v2846, %v2782
          %v2851 = vmax.f32 %v2847, %v2785
          %v2852 = vmax.f32 %v2848, %v2790
          %v2853 = vmax.f32 %v2849, %v2793
          %v2854 = vmax.f32 %v2850, %v2798
          %v2855 = vmax.f32 %v2851, %v2801
          %v2856 = vmax.f32 %v2852, %v2806
          %v2857 = vmax.f32 %v2853, %v2809
          %v2858 = vmax.f32 %v2854, %v2814
          %v2859 = vmax.f32 %v2855, %v2817
          %v2860 = vmax.f32 %v2856, %v2822
          %v2861 = vmax.f32 %v2857, %v2825
          %v2862 = vmax.f32 %v2858, %v2830
          %v2863 = vmax.f32 %v2859, %v2833
          %v2864 = vmax.f32 %v2860, %v2861
          %v2865 = vmax.f32 %v2862, %v2863
          %v2866 = vmax.f32 %v2864, %v2865
          %v2867 = vrot.slane %v2866, 4
          %v2868 = vmax.f32 %v2866, %v2867
          %v2869 = vrot.slane %v2868, 2
          %v2870 = vmax.f32 %v2868, %v2869
          %v2871 = vrot.slane %v2870, 1
          %v2872 = vmax.f32 %v2870, %v2871
          %v2873 = vsub.f32 %v2710, %v2872
          %v2874 = vsub.f32 %v2713, %v2872
          %v2875 = vsub.f32 %v2718, %v2872
          %v2876 = vsub.f32 %v2721, %v2872
          %v2877 = vsub.f32 %v2726, %v2872
          %v2878 = vsub.f32 %v2729, %v2872
          %v2879 = vsub.f32 %v2734, %v2872
          %v2880 = vsub.f32 %v2737, %v2872
          %v2881 = vsub.f32 %v2742, %v2872
          %v2882 = vsub.f32 %v2745, %v2872
          %v2883 = vsub.f32 %v2750, %v2872
          %v2884 = vsub.f32 %v2753, %v2872
          %v2885 = vsub.f32 %v2758, %v2872
          %v2886 = vsub.f32 %v2761, %v2872
          %v2887 = vsub.f32 %v2766, %v2872
          %v2888 = vsub.f32 %v2769, %v2872
          %v2889 = vsub.f32 %v2774, %v2872
          %v2890 = vsub.f32 %v2777, %v2872
          %v2891 = vsub.f32 %v2782, %v2872
          %v2892 = vsub.f32 %v2785, %v2872
          %v2893 = vsub.f32 %v2790, %v2872
          %v2894 = vsub.f32 %v2793, %v2872
          %v2895 = vsub.f32 %v2798, %v2872
          %v2896 = vsub.f32 %v2801, %v2872
          %v2897 = vsub.f32 %v2806, %v2872
          %v2898 = vsub.f32 %v2809, %v2872
          %v2899 = vsub.f32 %v2814, %v2872
          %v2900 = vsub.f32 %v2817, %v2872
          %v2901 = vsub.f32 %v2822, %v2872
          %v2902 = vsub.f32 %v2825, %v2872
          %v2903 = vsub.f32 %v2830, %v2872
          %v2904 = vsub.f32 %v2833, %v2872
          %v2905 = vmul.f32 %v2873, 1.442695
          %v2906 = vpow.pop %v2905
          %v2907 = vmul.f32 %v2874, 1.442695
          %v2908 = vpow.pop %v2907
          %v2909 = vmul.f32 %v2875, 1.442695
          %v2910 = vpow.pop %v2909
          %v2911 = vmul.f32 %v2876, 1.442695
          %v2912 = vpow.pop %v2911
          %v2913 = vmul.f32 %v2877, 1.442695
          %v2914 = vpow.pop %v2913
          %v2915 = vmul.f32 %v2878, 1.442695
          %v2916 = vpow.pop %v2915
          %v2917 = vmul.f32 %v2879, 1.442695
          %v2918 = vpow.pop %v2917
          %v2919 = vmul.f32 %v2880, 1.442695
          %v2920 = vpow.pop %v2919
          %v2921 = vmul.f32 %v2881, 1.442695
          %v2922 = vpow.pop %v2921
          %v2923 = vmul.f32 %v2882, 1.442695
          %v2924 = vpow.pop %v2923
          %v2925 = vmul.f32 %v2883, 1.442695
          %v2926 = vpow.pop %v2925
          %v2927 = vmul.f32 %v2884, 1.442695
          %v2928 = vpow.pop %v2927
          %v2929 = vmul.f32 %v2885, 1.442695
          %v2930 = vpow.pop %v2929
          %v2931 = vmul.f32 %v2886, 1.442695
          %v2932 = vpow.pop %v2931
          %v2933 = vmul.f32 %v2887, 1.442695
          %v2934 = vpow.pop %v2933
          %v2935 = vmul.f32 %v2888, 1.442695
          %v2936 = vpow.pop %v2935
          %v2937 = vmul.f32 %v2889, 1.442695
          %v2938 = vpow.pop %v2937
          %v2939 = vmul.f32 %v2890, 1.442695
          %v2940 = vpow.pop %v2939
          %v2941 = vmul.f32 %v2891, 1.442695
          %v2942 = vpow.pop %v2941
          %v2943 = vmul.f32 %v2892, 1.442695
          %v2944 = vpow.pop %v2943
          %v2945 = vmul.f32 %v2893, 1.442695
          %v2946 = vpow.pop %v2945
          %v2947 = vmul.f32 %v2894, 1.442695
          %v2948 = vpow.pop %v2947
          %v2949 = vmul.f32 %v2895, 1.442695
          %v2950 = vpow.pop %v2949
          %v2951 = vmul.f32 %v2896, 1.442695
          %v2952 = vpow.pop %v2951
          %v2953 = vmul.f32 %v2897, 1.442695
          %v2954 = vpow.pop %v2953
          %v2955 = vmul.f32 %v2898, 1.442695
          %v2956 = vpow.pop %v2955
          %v2957 = vmul.f32 %v2899, 1.442695
          %v2958 = vpow.pop %v2957
          %v2959 = vmul.f32 %v2900, 1.442695
          %v2960 = vpow.pop %v2959
          %v2961 = vmul.f32 %v2901, 1.442695
          %v2962 = vpow.pop %v2961
          %v2963 = vmul.f32 %v2902, 1.442695
          %v2964 = vpow.pop %v2963
          %v2965 = vmul.f32 %v2903, 1.442695
          %v2966 = vpow.pop %v2965
          %v2967 = vmul.f32 %v2904, 1.442695
          %v2968 = vpow.pop %v2967
          %v2969 = vadd.f32 %v2906, %v2908
          %v2970 = vadd.f32 %v2969, %v2910
          %v2971 = vadd.f32 %v2970, %v2912
          %v2972 = vadd.f32 %v2971, %v2914
          %v2973 = vadd.f32 %v2972, %v2916
          %v2974 = vadd.f32 %v2973, %v2918
          %v2975 = vadd.f32 %v2974, %v2920
          %v2976 = vadd.f32 %v2975, %v2922
          %v2977 = vadd.f32 %v2976, %v2924
          %v2978 = vadd.f32 %v2977, %v2926
          %v2979 = vadd.f32 %v2978, %v2928
          %v2980 = vadd.f32 %v2979, %v2930
          %v2981 = vadd.f32 %v2980, %v2932
          %v2982 = vadd.f32 %v2981, %v2934
          %v2983 = vadd.f32 %v2982, %v2936
          %v2984 = vadd.f32 %v2983, %v2938
          %v2985 = vadd.f32 %v2984, %v2940
          %v2986 = vadd.f32 %v2985, %v2942
          %v2987 = vadd.f32 %v2986, %v2944
          %v2988 = vadd.f32 %v2987, %v2946
          %v2989 = vadd.f32 %v2988, %v2948
          %v2990 = vadd.f32 %v2989, %v2950
          %v2991 = vadd.f32 %v2990, %v2952
          %v2992 = vadd.f32 %v2991, %v2954
          %v2993 = vadd.f32 %v2992, %v2956
          %v2994 = vadd.f32 %v2993, %v2958
          %v2995 = vadd.f32 %v2994, %v2960
          %v2996 = vadd.f32 %v2995, %v2962
          %v2997 = vadd.f32 %v2996, %v2964
          %v2998 = vadd.f32 %v2997, %v2966
          %v2999 = vadd.f32 %v2998, %v2968
          %v3000 = vrot.slane %v2999, 4
          %v3001 = vadd.f32 %v2999, %v3000
          %v3002 = vrot.slane %v3001, 2
          %v3003 = vadd.f32 %v3001, %v3002
          %v3004 = vrot.slane %v3003, 1
          %v3005 = vadd.f32 %v3003, %v3004
          %v3006 = vrcp.pop %v3005
          %v3007 = vpack.c.bf16 %v2908, %v2906
          %v3008 = vpack.c.bf16 %v2912, %v2910
          %v3009 = vpack.c.bf16 %v2916, %v2914
          %v3010 = vpack.c.bf16 %v2920, %v2918
          %v3011 = vpack.c.bf16 %v2924, %v2922
          %v3012 = vpack.c.bf16 %v2928, %v2926
          %v3013 = vpack.c.bf16 %v2932, %v2930
          %v3014 = vpack.c.bf16 %v2936, %v2934
          %v3015 = vpack.c.bf16 %v2940, %v2938
          %v3016 = vpack.c.bf16 %v2944, %v2942
          %v3017 = vpack.c.bf16 %v2948, %v2946
          %v3018 = vpack.c.bf16 %v2952, %v2950
          %v3019 = vpack.c.bf16 %v2956, %v2954
          %v3020 = vpack.c.bf16 %v2960, %v2958
          %v3021 = vpack.c.bf16 %v2964, %v2962
          %v3022 = vpack.c.bf16 %v2968, %v2966
          %3023 = vmatprep.subr.bf16.mxu0 0
          %3024 = vmatpush1.bf16.msra.mxu0 %v3014
          %3025 = vmatprep.subr.bf16.mxu0 0
          %3026 = vmatpush1.bf16.msra.mxu0 %v3013
          %3027 = vmatprep.subr.bf16.mxu0 0
          %3028 = vmatpush1.bf16.msra.mxu0 %v3012
          %3029 = vmatprep.subr.bf16.mxu0 0
          %3030 = vmatpush1.bf16.msra.mxu0 %v3011
          %3031 = vmatprep.subr.bf16.mxu0 0
          %3032 = vmatpush1.bf16.msra.mxu0 %v3010
          %3033 = vmatprep.subr.bf16.mxu0 0
          %3034 = vmatpush1.bf16.msra.mxu0 %v3009
          %3035 = vmatprep.subr.bf16.mxu0 0
          %3036 = vmatpush1.bf16.msra.mxu0 %v3008
          %3037 = vmatprep.subr.bf16.mxu0 0
          %3038 = vmatpush1.bf16.msra.mxu0 %v3007
          %3039 = vmatprep.subr.bf16.mxu0 0
          %3040 = vmatpush2.bf16.msra.mxu0 %v3022
          %3041 = vmatprep.subr.bf16.mxu0 0
          %3042 = vmatpush2.bf16.msra.mxu0 %v3021
          %3043 = vmatprep.subr.bf16.mxu0 0
          %3044 = vmatpush2.bf16.msra.mxu0 %v3020
          %3045 = vmatprep.subr.bf16.mxu0 0
          %3046 = vmatpush2.bf16.msra.mxu0 %v3019
          %3047 = vmatprep.subr.bf16.mxu0 0
          %3048 = vmatpush2.bf16.msra.mxu0 %v3018
          %3049 = vmatprep.subr.bf16.mxu0 0
          %3050 = vmatpush2.bf16.msra.mxu0 %v3017
          %3051 = vmatprep.subr.bf16.mxu0 0
          %3052 = vmatpush2.bf16.msra.mxu0 %v3016
          %3053 = vmatprep.subr.bf16.mxu0 0
          %3054 = vmatpush2.bf16.msra.mxu0 %v3015
          %3055 = vmatprep.mubr.bf16.mxu0 %v2589
          %3056 = vmatmul.mubr.bf16.gmra.mxu0 %v2588
          %v3057 = vpop.f32.mrf.mxu0
          %v3058 = vadd.f32 0.0, %v3057
          %v3059 = vpop.f32.mrf.mxu0
          %v3060 = vpop.f32.mrf.mxu0
          %v3061 = vpop.f32.mrf.mxu0
          %3062 = vdwg.mxu0
          %v3063 = vmul.f32 %v3058, %v3006
          %s3064 = smul.addr %s2567, 8
          %s3065 = scalar_lea.vmem [#allocation3], %s3064
          %3066 = vst [vmem:[%s3065] sm:$0xff] %v3063
        $region83: #{tpu_custom_call.1} parent=63 // loop_footer
          %s2561 = sadd.s32 1, %s2557
        $region84: #{tpu_custom_call.1} parent=63 // loop_footer_branch
          %2556 = sbr.rel target = $region80
        $region85: #{tpu_custom_call.1} parent=63 // loop_exit
          _
        loop: start=0, step=1, limit=8
        $region86: #{tpu_custom_call.1} parent=63 // loop_pre_header
          _
        $region87: #{tpu_custom_call.1} parent=63 // loop_header
          %s3068 = sphi 0, %s3072
          %p3069 = scmp.ge.s32.totalorder %s3068, 8
        $region88: #{tpu_custom_call.1} parent=63 // loop_header_branch
          %3071 = sbr.rel (%p3069) target = $region92
        $region89: #{tpu_custom_call.1} parent=63 // loop_body
          %s3073 = smul.u32 %s3068, 8
          %s3074 = sadd.s32 %s3073, 64
          %s3075 = sadd.s32 %s3073, 128
          %s3076 = sshra.s32 %s3073, 3
          %s3077 = sand.u32 %s3073, 7
          %s3078 = smul.u32 %s3076, 2
          %s3079 = smul.addr %s3078, 8
          %s3080 = scalar_lea.vmem [#allocation2], %s3079
          %v3081 = vld [vmem:[%s3080 + $0x8] sm:$0xff]
          %v3082 = vpack.c.bf16 %v3081, %v3081
          %s3083 = sshra.s32 %s3074, 3
          %s3084 = sand.u32 %s3074, 7
          %s3085 = smul.u32 %s3083, 2
          %s3086 = smul.addr %s3085, 8
          %s3087 = scalar_lea.vmem [#allocation2], %s3086
          %v3088 = vld [vmem:[%s3087] sm:$0xff]
          %v3089 = vld [vmem:[%s3087 + $0x8] sm:$0xff]
          %v3090 = vpack.c.bf16 %v3088, %v3088
          %v3091 = vpack.c.bf16 %v3089, %v3089
          %s3092 = sshra.s32 %s3075, 3
          %s3093 = sand.u32 %s3075, 7
          %s3094 = smul.u32 %s3092, 2
          %s3095 = smul.addr %s3094, 8
          %s3096 = scalar_lea.vmem [#allocation2], %s3095
          %v3097 = vld [vmem:[%s3096] sm:$0xff]
          %v3098 = vld [vmem:[%s3096 + $0x8] sm:$0xff]
          %v3099 = vpack.c.bf16 %v3097, %v3097
          %v3100 = vpack.c.bf16 %v3098, %v3098
          %3101 = vxpose.xlu0.c.b16.start [1/8] %v3090, 128
          %3102 = vxpose.xlu0.c.b16.cont [2/8] 0, 128
          %3103 = vxpose.xlu0.c.b16.cont [3/8] 0, 128
          %3104 = vxpose.xlu0.c.b16.cont [4/8] 0, 128
          %3105 = vxpose.xlu0.c.b16.cont [5/8] 0, 128
          %3106 = vxpose.xlu0.c.b16.cont [6/8] 0, 128
          %3107 = vxpose.xlu0.c.b16.cont [7/8] 0, 128
          %3108 = vxpose.xlu0.c.b16.end [8/8] 0, 128
          %v3109 = vpop.trf.xlu0
          %v3110 = vpop.trf.xlu0
          %v3111 = vpop.trf.xlu0
          %v3112 = vpop.trf.xlu0
          %v3113 = vpop.trf.xlu0
          %v3114 = vpop.trf.xlu0
          %v3115 = vpop.trf.xlu0
          %v3116 = vpop.trf.xlu0
          %3117 = vxpose.xlu0.c.b16.start [1/8] %v3091, 128
          %3118 = vxpose.xlu0.c.b16.cont [2/8] 0, 128
          %3119 = vxpose.xlu0.c.b16.cont [3/8] 0, 128
          %3120 = vxpose.xlu0.c.b16.cont [4/8] 0, 128
          %3121 = vxpose.xlu0.c.b16.cont [5/8] 0, 128
          %3122 = vxpose.xlu0.c.b16.cont [6/8] 0, 128
          %3123 = vxpose.xlu0.c.b16.cont [7/8] 0, 128
          %3124 = vxpose.xlu0.c.b16.end [8/8] 0, 128
          %v3125 = vpop.trf.xlu0
          %v3126 = vpop.trf.xlu0
          %v3127 = vpop.trf.xlu0
          %v3128 = vpop.trf.xlu0
          %v3129 = vpop.trf.xlu0
          %v3130 = vpop.trf.xlu0
          %v3131 = vpop.trf.xlu0
          %v3132 = vpop.trf.xlu0
          %vm3133 = vcmask 64512
          %v3135 = vsel %vm3133, %v3109, 0
          %v3138 = vsel %vm3133, %v3110, 0
          %v3141 = vsel %vm3133, %v3111, 0
          %v3144 = vsel %vm3133, %v3112, 0
          %v3147 = vsel %vm3133, %v3113, 0
          %v3150 = vsel %vm3133, %v3114, 0
          %v3153 = vsel %vm3133, %v3115, 0
          %v3156 = vsel %vm3133, %v3116, 0
          %v3159 = vsel %vm3133, %v3125, 0
          %v3162 = vsel %vm3133, %v3126, 0
          %v3165 = vsel %vm3133, %v3127, 0
          %v3168 = vsel %vm3133, %v3128, 0
          %v3171 = vsel %vm3133, %v3129, 0
          %v3174 = vsel %vm3133, %v3130, 0
          %v3177 = vsel %vm3133, %v3131, 0
          %v3180 = vsel %vm3133, %v3132, 0
          %vm3182 = vcmask 1043456
          %v3184 = vsel %vm3182, %v3082, 0
          %3186 = vmatprep.subr.bf16.mxu0 0
          %3187 = vmatpush1.bf16.msra.mxu0 0
          %3188 = vmatprep.subr.bf16.mxu0 0
          %3189 = vmatpush1.bf16.msra.mxu0 0
          %3190 = vmatprep.subr.bf16.mxu0 0
          %3191 = vmatpush1.bf16.msra.mxu0 0
          %3192 = vmatprep.subr.bf16.mxu0 0
          %3193 = vmatpush1.bf16.msra.mxu0 0
          %3194 = vmatprep.subr.bf16.mxu0 0
          %3195 = vmatpush1.bf16.msra.mxu0 0
          %3196 = vmatprep.subr.bf16.mxu0 0
          %3197 = vmatpush1.bf16.msra.mxu0 0
          %3198 = vmatprep.subr.bf16.mxu0 0
          %3199 = vmatpush1.bf16.msra.mxu0 0
          %3200 = vmatprep.subr.bf16.mxu0 0
          %3201 = vmatpush1.bf16.msra.mxu0 %v3184
          %3202 = vmatprep.subr.bf16.mxu0 0
          %3203 = vmatpush2.bf16.msra.mxu0 0
          %3204 = vmatprep.subr.bf16.mxu0 0
          %3205 = vmatpush2.bf16.msra.mxu0 0
          %3206 = vmatprep.subr.bf16.mxu0 0
          %3207 = vmatpush2.bf16.msra.mxu0 0
          %3208 = vmatprep.subr.bf16.mxu0 0
          %3209 = vmatpush2.bf16.msra.mxu0 0
          %3210 = vmatprep.subr.bf16.mxu0 0
          %3211 = vmatpush2.bf16.msra.mxu0 0
          %3212 = vmatprep.subr.bf16.mxu0 0
          %3213 = vmatpush2.bf16.msra.mxu0 0
          %3214 = vmatprep.subr.bf16.mxu0 0
          %3215 = vmatpush2.bf16.msra.mxu0 0
          %3216 = vmatprep.subr.bf16.mxu0 0
          %3217 = vmatpush2.bf16.msra.mxu0 0
          %3218 = vmatprep.mubr.bf16.mxu0 0
          %3219 = vmatmul.mubr.bf16.gmra.mxu0 %v3135
          %v3220 = vpop.f32.mrf.mxu0
          %v3221 = vadd.f32 0.0, %v3220
          %v3222 = vpop.f32.mrf.mxu0
          %v3223 = vpop.f32.mrf.mxu0
          %v3224 = vadd.f32 0.0, %v3223
          %v3225 = vpop.f32.mrf.mxu0
          %3226 = vmatprep.mubr.bf16.mxu0 0
          %3227 = vmatmul.mubr.bf16.gmra.mxu0 %v3138
          %v3228 = vpop.f32.mrf.mxu0
          %v3229 = vadd.f32 0.0, %v3228
          %v3230 = vpop.f32.mrf.mxu0
          %v3231 = vpop.f32.mrf.mxu0
          %v3232 = vadd.f32 0.0, %v3231
          %v3233 = vpop.f32.mrf.mxu0
          %3234 = vmatprep.mubr.bf16.mxu0 0
          %3235 = vmatmul.mubr.bf16.gmra.mxu0 %v3141
          %v3236 = vpop.f32.mrf.mxu0
          %v3237 = vadd.f32 0.0, %v3236
          %v3238 = vpop.f32.mrf.mxu0
          %v3239 = vpop.f32.mrf.mxu0
          %v3240 = vadd.f32 0.0, %v3239
          %v3241 = vpop.f32.mrf.mxu0
          %3242 = vmatprep.mubr.bf16.mxu0 0
          %3243 = vmatmul.mubr.bf16.gmra.mxu0 %v3144
          %v3244 = vpop.f32.mrf.mxu0
          %v3245 = vadd.f32 0.0, %v3244
          %v3246 = vpop.f32.mrf.mxu0
          %v3247 = vpop.f32.mrf.mxu0
          %v3248 = vadd.f32 0.0, %v3247
          %v3249 = vpop.f32.mrf.mxu0
          %3250 = vmatprep.mubr.bf16.mxu0 0
          %3251 = vmatmul.mubr.bf16.gmra.mxu0 %v3147
          %v3252 = vpop.f32.mrf.mxu0
          %v3253 = vadd.f32 0.0, %v3252
          %v3254 = vpop.f32.mrf.mxu0
          %v3255 = vpop.f32.mrf.mxu0
          %v3256 = vadd.f32 0.0, %v3255
          %v3257 = vpop.f32.mrf.mxu0
          %3258 = vmatprep.mubr.bf16.mxu0 0
          %3259 = vmatmul.mubr.bf16.gmra.mxu0 %v3150
          %v3260 = vpop.f32.mrf.mxu0
          %v3261 = vadd.f32 0.0, %v3260
          %v3262 = vpop.f32.mrf.mxu0
          %v3263 = vpop.f32.mrf.mxu0
          %v3264 = vadd.f32 0.0, %v3263
          %v3265 = vpop.f32.mrf.mxu0
          %3266 = vmatprep.mubr.bf16.mxu0 0
          %3267 = vmatmul.mubr.bf16.gmra.mxu0 %v3153
          %v3268 = vpop.f32.mrf.mxu0
          %v3269 = vadd.f32 0.0, %v3268
          %v3270 = vpop.f32.mrf.mxu0
          %v3271 = vpop.f32.mrf.mxu0
          %v3272 = vadd.f32 0.0, %v3271
          %v3273 = vpop.f32.mrf.mxu0
          %3274 = vmatprep.mubr.bf16.mxu0 0
          %3275 = vmatmul.mubr.bf16.gmra.mxu0 %v3156
          %v3276 = vpop.f32.mrf.mxu0
          %v3277 = vadd.f32 0.0, %v3276
          %v3278 = vpop.f32.mrf.mxu0
          %v3279 = vpop.f32.mrf.mxu0
          %v3280 = vadd.f32 0.0, %v3279
          %v3281 = vpop.f32.mrf.mxu0
          %3282 = vmatprep.mubr.bf16.mxu0 0
          %3283 = vmatmul.mubr.bf16.gmra.mxu0 %v3159
          %v3284 = vpop.f32.mrf.mxu0
          %v3285 = vadd.f32 0.0, %v3284
          %v3286 = vpop.f32.mrf.mxu0
          %v3287 = vpop.f32.mrf.mxu0
          %v3288 = vadd.f32 0.0, %v3287
          %v3289 = vpop.f32.mrf.mxu0
          %3290 = vmatprep.mubr.bf16.mxu0 0
          %3291 = vmatmul.mubr.bf16.gmra.mxu0 %v3162
          %v3292 = vpop.f32.mrf.mxu0
          %v3293 = vadd.f32 0.0, %v3292
          %v3294 = vpop.f32.mrf.mxu0
          %v3295 = vpop.f32.mrf.mxu0
          %v3296 = vadd.f32 0.0, %v3295
          %v3297 = vpop.f32.mrf.mxu0
          %3298 = vmatprep.mubr.bf16.mxu0 0
          %3299 = vmatmul.mubr.bf16.gmra.mxu0 %v3165
          %v3300 = vpop.f32.mrf.mxu0
          %v3301 = vadd.f32 0.0, %v3300
          %v3302 = vpop.f32.mrf.mxu0
          %v3303 = vpop.f32.mrf.mxu0
          %v3304 = vadd.f32 0.0, %v3303
          %v3305 = vpop.f32.mrf.mxu0
          %3306 = vmatprep.mubr.bf16.mxu0 0
          %3307 = vmatmul.mubr.bf16.gmra.mxu0 %v3168
          %v3308 = vpop.f32.mrf.mxu0
          %v3309 = vadd.f32 0.0, %v3308
          %v3310 = vpop.f32.mrf.mxu0
          %v3311 = vpop.f32.mrf.mxu0
          %v3312 = vadd.f32 0.0, %v3311
          %v3313 = vpop.f32.mrf.mxu0
          %3314 = vmatprep.mubr.bf16.mxu0 0
          %3315 = vmatmul.mubr.bf16.gmra.mxu0 %v3171
          %v3316 = vpop.f32.mrf.mxu0
          %v3317 = vadd.f32 0.0, %v3316
          %v3318 = vpop.f32.mrf.mxu0
          %v3319 = vpop.f32.mrf.mxu0
          %v3320 = vadd.f32 0.0, %v3319
          %v3321 = vpop.f32.mrf.mxu0
          %3322 = vmatprep.mubr.bf16.mxu0 0
          %3323 = vmatmul.mubr.bf16.gmra.mxu0 %v3174
          %v3324 = vpop.f32.mrf.mxu0
          %v3325 = vadd.f32 0.0, %v3324
          %v3326 = vpop.f32.mrf.mxu0
          %v3327 = vpop.f32.mrf.mxu0
          %v3328 = vadd.f32 0.0, %v3327
          %v3329 = vpop.f32.mrf.mxu0
          %3330 = vmatprep.mubr.bf16.mxu0 0
          %3331 = vmatmul.mubr.bf16.gmra.mxu0 %v3177
          %v3332 = vpop.f32.mrf.mxu0
          %v3333 = vadd.f32 0.0, %v3332
          %v3334 = vpop.f32.mrf.mxu0
          %v3335 = vpop.f32.mrf.mxu0
          %v3336 = vadd.f32 0.0, %v3335
          %v3337 = vpop.f32.mrf.mxu0
          %3338 = vmatprep.mubr.bf16.mxu0 0
          %3339 = vmatmul.mubr.bf16.gmra.mxu0 %v3180
          %v3340 = vpop.f32.mrf.mxu0
          %v3341 = vadd.f32 0.0, %v3340
          %v3342 = vpop.f32.mrf.mxu0
          %v3343 = vpop.f32.mrf.mxu0
          %v3344 = vadd.f32 0.0, %v3343
          %v3345 = vpop.f32.mrf.mxu0
          %3346 = vdwg.mxu0
          %v3347 = vmax.f32 %v3221, %v3237
          %v3348 = vmax.f32 %v3224, %v3240
          %v3349 = vmax.f32 %v3229, %v3245
          %v3350 = vmax.f32 %v3232, %v3248
          %v3351 = vmax.f32 %v3347, %v3253
          %v3352 = vmax.f32 %v3348, %v3256
          %v3353 = vmax.f32 %v3349, %v3261
          %v3354 = vmax.f32 %v3350, %v3264
          %v3355 = vmax.f32 %v3351, %v3269
          %v3356 = vmax.f32 %v3352, %v3272
          %v3357 = vmax.f32 %v3353, %v3277
          %v3358 = vmax.f32 %v3354, %v3280
          %v3359 = vmax.f32 %v3355, %v3285
          %v3360 = vmax.f32 %v3356, %v3288
          %v3361 = vmax.f32 %v3357, %v3293
          %v3362 = vmax.f32 %v3358, %v3296
          %v3363 = vmax.f32 %v3359, %v3301
          %v3364 = vmax.f32 %v3360, %v3304
          %v3365 = vmax.f32 %v3361, %v3309
          %v3366 = vmax.f32 %v3362, %v3312
          %v3367 = vmax.f32 %v3363, %v3317
          %v3368 = vmax.f32 %v3364, %v3320
          %v3369 = vmax.f32 %v3365, %v3325
          %v3370 = vmax.f32 %v3366, %v3328
          %v3371 = vmax.f32 %v3367, %v3333
          %v3372 = vmax.f32 %v3368, %v3336
          %v3373 = vmax.f32 %v3369, %v3341
          %v3374 = vmax.f32 %v3370, %v3344
          %v3375 = vmax.f32 %v3371, %v3372
          %v3376 = vmax.f32 %v3373, %v3374
          %v3377 = vmax.f32 %v3375, %v3376
          %v3378 = vrot.slane %v3377, 4
          %v3379 = vmax.f32 %v3377, %v3378
          %v3380 = vrot.slane %v3379, 2
          %v3381 = vmax.f32 %v3379, %v3380
          %v3382 = vrot.slane %v3381, 1
          %v3383 = vmax.f32 %v3381, %v3382
          %v3384 = vsub.f32 %v3221, %v3383
          %v3385 = vsub.f32 %v3224, %v3383
          %v3386 = vsub.f32 %v3229, %v3383
          %v3387 = vsub.f32 %v3232, %v3383
          %v3388 = vsub.f32 %v3237, %v3383
          %v3389 = vsub.f32 %v3240, %v3383
          %v3390 = vsub.f32 %v3245, %v3383
          %v3391 = vsub.f32 %v3248, %v3383
          %v3392 = vsub.f32 %v3253, %v3383
          %v3393 = vsub.f32 %v3256, %v3383
          %v3394 = vsub.f32 %v3261, %v3383
          %v3395 = vsub.f32 %v3264, %v3383
          %v3396 = vsub.f32 %v3269, %v3383
          %v3397 = vsub.f32 %v3272, %v3383
          %v3398 = vsub.f32 %v3277, %v3383
          %v3399 = vsub.f32 %v3280, %v3383
          %v3400 = vsub.f32 %v3285, %v3383
          %v3401 = vsub.f32 %v3288, %v3383
          %v3402 = vsub.f32 %v3293, %v3383
          %v3403 = vsub.f32 %v3296, %v3383
          %v3404 = vsub.f32 %v3301, %v3383
          %v3405 = vsub.f32 %v3304, %v3383
          %v3406 = vsub.f32 %v3309, %v3383
          %v3407 = vsub.f32 %v3312, %v3383
          %v3408 = vsub.f32 %v3317, %v3383
          %v3409 = vsub.f32 %v3320, %v3383
          %v3410 = vsub.f32 %v3325, %v3383
          %v3411 = vsub.f32 %v3328, %v3383
          %v3412 = vsub.f32 %v3333, %v3383
          %v3413 = vsub.f32 %v3336, %v3383
          %v3414 = vsub.f32 %v3341, %v3383
          %v3415 = vsub.f32 %v3344, %v3383
          %v3416 = vmul.f32 %v3384, 1.442695
          %v3417 = vpow.pop %v3416
          %v3418 = vmul.f32 %v3385, 1.442695
          %v3419 = vpow.pop %v3418
          %v3420 = vmul.f32 %v3386, 1.442695
          %v3421 = vpow.pop %v3420
          %v3422 = vmul.f32 %v3387, 1.442695
          %v3423 = vpow.pop %v3422
          %v3424 = vmul.f32 %v3388, 1.442695
          %v3425 = vpow.pop %v3424
          %v3426 = vmul.f32 %v3389, 1.442695
          %v3427 = vpow.pop %v3426
          %v3428 = vmul.f32 %v3390, 1.442695
          %v3429 = vpow.pop %v3428
          %v3430 = vmul.f32 %v3391, 1.442695
          %v3431 = vpow.pop %v3430
          %v3432 = vmul.f32 %v3392, 1.442695
          %v3433 = vpow.pop %v3432
          %v3434 = vmul.f32 %v3393, 1.442695
          %v3435 = vpow.pop %v3434
          %v3436 = vmul.f32 %v3394, 1.442695
          %v3437 = vpow.pop %v3436
          %v3438 = vmul.f32 %v3395, 1.442695
          %v3439 = vpow.pop %v3438
          %v3440 = vmul.f32 %v3396, 1.442695
          %v3441 = vpow.pop %v3440
          %v3442 = vmul.f32 %v3397, 1.442695
          %v3443 = vpow.pop %v3442
          %v3444 = vmul.f32 %v3398, 1.442695
          %v3445 = vpow.pop %v3444
          %v3446 = vmul.f32 %v3399, 1.442695
          %v3447 = vpow.pop %v3446
          %v3448 = vmul.f32 %v3400, 1.442695
          %v3449 = vpow.pop %v3448
          %v3450 = vmul.f32 %v3401, 1.442695
          %v3451 = vpow.pop %v3450
          %v3452 = vmul.f32 %v3402, 1.442695
          %v3453 = vpow.pop %v3452
          %v3454 = vmul.f32 %v3403, 1.442695
          %v3455 = vpow.pop %v3454
          %v3456 = vmul.f32 %v3404, 1.442695
          %v3457 = vpow.pop %v3456
          %v3458 = vmul.f32 %v3405, 1.442695
          %v3459 = vpow.pop %v3458
          %v3460 = vmul.f32 %v3406, 1.442695
          %v3461 = vpow.pop %v3460
          %v3462 = vmul.f32 %v3407, 1.442695
          %v3463 = vpow.pop %v3462
          %v3464 = vmul.f32 %v3408, 1.442695
          %v3465 = vpow.pop %v3464
          %v3466 = vmul.f32 %v3409, 1.442695
          %v3467 = vpow.pop %v3466
          %v3468 = vmul.f32 %v3410, 1.442695
          %v3469 = vpow.pop %v3468
          %v3470 = vmul.f32 %v3411, 1.442695
          %v3471 = vpow.pop %v3470
          %v3472 = vmul.f32 %v3412, 1.442695
          %v3473 = vpow.pop %v3472
          %v3474 = vmul.f32 %v3413, 1.442695
          %v3475 = vpow.pop %v3474
          %v3476 = vmul.f32 %v3414, 1.442695
          %v3477 = vpow.pop %v3476
          %v3478 = vmul.f32 %v3415, 1.442695
          %v3479 = vpow.pop %v3478
          %v3480 = vadd.f32 %v3417, %v3419
          %v3481 = vadd.f32 %v3480, %v3421
          %v3482 = vadd.f32 %v3481, %v3423
          %v3483 = vadd.f32 %v3482, %v3425
          %v3484 = vadd.f32 %v3483, %v3427
          %v3485 = vadd.f32 %v3484, %v3429
          %v3486 = vadd.f32 %v3485, %v3431
          %v3487 = vadd.f32 %v3486, %v3433
          %v3488 = vadd.f32 %v3487, %v3435
          %v3489 = vadd.f32 %v3488, %v3437
          %v3490 = vadd.f32 %v3489, %v3439
          %v3491 = vadd.f32 %v3490, %v3441
          %v3492 = vadd.f32 %v3491, %v3443
          %v3493 = vadd.f32 %v3492, %v3445
          %v3494 = vadd.f32 %v3493, %v3447
          %v3495 = vadd.f32 %v3494, %v3449
          %v3496 = vadd.f32 %v3495, %v3451
          %v3497 = vadd.f32 %v3496, %v3453
          %v3498 = vadd.f32 %v3497, %v3455
          %v3499 = vadd.f32 %v3498, %v3457
          %v3500 = vadd.f32 %v3499, %v3459
          %v3501 = vadd.f32 %v3500, %v3461
          %v3502 = vadd.f32 %v3501, %v3463
          %v3503 = vadd.f32 %v3502, %v3465
          %v3504 = vadd.f32 %v3503, %v3467
          %v3505 = vadd.f32 %v3504, %v3469
          %v3506 = vadd.f32 %v3505, %v3471
          %v3507 = vadd.f32 %v3506, %v3473
          %v3508 = vadd.f32 %v3507, %v3475
          %v3509 = vadd.f32 %v3508, %v3477
          %v3510 = vadd.f32 %v3509, %v3479
          %v3511 = vrot.slane %v3510, 4
          %v3512 = vadd.f32 %v3510, %v3511
          %v3513 = vrot.slane %v3512, 2
          %v3514 = vadd.f32 %v3512, %v3513
          %v3515 = vrot.slane %v3514, 1
          %v3516 = vadd.f32 %v3514, %v3515
          %v3517 = vrcp.pop %v3516
          %v3518 = vpack.c.bf16 %v3419, %v3417
          %v3519 = vpack.c.bf16 %v3423, %v3421
          %v3520 = vpack.c.bf16 %v3427, %v3425
          %v3521 = vpack.c.bf16 %v3431, %v3429
          %v3522 = vpack.c.bf16 %v3435, %v3433
          %v3523 = vpack.c.bf16 %v3439, %v3437
          %v3524 = vpack.c.bf16 %v3443, %v3441
          %v3525 = vpack.c.bf16 %v3447, %v3445
          %v3526 = vpack.c.bf16 %v3451, %v3449
          %v3527 = vpack.c.bf16 %v3455, %v3453
          %v3528 = vpack.c.bf16 %v3459, %v3457
          %v3529 = vpack.c.bf16 %v3463, %v3461
          %v3530 = vpack.c.bf16 %v3467, %v3465
          %v3531 = vpack.c.bf16 %v3471, %v3469
          %v3532 = vpack.c.bf16 %v3475, %v3473
          %v3533 = vpack.c.bf16 %v3479, %v3477
          %3534 = vmatprep.subr.bf16.mxu0 0
          %3535 = vmatpush1.bf16.msra.mxu0 %v3525
          %3536 = vmatprep.subr.bf16.mxu0 0
          %3537 = vmatpush1.bf16.msra.mxu0 %v3524
          %3538 = vmatprep.subr.bf16.mxu0 0
          %3539 = vmatpush1.bf16.msra.mxu0 %v3523
          %3540 = vmatprep.subr.bf16.mxu0 0
          %3541 = vmatpush1.bf16.msra.mxu0 %v3522
          %3542 = vmatprep.subr.bf16.mxu0 0
          %3543 = vmatpush1.bf16.msra.mxu0 %v3521
          %3544 = vmatprep.subr.bf16.mxu0 0
          %3545 = vmatpush1.bf16.msra.mxu0 %v3520
          %3546 = vmatprep.subr.bf16.mxu0 0
          %3547 = vmatpush1.bf16.msra.mxu0 %v3519
          %3548 = vmatprep.subr.bf16.mxu0 0
          %3549 = vmatpush1.bf16.msra.mxu0 %v3518
          %3550 = vmatprep.subr.bf16.mxu0 0
          %3551 = vmatpush2.bf16.msra.mxu0 %v3533
          %3552 = vmatprep.subr.bf16.mxu0 0
          %3553 = vmatpush2.bf16.msra.mxu0 %v3532
          %3554 = vmatprep.subr.bf16.mxu0 0
          %3555 = vmatpush2.bf16.msra.mxu0 %v3531
          %3556 = vmatprep.subr.bf16.mxu0 0
          %3557 = vmatpush2.bf16.msra.mxu0 %v3530
          %3558 = vmatprep.subr.bf16.mxu0 0
          %3559 = vmatpush2.bf16.msra.mxu0 %v3529
          %3560 = vmatprep.subr.bf16.mxu0 0
          %3561 = vmatpush2.bf16.msra.mxu0 %v3528
          %3562 = vmatprep.subr.bf16.mxu0 0
          %3563 = vmatpush2.bf16.msra.mxu0 %v3527
          %3564 = vmatprep.subr.bf16.mxu0 0
          %3565 = vmatpush2.bf16.msra.mxu0 %v3526
          %3566 = vmatprep.mubr.bf16.mxu0 %v3100
          %3567 = vmatmul.mubr.bf16.gmra.mxu0 %v3099
          %v3568 = vpop.f32.mrf.mxu0
          %v3569 = vadd.f32 0.0, %v3568
          %v3570 = vpop.f32.mrf.mxu0
          %v3571 = vpop.f32.mrf.mxu0
          %v3572 = vpop.f32.mrf.mxu0
          %3573 = vdwg.mxu0
          %v3574 = vmul.f32 %v3569, %v3517
          %s3575 = smul.addr %s3078, 8
          %s3576 = scalar_lea.vmem [#allocation3], %s3575
          %3577 = vst [vmem:[%s3576 + $0x8] sm:$0xff] %v3574
        $region90: #{tpu_custom_call.1} parent=63 // loop_footer
          %s3072 = sadd.s32 1, %s3068
        $region91: #{tpu_custom_call.1} parent=63 // loop_footer_branch
          %3067 = sbr.rel target = $region87
        $region92: #{tpu_custom_call.1} parent=63 // loop_exit
          _
        %v3578 = vld [vmem:[%s7] sm:$0xf]
        %v3579 = vld [vmem:[%s7 + $0x4] sm:$0xf]
        %v3580 = vld [vmem:[%s7 + $0x8] sm:$0xf]
        %v3581 = vld [vmem:[%s7 + $0xc] sm:$0xf]
        %v3582 = vld [vmem:[%s7 + $0x10] sm:$0xf]
        %v3583 = vld [vmem:[%s7 + $0x14] sm:$0xf]
        %v3584 = vld [vmem:[%s7 + $0x18] sm:$0xf]
        %v3585 = vld [vmem:[%s7 + $0x1c] sm:$0xf]
        %v3586 = vld [vmem:[#allocation3] sm:$0xff]
        %v3587 = vld [vmem:[#allocation3 + $0x8] sm:$0xff]
        %v3588 = vld [vmem:[#allocation3 + $0x10] sm:$0xff]
        %v3589 = vld [vmem:[#allocation3 + $0x18] sm:$0xff]
        %v3590 = vld [vmem:[#allocation3 + $0x20] sm:$0xff]
        %v3591 = vld [vmem:[#allocation3 + $0x28] sm:$0xff]
        %v3592 = vld [vmem:[#allocation3 + $0x30] sm:$0xff]
        %v3593 = vld [vmem:[#allocation3 + $0x38] sm:$0xff]
        %v3594 = vld [vmem:[#allocation3 + $0x40] sm:$0xff]
        %v3595 = vld [vmem:[#allocation3 + $0x48] sm:$0xff]
        %v3596 = vld [vmem:[#allocation3 + $0x50] sm:$0xff]
        %v3597 = vld [vmem:[#allocation3 + $0x58] sm:$0xff]
        %v3598 = vld [vmem:[#allocation3 + $0x60] sm:$0xff]
        %v3599 = vld [vmem:[#allocation3 + $0x68] sm:$0xff]
        %v3600 = vld [vmem:[#allocation3 + $0x70] sm:$0xff]
        %v3601 = vld [vmem:[#allocation3 + $0x78] sm:$0xff]
        %v3602 = vpack.c.bf16 %v3588, %v3586
        %v3603 = vpack.c.bf16 %v3589, %v3587
        %v3604 = vpack.c.bf16 %v3592, %v3590
        %v3605 = vpack.c.bf16 %v3593, %v3591
        %v3606 = vpack.c.bf16 %v3596, %v3594
        %v3607 = vpack.c.bf16 %v3597, %v3595
        %v3608 = vpack.c.bf16 %v3600, %v3598
        %v3609 = vpack.c.bf16 %v3601, %v3599
        %v3610 = vld [vmem:[%s8] sm:$0xff]
        %v3611 = vld [vmem:[%s8 + $0x8] sm:$0xff]
        %v3612 = vld [vmem:[%s8 + $0x10] sm:$0xff]
        %v3613 = vld [vmem:[%s8 + $0x18] sm:$0xff]
        %v3614 = vld [vmem:[%s8 + $0x20] sm:$0xff]
        %v3615 = vld [vmem:[%s8 + $0x28] sm:$0xff]
        %v3616 = vld [vmem:[%s8 + $0x30] sm:$0xff]
        %v3617 = vld [vmem:[%s8 + $0x38] sm:$0xff]
        %3619 = vset.pattern.permute.xlu0 0
        %3620 = vperm.xlu0 %3619, %v3610
        %v3621 = vpop.permute.xlu0 %3620
        %3624 = vset.pattern.permute.xlu0 0
        %3625 = vperm.xlu0 %3624, %v3611
        %v3626 = vpop.permute.xlu0 %3625
        %3629 = vset.pattern.permute.xlu0 0
        %3630 = vperm.xlu0 %3629, %v3612
        %v3631 = vpop.permute.xlu0 %3630
        %3634 = vset.pattern.permute.xlu0 0
        %3635 = vperm.xlu0 %3634, %v3613
        %v3636 = vpop.permute.xlu0 %3635
        %3639 = vset.pattern.permute.xlu0 0
        %3640 = vperm.xlu0 %3639, %v3614
        %v3641 = vpop.permute.xlu0 %3640
        %3644 = vset.pattern.permute.xlu0 0
        %3645 = vperm.xlu0 %3644, %v3615
        %v3646 = vpop.permute.xlu0 %3645
        %3649 = vset.pattern.permute.xlu0 0
        %3650 = vperm.xlu0 %3649, %v3616
        %v3651 = vpop.permute.xlu0 %3650
        %3654 = vset.pattern.permute.xlu0 0
        %3655 = vperm.xlu0 %3654, %v3617
        %v3656 = vpop.permute.xlu0 %3655
        %v3666 = vunpack.c.l.b16 %v3578
        %v3667 = vunpack.c.l.b16 %v3579
        %v3668 = vunpack.c.l.b16 %v3580
        %v3669 = vunpack.c.l.b16 %v3581
        %v3670 = vunpack.c.l.b16 %v3582
        %v3671 = vunpack.c.l.b16 %v3583
        %v3672 = vunpack.c.l.b16 %v3584
        %v3673 = vunpack.c.l.b16 %v3585
        %v3674 = vpack.c.b16 %v3667, %v3666
        %v3675 = vpack.c.b16 %v3669, %v3668
        %v3676 = vpack.c.b16 %v3671, %v3670
        %v3677 = vpack.c.b16 %v3673, %v3672
        %v3679 = vsel %vm638, %v3674, 0
        %v3682 = vsel %vm638, %v3675, 0
        %v3685 = vsel %vm638, %v3676, 0
        %v3688 = vsel %vm638, %v3677, 0
        %3690 = vmatprep.subr.bf16.mxu0 0
        %3691 = vmatpush1.bf16.msra.mxu0 0
        %3692 = vmatprep.subr.bf16.mxu0 0
        %3693 = vmatpush1.bf16.msra.mxu0 0
        %3694 = vmatprep.subr.bf16.mxu0 0
        %3695 = vmatpush1.bf16.msra.mxu0 0
        %3696 = vmatprep.subr.bf16.mxu0 0
        %3697 = vmatpush1.bf16.msra.mxu0 0
        %3698 = vmatprep.subr.bf16.mxu0 %v3609
        %3699 = vmatpush1.bf16.msra.mxu0 %v3608
        %3700 = vmatprep.subr.bf16.mxu0 %v3607
        %3701 = vmatpush1.bf16.msra.mxu0 %v3606
        %3702 = vmatprep.subr.bf16.mxu0 %v3605
        %3703 = vmatpush1.bf16.msra.mxu0 %v3604
        %3704 = vmatprep.subr.bf16.mxu0 %v3603
        %3705 = vmatpush1.bf16.msra.mxu0 %v3602
        %3706 = vmatprep.subr.bf16.mxu0 0
        %3707 = vmatpush2.bf16.msra.mxu0 0
        %3708 = vmatprep.subr.bf16.mxu0 0
        %3709 = vmatpush2.bf16.msra.mxu0 0
        %3710 = vmatprep.subr.bf16.mxu0 0
        %3711 = vmatpush2.bf16.msra.mxu0 0
        %3712 = vmatprep.subr.bf16.mxu0 0
        %3713 = vmatpush2.bf16.msra.mxu0 0
        %3714 = vmatprep.subr.bf16.mxu0 0
        %3715 = vmatpush2.bf16.msra.mxu0 0
        %3716 = vmatprep.subr.bf16.mxu0 0
        %3717 = vmatpush2.bf16.msra.mxu0 0
        %3718 = vmatprep.subr.bf16.mxu0 0
        %3719 = vmatpush2.bf16.msra.mxu0 0
        %3720 = vmatprep.subr.bf16.mxu0 0
        %3721 = vmatpush2.bf16.msra.mxu0 0
        %3722 = vmatprep.mubr.bf16.mxu0 0
        %3723 = vmatmul.mubr.bf16.gmra.mxu0 %v3679
        %v3724 = vpop.f32.mrf.mxu0
        %v3725 = vadd.f32 %v3621, %v3724
        %v3726 = vpop.f32.mrf.mxu0
        %v3727 = vadd.f32 %v3621, %v3726
        %v3728 = vpop.f32.mrf.mxu0
        %v3729 = vadd.f32 %v3626, %v3728
        %v3730 = vpop.f32.mrf.mxu0
        %v3731 = vadd.f32 %v3626, %v3730
        %3732 = vmatprep.mubr.bf16.mxu0 0
        %3733 = vmatmul.mubr.bf16.gmra.mxu0 %v3682
        %v3734 = vpop.f32.mrf.mxu0
        %v3735 = vadd.f32 %v3631, %v3734
        %v3736 = vpop.f32.mrf.mxu0
        %v3737 = vadd.f32 %v3631, %v3736
        %v3738 = vpop.f32.mrf.mxu0
        %v3739 = vadd.f32 %v3636, %v3738
        %v3740 = vpop.f32.mrf.mxu0
        %v3741 = vadd.f32 %v3636, %v3740
        %3742 = vmatprep.mubr.bf16.mxu0 0
        %3743 = vmatmul.mubr.bf16.gmra.mxu0 %v3685
        %v3744 = vpop.f32.mrf.mxu0
        %v3745 = vadd.f32 %v3641, %v3744
        %v3746 = vpop.f32.mrf.mxu0
        %v3747 = vadd.f32 %v3641, %v3746
        %v3748 = vpop.f32.mrf.mxu0
        %v3749 = vadd.f32 %v3646, %v3748
        %v3750 = vpop.f32.mrf.mxu0
        %v3751 = vadd.f32 %v3646, %v3750
        %3752 = vmatprep.mubr.bf16.mxu0 0
        %3753 = vmatmul.mubr.bf16.gmra.mxu0 %v3688
        %v3754 = vpop.f32.mrf.mxu0
        %v3755 = vadd.f32 %v3651, %v3754
        %v3756 = vpop.f32.mrf.mxu0
        %v3757 = vadd.f32 %v3651, %v3756
        %v3758 = vpop.f32.mrf.mxu0
        %v3759 = vadd.f32 %v3656, %v3758
        %v3760 = vpop.f32.mrf.mxu0
        %v3761 = vadd.f32 %v3656, %v3760
        %3762 = vdwg.mxu0
        %v3763 = vld [vmem:[%s384] sm:$0xff]
        %v3764 = vld [vmem:[%s384 + $0x8] sm:$0xff]
        %v3765 = vld [vmem:[%s384 + $0x10] sm:$0xff]
        %v3766 = vld [vmem:[%s384 + $0x18] sm:$0xff]
        %v3767 = vld [vmem:[%s384 + $0x20] sm:$0xff]
        %v3768 = vld [vmem:[%s384 + $0x28] sm:$0xff]
        %v3769 = vld [vmem:[%s384 + $0x30] sm:$0xff]
        %v3770 = vld [vmem:[%s384 + $0x38] sm:$0xff]
        %v3771 = vld [vmem:[%s384 + $0x40] sm:$0xff]
        %v3772 = vld [vmem:[%s384 + $0x48] sm:$0xff]
        %v3773 = vld [vmem:[%s384 + $0x50] sm:$0xff]
        %v3774 = vld [vmem:[%s384 + $0x58] sm:$0xff]
        %v3775 = vld [vmem:[%s384 + $0x60] sm:$0xff]
        %v3776 = vld [vmem:[%s384 + $0x68] sm:$0xff]
        %v3777 = vld [vmem:[%s384 + $0x70] sm:$0xff]
        %v3778 = vld [vmem:[%s384 + $0x78] sm:$0xff]
        %v3779 = vsub.f32 %v3763, %v3725
        %v3780 = vsub.f32 %v3764, %v3727
        %v3781 = vsub.f32 %v3765, %v3729
        %v3782 = vsub.f32 %v3766, %v3731
        %v3783 = vsub.f32 %v3767, %v3735
        %v3784 = vsub.f32 %v3768, %v3737
        %v3785 = vsub.f32 %v3769, %v3739
        %v3786 = vsub.f32 %v3770, %v3741
        %v3787 = vsub.f32 %v3771, %v3745
        %v3788 = vsub.f32 %v3772, %v3747
        %v3789 = vsub.f32 %v3773, %v3749
        %v3790 = vsub.f32 %v3774, %v3751
        %v3791 = vsub.f32 %v3775, %v3755
        %v3792 = vsub.f32 %v3776, %v3757
        %v3793 = vsub.f32 %v3777, %v3759
        %v3794 = vsub.f32 %v3778, %v3761
        %v3795 = vld [vmem:[%s9] sm:$0x3]
        %v3797 = vlaneseq
        %v3798 = vshrl.u32 %v3797, 7
        %v3799 = vsub.s32 0, %v3798
        %v3800 = vrot.slane %v3795, %v3799
        %v3801 = vlaneseq
        %v3802 = vshrl.u32 %v3801, 7
        %v3803 = vsub.s32 1, %v3802
        %v3804 = vrot.slane %v3795, %v3803
        %v3807 = vmul.f32 %v3779, %v3800
        %v3808 = vmul.f32 %v3780, %v3804
        %v3809 = vmul.f32 %v3781, %v3800
        %v3810 = vmul.f32 %v3782, %v3804
        %v3811 = vmul.f32 %v3783, %v3800
        %v3812 = vmul.f32 %v3784, %v3804
        %v3813 = vmul.f32 %v3785, %v3800
        %v3814 = vmul.f32 %v3786, %v3804
        %v3815 = vmul.f32 %v3787, %v3800
        %v3816 = vmul.f32 %v3788, %v3804
        %v3817 = vmul.f32 %v3789, %v3800
        %v3818 = vmul.f32 %v3790, %v3804
        %v3819 = vmul.f32 %v3791, %v3800
        %v3820 = vmul.f32 %v3792, %v3804
        %v3821 = vmul.f32 %v3793, %v3800
        %v3822 = vmul.f32 %v3794, %v3804
        %v3823 = vld [vmem:[%s10] sm:$0x3]
        %v3825 = vlaneseq
        %v3826 = vshrl.u32 %v3825, 7
        %v3827 = vsub.s32 0, %v3826
        %v3828 = vrot.slane %v3823, %v3827
        %v3829 = vlaneseq
        %v3830 = vshrl.u32 %v3829, 7
        %v3831 = vsub.s32 1, %v3830
        %v3832 = vrot.slane %v3823, %v3831
        %v3835 = vadd.f32 %v3807, %v3828
        %v3836 = vadd.f32 %v3808, %v3832
        %v3837 = vadd.f32 %v3809, %v3828
        %v3838 = vadd.f32 %v3810, %v3832
        %v3839 = vadd.f32 %v3811, %v3828
        %v3840 = vadd.f32 %v3812, %v3832
        %v3841 = vadd.f32 %v3813, %v3828
        %v3842 = vadd.f32 %v3814, %v3832
        %v3843 = vadd.f32 %v3815, %v3828
        %v3844 = vadd.f32 %v3816, %v3832
        %v3845 = vadd.f32 %v3817, %v3828
        %v3846 = vadd.f32 %v3818, %v3832
        %v3847 = vadd.f32 %v3819, %v3828
        %v3848 = vadd.f32 %v3820, %v3832
        %v3849 = vadd.f32 %v3821, %v3828
        %v3850 = vadd.f32 %v3822, %v3832
        %vm3851 = vcmp.ge.f32.partialorder %v3835, 0.0
        %vm3852 = vcmp.ge.f32.partialorder %v3836, 0.0
        %vm3853 = vcmp.ge.f32.partialorder %v3837, 0.0
        %vm3854 = vcmp.ge.f32.partialorder %v3838, 0.0
        %vm3855 = vcmp.ge.f32.partialorder %v3839, 0.0
        %vm3856 = vcmp.ge.f32.partialorder %v3840, 0.0
        %vm3857 = vcmp.ge.f32.partialorder %v3841, 0.0
        %vm3858 = vcmp.ge.f32.partialorder %v3842, 0.0
        %vm3859 = vcmp.ge.f32.partialorder %v3843, 0.0
        %vm3860 = vcmp.ge.f32.partialorder %v3844, 0.0
        %vm3861 = vcmp.ge.f32.partialorder %v3845, 0.0
        %vm3862 = vcmp.ge.f32.partialorder %v3846, 0.0
        %vm3863 = vcmp.ge.f32.partialorder %v3847, 0.0
        %vm3864 = vcmp.ge.f32.partialorder %v3848, 0.0
        %vm3865 = vcmp.ge.f32.partialorder %v3849, 0.0
        %vm3866 = vcmp.ge.f32.partialorder %v3850, 0.0
        %v3867 = vmul.f32 %v3835, 0.2
        %v3868 = vmul.f32 %v3836, 0.2
        %v3869 = vmul.f32 %v3837, 0.2
        %v3870 = vmul.f32 %v3838, 0.2
        %v3871 = vmul.f32 %v3839, 0.2
        %v3872 = vmul.f32 %v3840, 0.2
        %v3873 = vmul.f32 %v3841, 0.2
        %v3874 = vmul.f32 %v3842, 0.2
        %v3875 = vmul.f32 %v3843, 0.2
        %v3876 = vmul.f32 %v3844, 0.2
        %v3877 = vmul.f32 %v3845, 0.2
        %v3878 = vmul.f32 %v3846, 0.2
        %v3879 = vmul.f32 %v3847, 0.2
        %v3880 = vmul.f32 %v3848, 0.2
        %v3881 = vmul.f32 %v3849, 0.2
        %v3882 = vmul.f32 %v3850, 0.2
        %v3883 = vsel %vm3851, %v3835, %v3867
        %v3884 = vsel %vm3852, %v3836, %v3868
        %v3885 = vsel %vm3853, %v3837, %v3869
        %v3886 = vsel %vm3854, %v3838, %v3870
        %v3887 = vsel %vm3855, %v3839, %v3871
        %v3888 = vsel %vm3856, %v3840, %v3872
        %v3889 = vsel %vm3857, %v3841, %v3873
        %v3890 = vsel %vm3858, %v3842, %v3874
        %v3891 = vsel %vm3859, %v3843, %v3875
        %v3892 = vsel %vm3860, %v3844, %v3876
        %v3893 = vsel %vm3861, %v3845, %v3877
        %v3894 = vsel %vm3862, %v3846, %v3878
        %v3895 = vsel %vm3863, %v3847, %v3879
        %v3896 = vsel %vm3864, %v3848, %v3880
        %v3897 = vsel %vm3865, %v3849, %v3881
        %v3898 = vsel %vm3866, %v3850, %v3882
        %v3899 = vadd.f32 %v3763, %v3883
        %v3900 = vadd.f32 %v3764, %v3884
        %v3901 = vadd.f32 %v3765, %v3885
        %v3902 = vadd.f32 %v3766, %v3886
        %v3903 = vadd.f32 %v3767, %v3887
        %v3904 = vadd.f32 %v3768, %v3888
        %v3905 = vadd.f32 %v3769, %v3889
        %v3906 = vadd.f32 %v3770, %v3890
        %v3907 = vadd.f32 %v3771, %v3891
        %v3908 = vadd.f32 %v3772, %v3892
        %v3909 = vadd.f32 %v3773, %v3893
        %v3910 = vadd.f32 %v3774, %v3894
        %v3911 = vadd.f32 %v3775, %v3895
        %v3912 = vadd.f32 %v3776, %v3896
        %v3913 = vadd.f32 %v3777, %v3897
        %v3914 = vadd.f32 %v3778, %v3898
        %3915 = vst [vmem:[%s379] sm:$0xff] %v3899
        %3916 = vst [vmem:[%s379 + $0x8] sm:$0xff] %v3900
        %3917 = vst [vmem:[%s379 + $0x10] sm:$0xff] %v3901
        %3918 = vst [vmem:[%s379 + $0x18] sm:$0xff] %v3902
        %3919 = vst [vmem:[%s379 + $0x20] sm:$0xff] %v3903
        %3920 = vst [vmem:[%s379 + $0x28] sm:$0xff] %v3904
        %3921 = vst [vmem:[%s379 + $0x30] sm:$0xff] %v3905
        %3922 = vst [vmem:[%s379 + $0x38] sm:$0xff] %v3906
        %3923 = vst [vmem:[%s379 + $0x40] sm:$0xff] %v3907
        %3924 = vst [vmem:[%s379 + $0x48] sm:$0xff] %v3908
        %3925 = vst [vmem:[%s379 + $0x50] sm:$0xff] %v3909
        %3926 = vst [vmem:[%s379 + $0x58] sm:$0xff] %v3910
        %3927 = vst [vmem:[%s379 + $0x60] sm:$0xff] %v3911
        %3928 = vst [vmem:[%s379 + $0x68] sm:$0xff] %v3912
        %3929 = vst [vmem:[%s379 + $0x70] sm:$0xff] %v3913
        %3930 = vst [vmem:[%s379 + $0x78] sm:$0xff] %v3914
        %s3931 = sand.u32 %s269, 1
        %s3932 = scalar_lea.sflag [#allocation5], %s3931
        %s3933 = sand.u32 %s269, 1
        %s3934 = smul.addr %s3933, 128
        %s3935 = scalar_lea.vmem [#allocation4], %s3934
        // Predicated region
        $region93: #{tpu_custom_call.1} parent=63 // pred_check
          %p3936 = pneg %p279
        $region94: #{tpu_custom_call.1} parent=63 // pred_check_branch
          %3938 = sbr.rel (%p3936) target = $region96
        $region95: #{tpu_custom_call.1} parent=63 // pred_region
          %s3940 = ssub.s32 2048, 2048
          %3941 = vsyncadd %s3932, %s3940
          %s3942 = smul.addr %s25, 16
          %s3943 = smul.addr %s3942, 128
          %s3944 = scalar_lea.hbm %s11, %s3943
          %s3945 = sshll.u32 %s3935, 4
          %s3946 = int_to_ptr.vmem [resolvable:$true] %s3945
          %3951 = dma.vmem_to_hbm [thread:$0]  %s3946, 2048, %s3944, %s3932, 256, 256, 16
        $region96: #{tpu_custom_call.1} parent=63 // pred_fallthru
          _
      $region64: #{tpu_custom_call.1} parent=5 // pred_fallthru
        _
      %p3952 = scmp.le.s32.totalorder 2, %s20
      // Predicated region
      $region97: #{tpu_custom_call.1} parent=5 // pred_check
        %p3953 = pneg %p3952
      $region98: #{tpu_custom_call.1} parent=5 // pred_check_branch
        %3955 = sbr.rel (%p3953) target = $region100
      $region99: #{tpu_custom_call.1} parent=5 // pred_region
        %s3956 = ssub.s32 %s20, 2
        // Predicated region
        $region101: #{tpu_custom_call.1} parent=99 // pred_check
          %p3957 = pneg %p285
        $region102: #{tpu_custom_call.1} parent=99 // pred_check_branch
          %3959 = sbr.rel (%p3957) target = $region104
        $region103: #{tpu_custom_call.1} parent=99 // pred_region
          %s3960 = sand.u32 %s270, 1
          %s3961 = scalar_lea.sflag [#allocation5], %s3960
          %s3962 = sand.u32 %s270, 1
          %s3963 = smul.addr %s3962, 128
          %s3964 = scalar_lea.vmem [#allocation4], %s3963
          %3965 = dma.done %s3961, 2048
        $region104: #{tpu_custom_call.1} parent=99 // pred_fallthru
          _
      $region100: #{tpu_custom_call.1} parent=5 // pred_fallthru
        _
    $region6: #{tpu_custom_call.1} parent=1 // loop_footer
      %s24 = sadd.s32 1, %s20
    $region7: #{tpu_custom_call.1} parent=1 // loop_footer_branch
      %19 = sbr.rel target = $region3
    $region8: #{tpu_custom_call.1} parent=1 // loop_exit
      _
    %3966 = vsyncpa [#allocation5], 1
    %s3967 = scalar_lea.sflag [#allocation5], 1
    %3968 = vsyncpa %s3967, 1

</llo_original>
